<compile_context>
chip_gen: v5e
topology: v5e:2x2
jax: 0.10.0
libtpu: 0.0.40
codegen_flags: <defaults>
</compile_context>

<pallas_src>
import jax
import jax.numpy as jnp
from jax.experimental import pallas as pl
from jax.experimental.pallas import tpu as pltpu


# ---------------------------------------------------------------------------
# Fused encoder kernel (one grid step == one sample)
# ---------------------------------------------------------------------------

def _encoder_kernel(x_ref, w1_ref, b1_ref, s1_ref, w2_ref, b2_ref,
                    w3_ref, b3_ref, w4_ref, b4_ref, slope_ref, out_ref):
    nb = x_ref.shape[0]            # samples in this block (1)
    h_in = x_ref.shape[1]          # 16
    h1 = h_in - 4                  # 12 : conv1 output spatial
    hm = h1 - 1                    # 11 : valid 2x2-window positions
    hp1 = h1 // 2                  # 6  : pool1 output spatial
    h2 = hp1 - 4                   # 2  : conv2 output spatial
    c1 = w1_ref.shape[-1]          # 8
    c2 = w2_ref.shape[-1]          # 16

    x = x_ref[...]                                          # (nb,16,16,1) NHWC

    # ---- conv1 (1->8, k5) + PReLU: VPU broadcast-MAC over the 25 taps ------
    w1 = w1_ref[...]                                        # (25,1,1,1,8)
    y1 = jnp.broadcast_to(b1_ref[...], (nb, h1, h1, c1))    # bias init
    for di in range(5):
        for dj in range(5):
            xs = x[:, di:di + h1, dj:dj + h1, :]            # (nb,12,12,1)
            y1 = y1 + xs * w1[di * 5 + dj]                  # (nb,12,12,8)
    a1 = slope_ref[0]
    y1 = jnp.where(y1 > 0, y1, a1 * y1)

    # ---- maxpool 2x2: max of 4 shifted taps, then even-index subsample -----
    m = jnp.maximum(
        jnp.maximum(y1[:, 0:hm, 0:hm, :], y1[:, 0:hm, 1:hm + 1, :]),
        jnp.maximum(y1[:, 1:hm + 1, 0:hm, :], y1[:, 1:hm + 1, 1:hm + 1, :]))
    # rows: pick even row indices by stacking static slices
    pr = jnp.stack([m[:, 2 * a] for a in range(hp1)], axis=1)      # (nb,6,11,8)
    # cols: even-column selection matrix applied as a tiny batched matmul
    s1 = jnp.broadcast_to(s1_ref[...][None], (nb * hp1, hp1, hm))  # (nb*6,6,11)
    p1 = jnp.einsum('kbc,kcj->kbj', s1, pr.reshape(nb * hp1, hm, c1),
                    preferred_element_type=jnp.float32)            # (nb*6,6,8)
    p1 = p1.reshape(nb, hp1, hp1, c1)                              # (nb,6,6,8)

    # ---- conv2 (8->16, k5) + PReLU: per-tap 8->16 channel matmul -----------
    w2 = w2_ref[...]                                        # (25,8,16)
    acc2 = jnp.zeros((nb * h2, h2, c2), jnp.float32)        # (nb*2,2,16)
    for di in range(5):
        for dj in range(5):
            xs = p1[:, di:di + h2, dj:dj + h2, :]           # (nb,2,2,8)
            xs = xs.reshape(nb * h2, h2, c1)                # (nb*2,2,8)
            wk = jnp.broadcast_to(w2[di * 5 + dj][None], (nb * h2, c1, c2))
            acc2 = acc2 + jnp.einsum('kij,kjo->kio', xs, wk,
                                     preferred_element_type=jnp.float32)
    acc2 = acc2 + b2_ref[...]                               # (1,1,16) broadcast
    a2 = slope_ref[1]
    acc2 = jnp.where(acc2 > 0, acc2, a2 * acc2)

    # ---- maxpool 2x2 -> flattened features (nb,1,16) ------------------------
    y2 = acc2.reshape(nb, h2, h2, c2)                       # (nb,2,2,16)
    f = jnp.maximum(y2[:, 0], y2[:, 1])                     # (nb,2,16)
    f = jnp.maximum(f[:, 0:1, :], f[:, 1:2, :])             # (nb,1,16)

    # ---- fc1 (16->32) + PReLU, fc2 (32->dim_emb) ----------------------------
    w3 = jnp.broadcast_to(w3_ref[...][None], (nb,) + w3_ref.shape)   # (nb,16,32)
    hid = jnp.einsum('nij,njk->nik', f, w3, preferred_element_type=jnp.float32)
    hid = hid + b3_ref[...]
    a3 = slope_ref[2]
    hid = jnp.where(hid > 0, hid, a3 * hid)

    w4 = jnp.broadcast_to(w4_ref[...][None], (nb,) + w4_ref.shape)   # (nb,32,8)
    emb = jnp.einsum('nij,njk->nik', hid, w4, preferred_element_type=jnp.float32)
    emb = emb + b4_ref[...]
    out_ref[...] = emb.astype(out_ref.dtype)                # (nb,1,dim_emb)


# ---------------------------------------------------------------------------
# Wrapper: one pallas_call for the whole forward pass
# ---------------------------------------------------------------------------

@jax.jit
def embedding_model_forward(kp, img):
    """EmbeddingModel.forward(img) == encoder.encode(img). img is NCHW (N,1,16,16)."""
    n, c, hh, ww = img.shape
    assert c == 1 and hh == 16 and ww == 16, "default speckleNN encoder expects 1x16x16"
    dim_emb = kp["w4"].shape[-1]

    x = img.reshape(n, hh, ww, 1)      # metadata-only: NCHW (C==1) -> NHWC

    in_specs = [
        pl.BlockSpec((1, hh, ww, 1), lambda i: (i, 0, 0, 0)),      # one sample / step
        pl.BlockSpec(kp["w1"].shape, lambda i: (0, 0, 0, 0, 0)),
        pl.BlockSpec(kp["b1"].shape, lambda i: (0, 0, 0, 0)),
        pl.BlockSpec(kp["s1"].shape, lambda i: (0, 0)),
        pl.BlockSpec(kp["w2"].shape, lambda i: (0, 0, 0)),
        pl.BlockSpec(kp["b2"].shape, lambda i: (0, 0, 0)),
        pl.BlockSpec(kp["w3"].shape, lambda i: (0, 0)),
        pl.BlockSpec(kp["b3"].shape, lambda i: (0, 0, 0)),
        pl.BlockSpec(kp["w4"].shape, lambda i: (0, 0)),
        pl.BlockSpec(kp["b4"].shape, lambda i: (0, 0, 0)),
        pl.BlockSpec(memory_space=pltpu.MemorySpace.SMEM),         # PReLU slopes
    ]
    out = pl.pallas_call(
        _encoder_kernel,
        out_shape=jax.ShapeDtypeStruct((n, 1, dim_emb), jnp.float32),
        grid=(n,),
        in_specs=in_specs,
        out_specs=pl.BlockSpec((1, 1, dim_emb), lambda i: (i, 0, 0)),
        compiler_params=pltpu.CompilerParams(dimension_semantics=("parallel",)),
    )(x, kp["w1"], kp["b1"], kp["s1"], kp["w2"], kp["b2"],
      kp["w3"], kp["b3"], kp["w4"], kp["b4"], kp["slopes"])
    return out.reshape(n, dim_emb)     # metadata-only


# ---------------------------------------------------------------------------
# Deterministic PyTorch-layout params + one-time kernel-layout preparation
# ---------------------------------------------------------------------------

def init_params(key, dim_emb=8):
    def u(k, shape, fan_in):
        b = 1.0 / (fan_in ** 0.5)
        return jax.random.uniform(k, shape, jnp.float32, -b, b)

    ks = jax.random.split(key, 8)
    p = {}
    p["conv1_w"] = u(ks[0], (8, 1, 5, 5), 25)         # OIHW
    p["conv1_b"] = u(ks[1], (8,), 25)
    p["prelu1_a"] = jnp.array(0.25, jnp.float32)
    p["conv2_w"] = u(ks[2], (16, 8, 5, 5), 200)
    p["conv2_b"] = u(ks[3], (16,), 200)
    p["prelu2_a"] = jnp.array(0.25, jnp.float32)
    p["fc1_w"] = u(ks[4], (32, 16), 16)               # (out, in)
    p["fc1_b"] = u(ks[5], (32,), 16)
    p["prelu3_a"] = jnp.array(0.25, jnp.float32)
    p["fc2_w"] = u(ks[6], (dim_emb, 32), 32)
    p["fc2_b"] = u(ks[7], (dim_emb,), 32)
    return p


def prepare_params(p):
    """Rearrange PyTorch-layout params into kernel-friendly layouts (done once)."""
    co1, ci1, kh, kw = p["conv1_w"].shape
    assert ci1 == 1
    co2, ci2, _, _ = p["conv2_w"].shape
    dim_emb = p["fc2_w"].shape[0]

    kp = {}
    # conv1: [tap, 1,1,1, cout] so w[k] multiplies an (nb,12,12,1) slice directly
    kp["w1"] = p["conv1_w"].reshape(co1, kh * kw).T.reshape(kh * kw, 1, 1, 1, co1)
    kp["b1"] = p["conv1_b"].reshape(1, 1, 1, co1)
    # conv2: [tap, cin, cout] so each tap is a lane-aligned 8x16 matmul
    kp["w2"] = p["conv2_w"].transpose(2, 3, 1, 0).reshape(kh * kw, ci2, co2)
    kp["b2"] = p["conv2_b"].reshape(1, 1, co2)
    kp["w3"] = p["fc1_w"].T                            # (16, 32)
    kp["b3"] = p["fc1_b"].reshape(1, 1, -1)
    kp["w4"] = p["fc2_w"].T                            # (32, dim_emb)
    kp["b4"] = p["fc2_b"].reshape(1, 1, dim_emb)
    # PReLU slopes, read via SMEM scalar path inside the kernel
    kp["slopes"] = jnp.stack([p["prelu1_a"], p["prelu2_a"], p["prelu3_a"]])
    # even-column selection matrix for the in-kernel 2x2-pool subsample (6x11)
    kp["s1"] = (jnp.arange(11)[None, :] == 2 * jnp.arange(6)[:, None]).astype(jnp.float32)
    return kp


# ---------------------------------------------------------------------------
# Pure-JAX reference (PyTorch semantics) for a numerical self-check
# ---------------------------------------------------------------------------

def _reference_forward(params, img):
    def prelu(x, a):
        return jnp.where(x > 0, x, a * x)

    def pool(x):
        return jnp.maximum(
            jnp.maximum(x[:, :, 0::2, 0::2], x[:, :, 0::2, 1::2]),
            jnp.maximum(x[:, :, 1::2, 0::2], x[:, :, 1::2, 1::2]))

    x = jax.lax.conv_general_dilated(img, params["conv1_w"], (1, 1), "VALID",
                                     dimension_numbers=("NCHW", "OIHW", "NCHW"))
    x = pool(prelu(x + params["conv1_b"][None, :, None, None], params["prelu1_a"]))
    x = jax.lax.conv_general_dilated(x, params["conv2_w"], (1, 1), "VALID",
                                     dimension_numbers=("NCHW", "OIHW", "NCHW"))
    x = pool(prelu(x + params["conv2_b"][None, :, None, None], params["prelu2_a"]))
    x = x.reshape(x.shape[0], -1)
    x = prelu(x @ params["fc1_w"].T + params["fc1_b"], params["prelu3_a"])
    return x @ params["fc2_w"].T + params["fc2_b"]


# ---------------------------------------------------------------------------

if __name__ == "__main__":
    root = jax.random.PRNGKey(0)
    k_param, k_img = jax.random.split(root)

    params = init_params(k_param, dim_emb=8)
    kparams = prepare_params(params)

    # img: (batch=2, channels=1, H=16, W=16), NCHW like the PyTorch module.
    img = jax.random.normal(k_img, (2, 1, 16, 16), jnp.float32)

    emb = embedding_model_forward(kparams, img)
    emb = jax.block_until_ready(emb)
    assert emb.shape == (2, 8) and emb.dtype == jnp.float32

    ref = _reference_forward(params, img)
    assert jnp.allclose(emb, ref, atol=2e-2, rtol=2e-2), (
        "mismatch vs reference, max abs diff = %f" % float(jnp.max(jnp.abs(emb - ref))))

    print("KERNEL_OK")
</pallas_src>

<mosaic_0001>
module attributes {stable_mosaic.version = 11 : i64} {
  func.func @_encoder_kernel(%arg0: i32, %arg1: memref<1x16x16x1xf32, #tpu.memory_space<vmem>>, %arg2: memref<25x1x1x1x8xf32, #tpu.memory_space<vmem>>, %arg3: memref<1x1x1x8xf32, #tpu.memory_space<vmem>>, %arg4: memref<6x11xf32, #tpu.memory_space<vmem>>, %arg5: memref<25x8x16xf32, #tpu.memory_space<vmem>>, %arg6: memref<1x1x16xf32, #tpu.memory_space<vmem>>, %arg7: memref<16x32xf32, #tpu.memory_space<vmem>>, %arg8: memref<1x1x32xf32, #tpu.memory_space<vmem>>, %arg9: memref<32x8xf32, #tpu.memory_space<vmem>>, %arg10: memref<1x1x8xf32, #tpu.memory_space<vmem>>, %arg11: memref<3xf32, #tpu.memory_space<smem>>, %arg12: memref<1x1x8xf32, #tpu.memory_space<vmem>>) attributes {dimension_semantics = [#tpu.dimension_semantics<parallel>], iteration_bounds = array<i64: 2>, scalar_prefetch = 0 : i64, scratch_operands = 0 : i64, tpu.core_type = #tpu.core_type<tc>, window_params = [{transform_indices = @transform_0, window_bounds = array<i64: 1, 16, 16, 1>}, {pipeline_mode = #tpu.pipeline_mode<synchronous>, transform_indices = @transform_1, window_bounds = array<i64: 25, 1, 1, 1, 8>}, {pipeline_mode = #tpu.pipeline_mode<synchronous>, transform_indices = @transform_2, window_bounds = array<i64: 1, 1, 1, 8>}, {pipeline_mode = #tpu.pipeline_mode<synchronous>, transform_indices = @transform_3, window_bounds = array<i64: 6, 11>}, {pipeline_mode = #tpu.pipeline_mode<synchronous>, transform_indices = @transform_4, window_bounds = array<i64: 25, 8, 16>}, {pipeline_mode = #tpu.pipeline_mode<synchronous>, transform_indices = @transform_5, window_bounds = array<i64: 1, 1, 16>}, {pipeline_mode = #tpu.pipeline_mode<synchronous>, transform_indices = @transform_6, window_bounds = array<i64: 16, 32>}, {pipeline_mode = #tpu.pipeline_mode<synchronous>, transform_indices = @transform_7, window_bounds = array<i64: 1, 1, 32>}, {pipeline_mode = #tpu.pipeline_mode<synchronous>, transform_indices = @transform_8, window_bounds = array<i64: 32, 8>}, {pipeline_mode = #tpu.pipeline_mode<synchronous>, transform_indices = @transform_9, window_bounds = array<i64: 1, 1, 8>}, {transform_indices = @transform_10, window_bounds = array<i64: 3>}, {transform_indices = @transform_11, window_bounds = array<i64: 1, 1, 8>}]} {
    %c0 = arith.constant 0 : index
    %c0_0 = arith.constant 0 : index
    %c0_1 = arith.constant 0 : index
    %c0_2 = arith.constant 0 : index
    %0 = vector.load %arg1[%c0, %c0_0, %c0_1, %c0_2] : memref<1x16x16x1xf32, #tpu.memory_space<vmem>>, vector<1x16x16x1xf32>
    %c0_3 = arith.constant 0 : index
    %c0_4 = arith.constant 0 : index
    %c0_5 = arith.constant 0 : index
    %c0_6 = arith.constant 0 : index
    %c0_7 = arith.constant 0 : index
    %1 = vector.load %arg2[%c0_3, %c0_4, %c0_5, %c0_6, %c0_7] : memref<25x1x1x1x8xf32, #tpu.memory_space<vmem>>, vector<25x1x1x1x8xf32>
    %c0_8 = arith.constant 0 : index
    %c0_9 = arith.constant 0 : index
    %c0_10 = arith.constant 0 : index
    %c0_11 = arith.constant 0 : index
    %2 = vector.load %arg3[%c0_8, %c0_9, %c0_10, %c0_11] : memref<1x1x1x8xf32, #tpu.memory_space<vmem>>, vector<1x1x1x8xf32>
    %3 = vector.shape_cast %2 : vector<1x1x1x8xf32> to vector<1x1x1x8xf32>
    %4 = vector.broadcast %3 : vector<1x1x1x8xf32> to vector<1x12x12x8xf32>
    %5 = vector.extract_strided_slice %0 {offsets = [0, 0, 0, 0], sizes = [1, 12, 12, 1], strides = [1, 1, 1, 1]} : vector<1x16x16x1xf32> to vector<1x12x12x1xf32>
    %6 = vector.extract_strided_slice %1 {offsets = [0, 0, 0, 0, 0], sizes = [1, 1, 1, 1, 8], strides = [1, 1, 1, 1, 1]} : vector<25x1x1x1x8xf32> to vector<1x1x1x1x8xf32>
    %7 = vector.shape_cast %6 : vector<1x1x1x1x8xf32> to vector<1x1x1x8xf32>
    %8 = vector.broadcast %5 : vector<1x12x12x1xf32> to vector<1x12x12x8xf32>
    %9 = vector.broadcast %7 : vector<1x1x1x8xf32> to vector<1x12x12x8xf32>
    %10 = arith.mulf %8, %9 : vector<1x12x12x8xf32>
    %11 = arith.addf %4, %10 : vector<1x12x12x8xf32>
    %12 = vector.extract_strided_slice %0 {offsets = [0, 0, 1, 0], sizes = [1, 12, 12, 1], strides = [1, 1, 1, 1]} : vector<1x16x16x1xf32> to vector<1x12x12x1xf32>
    %13 = vector.extract_strided_slice %1 {offsets = [1, 0, 0, 0, 0], sizes = [1, 1, 1, 1, 8], strides = [1, 1, 1, 1, 1]} : vector<25x1x1x1x8xf32> to vector<1x1x1x1x8xf32>
    %14 = vector.shape_cast %13 : vector<1x1x1x1x8xf32> to vector<1x1x1x8xf32>
    %15 = vector.broadcast %12 : vector<1x12x12x1xf32> to vector<1x12x12x8xf32>
    %16 = vector.broadcast %14 : vector<1x1x1x8xf32> to vector<1x12x12x8xf32>
    %17 = arith.mulf %15, %16 : vector<1x12x12x8xf32>
    %18 = arith.addf %11, %17 : vector<1x12x12x8xf32>
    %19 = vector.extract_strided_slice %0 {offsets = [0, 0, 2, 0], sizes = [1, 12, 12, 1], strides = [1, 1, 1, 1]} : vector<1x16x16x1xf32> to vector<1x12x12x1xf32>
    %20 = vector.extract_strided_slice %1 {offsets = [2, 0, 0, 0, 0], sizes = [1, 1, 1, 1, 8], strides = [1, 1, 1, 1, 1]} : vector<25x1x1x1x8xf32> to vector<1x1x1x1x8xf32>
    %21 = vector.shape_cast %20 : vector<1x1x1x1x8xf32> to vector<1x1x1x8xf32>
    %22 = vector.broadcast %19 : vector<1x12x12x1xf32> to vector<1x12x12x8xf32>
    %23 = vector.broadcast %21 : vector<1x1x1x8xf32> to vector<1x12x12x8xf32>
    %24 = arith.mulf %22, %23 : vector<1x12x12x8xf32>
    %25 = arith.addf %18, %24 : vector<1x12x12x8xf32>
    %26 = vector.extract_strided_slice %0 {offsets = [0, 0, 3, 0], sizes = [1, 12, 12, 1], strides = [1, 1, 1, 1]} : vector<1x16x16x1xf32> to vector<1x12x12x1xf32>
    %27 = vector.extract_strided_slice %1 {offsets = [3, 0, 0, 0, 0], sizes = [1, 1, 1, 1, 8], strides = [1, 1, 1, 1, 1]} : vector<25x1x1x1x8xf32> to vector<1x1x1x1x8xf32>
    %28 = vector.shape_cast %27 : vector<1x1x1x1x8xf32> to vector<1x1x1x8xf32>
    %29 = vector.broadcast %26 : vector<1x12x12x1xf32> to vector<1x12x12x8xf32>
    %30 = vector.broadcast %28 : vector<1x1x1x8xf32> to vector<1x12x12x8xf32>
    %31 = arith.mulf %29, %30 : vector<1x12x12x8xf32>
    %32 = arith.addf %25, %31 : vector<1x12x12x8xf32>
    %33 = vector.extract_strided_slice %0 {offsets = [0, 0, 4, 0], sizes = [1, 12, 12, 1], strides = [1, 1, 1, 1]} : vector<1x16x16x1xf32> to vector<1x12x12x1xf32>
    %34 = vector.extract_strided_slice %1 {offsets = [4, 0, 0, 0, 0], sizes = [1, 1, 1, 1, 8], strides = [1, 1, 1, 1, 1]} : vector<25x1x1x1x8xf32> to vector<1x1x1x1x8xf32>
    %35 = vector.shape_cast %34 : vector<1x1x1x1x8xf32> to vector<1x1x1x8xf32>
    %36 = vector.broadcast %33 : vector<1x12x12x1xf32> to vector<1x12x12x8xf32>
    %37 = vector.broadcast %35 : vector<1x1x1x8xf32> to vector<1x12x12x8xf32>
    %38 = arith.mulf %36, %37 : vector<1x12x12x8xf32>
    %39 = arith.addf %32, %38 : vector<1x12x12x8xf32>
    %40 = vector.extract_strided_slice %0 {offsets = [0, 1, 0, 0], sizes = [1, 12, 12, 1], strides = [1, 1, 1, 1]} : vector<1x16x16x1xf32> to vector<1x12x12x1xf32>
    %41 = vector.extract_strided_slice %1 {offsets = [5, 0, 0, 0, 0], sizes = [1, 1, 1, 1, 8], strides = [1, 1, 1, 1, 1]} : vector<25x1x1x1x8xf32> to vector<1x1x1x1x8xf32>
    %42 = vector.shape_cast %41 : vector<1x1x1x1x8xf32> to vector<1x1x1x8xf32>
    %43 = vector.broadcast %40 : vector<1x12x12x1xf32> to vector<1x12x12x8xf32>
    %44 = vector.broadcast %42 : vector<1x1x1x8xf32> to vector<1x12x12x8xf32>
    %45 = arith.mulf %43, %44 : vector<1x12x12x8xf32>
    %46 = arith.addf %39, %45 : vector<1x12x12x8xf32>
    %47 = vector.extract_strided_slice %0 {offsets = [0, 1, 1, 0], sizes = [1, 12, 12, 1], strides = [1, 1, 1, 1]} : vector<1x16x16x1xf32> to vector<1x12x12x1xf32>
    %48 = vector.extract_strided_slice %1 {offsets = [6, 0, 0, 0, 0], sizes = [1, 1, 1, 1, 8], strides = [1, 1, 1, 1, 1]} : vector<25x1x1x1x8xf32> to vector<1x1x1x1x8xf32>
    %49 = vector.shape_cast %48 : vector<1x1x1x1x8xf32> to vector<1x1x1x8xf32>
    %50 = vector.broadcast %47 : vector<1x12x12x1xf32> to vector<1x12x12x8xf32>
    %51 = vector.broadcast %49 : vector<1x1x1x8xf32> to vector<1x12x12x8xf32>
    %52 = arith.mulf %50, %51 : vector<1x12x12x8xf32>
    %53 = arith.addf %46, %52 : vector<1x12x12x8xf32>
    %54 = vector.extract_strided_slice %0 {offsets = [0, 1, 2, 0], sizes = [1, 12, 12, 1], strides = [1, 1, 1, 1]} : vector<1x16x16x1xf32> to vector<1x12x12x1xf32>
    %55 = vector.extract_strided_slice %1 {offsets = [7, 0, 0, 0, 0], sizes = [1, 1, 1, 1, 8], strides = [1, 1, 1, 1, 1]} : vector<25x1x1x1x8xf32> to vector<1x1x1x1x8xf32>
    %56 = vector.shape_cast %55 : vector<1x1x1x1x8xf32> to vector<1x1x1x8xf32>
    %57 = vector.broadcast %54 : vector<1x12x12x1xf32> to vector<1x12x12x8xf32>
    %58 = vector.broadcast %56 : vector<1x1x1x8xf32> to vector<1x12x12x8xf32>
    %59 = arith.mulf %57, %58 : vector<1x12x12x8xf32>
    %60 = arith.addf %53, %59 : vector<1x12x12x8xf32>
    %61 = vector.extract_strided_slice %0 {offsets = [0, 1, 3, 0], sizes = [1, 12, 12, 1], strides = [1, 1, 1, 1]} : vector<1x16x16x1xf32> to vector<1x12x12x1xf32>
    %62 = vector.extract_strided_slice %1 {offsets = [8, 0, 0, 0, 0], sizes = [1, 1, 1, 1, 8], strides = [1, 1, 1, 1, 1]} : vector<25x1x1x1x8xf32> to vector<1x1x1x1x8xf32>
    %63 = vector.shape_cast %62 : vector<1x1x1x1x8xf32> to vector<1x1x1x8xf32>
    %64 = vector.broadcast %61 : vector<1x12x12x1xf32> to vector<1x12x12x8xf32>
    %65 = vector.broadcast %63 : vector<1x1x1x8xf32> to vector<1x12x12x8xf32>
    %66 = arith.mulf %64, %65 : vector<1x12x12x8xf32>
    %67 = arith.addf %60, %66 : vector<1x12x12x8xf32>
    %68 = vector.extract_strided_slice %0 {offsets = [0, 1, 4, 0], sizes = [1, 12, 12, 1], strides = [1, 1, 1, 1]} : vector<1x16x16x1xf32> to vector<1x12x12x1xf32>
    %69 = vector.extract_strided_slice %1 {offsets = [9, 0, 0, 0, 0], sizes = [1, 1, 1, 1, 8], strides = [1, 1, 1, 1, 1]} : vector<25x1x1x1x8xf32> to vector<1x1x1x1x8xf32>
    %70 = vector.shape_cast %69 : vector<1x1x1x1x8xf32> to vector<1x1x1x8xf32>
    %71 = vector.broadcast %68 : vector<1x12x12x1xf32> to vector<1x12x12x8xf32>
    %72 = vector.broadcast %70 : vector<1x1x1x8xf32> to vector<1x12x12x8xf32>
    %73 = arith.mulf %71, %72 : vector<1x12x12x8xf32>
    %74 = arith.addf %67, %73 : vector<1x12x12x8xf32>
    %75 = vector.extract_strided_slice %0 {offsets = [0, 2, 0, 0], sizes = [1, 12, 12, 1], strides = [1, 1, 1, 1]} : vector<1x16x16x1xf32> to vector<1x12x12x1xf32>
    %76 = vector.extract_strided_slice %1 {offsets = [10, 0, 0, 0, 0], sizes = [1, 1, 1, 1, 8], strides = [1, 1, 1, 1, 1]} : vector<25x1x1x1x8xf32> to vector<1x1x1x1x8xf32>
    %77 = vector.shape_cast %76 : vector<1x1x1x1x8xf32> to vector<1x1x1x8xf32>
    %78 = vector.broadcast %75 : vector<1x12x12x1xf32> to vector<1x12x12x8xf32>
    %79 = vector.broadcast %77 : vector<1x1x1x8xf32> to vector<1x12x12x8xf32>
    %80 = arith.mulf %78, %79 : vector<1x12x12x8xf32>
    %81 = arith.addf %74, %80 : vector<1x12x12x8xf32>
    %82 = vector.extract_strided_slice %0 {offsets = [0, 2, 1, 0], sizes = [1, 12, 12, 1], strides = [1, 1, 1, 1]} : vector<1x16x16x1xf32> to vector<1x12x12x1xf32>
    %83 = vector.extract_strided_slice %1 {offsets = [11, 0, 0, 0, 0], sizes = [1, 1, 1, 1, 8], strides = [1, 1, 1, 1, 1]} : vector<25x1x1x1x8xf32> to vector<1x1x1x1x8xf32>
    %84 = vector.shape_cast %83 : vector<1x1x1x1x8xf32> to vector<1x1x1x8xf32>
    %85 = vector.broadcast %82 : vector<1x12x12x1xf32> to vector<1x12x12x8xf32>
    %86 = vector.broadcast %84 : vector<1x1x1x8xf32> to vector<1x12x12x8xf32>
    %87 = arith.mulf %85, %86 : vector<1x12x12x8xf32>
    %88 = arith.addf %81, %87 : vector<1x12x12x8xf32>
    %89 = vector.extract_strided_slice %0 {offsets = [0, 2, 2, 0], sizes = [1, 12, 12, 1], strides = [1, 1, 1, 1]} : vector<1x16x16x1xf32> to vector<1x12x12x1xf32>
    %90 = vector.extract_strided_slice %1 {offsets = [12, 0, 0, 0, 0], sizes = [1, 1, 1, 1, 8], strides = [1, 1, 1, 1, 1]} : vector<25x1x1x1x8xf32> to vector<1x1x1x1x8xf32>
    %91 = vector.shape_cast %90 : vector<1x1x1x1x8xf32> to vector<1x1x1x8xf32>
    %92 = vector.broadcast %89 : vector<1x12x12x1xf32> to vector<1x12x12x8xf32>
    %93 = vector.broadcast %91 : vector<1x1x1x8xf32> to vector<1x12x12x8xf32>
    %94 = arith.mulf %92, %93 : vector<1x12x12x8xf32>
    %95 = arith.addf %88, %94 : vector<1x12x12x8xf32>
    %96 = vector.extract_strided_slice %0 {offsets = [0, 2, 3, 0], sizes = [1, 12, 12, 1], strides = [1, 1, 1, 1]} : vector<1x16x16x1xf32> to vector<1x12x12x1xf32>
    %97 = vector.extract_strided_slice %1 {offsets = [13, 0, 0, 0, 0], sizes = [1, 1, 1, 1, 8], strides = [1, 1, 1, 1, 1]} : vector<25x1x1x1x8xf32> to vector<1x1x1x1x8xf32>
    %98 = vector.shape_cast %97 : vector<1x1x1x1x8xf32> to vector<1x1x1x8xf32>
    %99 = vector.broadcast %96 : vector<1x12x12x1xf32> to vector<1x12x12x8xf32>
    %100 = vector.broadcast %98 : vector<1x1x1x8xf32> to vector<1x12x12x8xf32>
    %101 = arith.mulf %99, %100 : vector<1x12x12x8xf32>
    %102 = arith.addf %95, %101 : vector<1x12x12x8xf32>
    %103 = vector.extract_strided_slice %0 {offsets = [0, 2, 4, 0], sizes = [1, 12, 12, 1], strides = [1, 1, 1, 1]} : vector<1x16x16x1xf32> to vector<1x12x12x1xf32>
    %104 = vector.extract_strided_slice %1 {offsets = [14, 0, 0, 0, 0], sizes = [1, 1, 1, 1, 8], strides = [1, 1, 1, 1, 1]} : vector<25x1x1x1x8xf32> to vector<1x1x1x1x8xf32>
    %105 = vector.shape_cast %104 : vector<1x1x1x1x8xf32> to vector<1x1x1x8xf32>
    %106 = vector.broadcast %103 : vector<1x12x12x1xf32> to vector<1x12x12x8xf32>
    %107 = vector.broadcast %105 : vector<1x1x1x8xf32> to vector<1x12x12x8xf32>
    %108 = arith.mulf %106, %107 : vector<1x12x12x8xf32>
    %109 = arith.addf %102, %108 : vector<1x12x12x8xf32>
    %110 = vector.extract_strided_slice %0 {offsets = [0, 3, 0, 0], sizes = [1, 12, 12, 1], strides = [1, 1, 1, 1]} : vector<1x16x16x1xf32> to vector<1x12x12x1xf32>
    %111 = vector.extract_strided_slice %1 {offsets = [15, 0, 0, 0, 0], sizes = [1, 1, 1, 1, 8], strides = [1, 1, 1, 1, 1]} : vector<25x1x1x1x8xf32> to vector<1x1x1x1x8xf32>
    %112 = vector.shape_cast %111 : vector<1x1x1x1x8xf32> to vector<1x1x1x8xf32>
    %113 = vector.broadcast %110 : vector<1x12x12x1xf32> to vector<1x12x12x8xf32>
    %114 = vector.broadcast %112 : vector<1x1x1x8xf32> to vector<1x12x12x8xf32>
    %115 = arith.mulf %113, %114 : vector<1x12x12x8xf32>
    %116 = arith.addf %109, %115 : vector<1x12x12x8xf32>
    %117 = vector.extract_strided_slice %0 {offsets = [0, 3, 1, 0], sizes = [1, 12, 12, 1], strides = [1, 1, 1, 1]} : vector<1x16x16x1xf32> to vector<1x12x12x1xf32>
    %118 = vector.extract_strided_slice %1 {offsets = [16, 0, 0, 0, 0], sizes = [1, 1, 1, 1, 8], strides = [1, 1, 1, 1, 1]} : vector<25x1x1x1x8xf32> to vector<1x1x1x1x8xf32>
    %119 = vector.shape_cast %118 : vector<1x1x1x1x8xf32> to vector<1x1x1x8xf32>
    %120 = vector.broadcast %117 : vector<1x12x12x1xf32> to vector<1x12x12x8xf32>
    %121 = vector.broadcast %119 : vector<1x1x1x8xf32> to vector<1x12x12x8xf32>
    %122 = arith.mulf %120, %121 : vector<1x12x12x8xf32>
    %123 = arith.addf %116, %122 : vector<1x12x12x8xf32>
    %124 = vector.extract_strided_slice %0 {offsets = [0, 3, 2, 0], sizes = [1, 12, 12, 1], strides = [1, 1, 1, 1]} : vector<1x16x16x1xf32> to vector<1x12x12x1xf32>
    %125 = vector.extract_strided_slice %1 {offsets = [17, 0, 0, 0, 0], sizes = [1, 1, 1, 1, 8], strides = [1, 1, 1, 1, 1]} : vector<25x1x1x1x8xf32> to vector<1x1x1x1x8xf32>
    %126 = vector.shape_cast %125 : vector<1x1x1x1x8xf32> to vector<1x1x1x8xf32>
    %127 = vector.broadcast %124 : vector<1x12x12x1xf32> to vector<1x12x12x8xf32>
    %128 = vector.broadcast %126 : vector<1x1x1x8xf32> to vector<1x12x12x8xf32>
    %129 = arith.mulf %127, %128 : vector<1x12x12x8xf32>
    %130 = arith.addf %123, %129 : vector<1x12x12x8xf32>
    %131 = vector.extract_strided_slice %0 {offsets = [0, 3, 3, 0], sizes = [1, 12, 12, 1], strides = [1, 1, 1, 1]} : vector<1x16x16x1xf32> to vector<1x12x12x1xf32>
    %132 = vector.extract_strided_slice %1 {offsets = [18, 0, 0, 0, 0], sizes = [1, 1, 1, 1, 8], strides = [1, 1, 1, 1, 1]} : vector<25x1x1x1x8xf32> to vector<1x1x1x1x8xf32>
    %133 = vector.shape_cast %132 : vector<1x1x1x1x8xf32> to vector<1x1x1x8xf32>
    %134 = vector.broadcast %131 : vector<1x12x12x1xf32> to vector<1x12x12x8xf32>
    %135 = vector.broadcast %133 : vector<1x1x1x8xf32> to vector<1x12x12x8xf32>
    %136 = arith.mulf %134, %135 : vector<1x12x12x8xf32>
    %137 = arith.addf %130, %136 : vector<1x12x12x8xf32>
    %138 = vector.extract_strided_slice %0 {offsets = [0, 3, 4, 0], sizes = [1, 12, 12, 1], strides = [1, 1, 1, 1]} : vector<1x16x16x1xf32> to vector<1x12x12x1xf32>
    %139 = vector.extract_strided_slice %1 {offsets = [19, 0, 0, 0, 0], sizes = [1, 1, 1, 1, 8], strides = [1, 1, 1, 1, 1]} : vector<25x1x1x1x8xf32> to vector<1x1x1x1x8xf32>
    %140 = vector.shape_cast %139 : vector<1x1x1x1x8xf32> to vector<1x1x1x8xf32>
    %141 = vector.broadcast %138 : vector<1x12x12x1xf32> to vector<1x12x12x8xf32>
    %142 = vector.broadcast %140 : vector<1x1x1x8xf32> to vector<1x12x12x8xf32>
    %143 = arith.mulf %141, %142 : vector<1x12x12x8xf32>
    %144 = arith.addf %137, %143 : vector<1x12x12x8xf32>
    %145 = vector.extract_strided_slice %0 {offsets = [0, 4, 0, 0], sizes = [1, 12, 12, 1], strides = [1, 1, 1, 1]} : vector<1x16x16x1xf32> to vector<1x12x12x1xf32>
    %146 = vector.extract_strided_slice %1 {offsets = [20, 0, 0, 0, 0], sizes = [1, 1, 1, 1, 8], strides = [1, 1, 1, 1, 1]} : vector<25x1x1x1x8xf32> to vector<1x1x1x1x8xf32>
    %147 = vector.shape_cast %146 : vector<1x1x1x1x8xf32> to vector<1x1x1x8xf32>
    %148 = vector.broadcast %145 : vector<1x12x12x1xf32> to vector<1x12x12x8xf32>
    %149 = vector.broadcast %147 : vector<1x1x1x8xf32> to vector<1x12x12x8xf32>
    %150 = arith.mulf %148, %149 : vector<1x12x12x8xf32>
    %151 = arith.addf %144, %150 : vector<1x12x12x8xf32>
    %152 = vector.extract_strided_slice %0 {offsets = [0, 4, 1, 0], sizes = [1, 12, 12, 1], strides = [1, 1, 1, 1]} : vector<1x16x16x1xf32> to vector<1x12x12x1xf32>
    %153 = vector.extract_strided_slice %1 {offsets = [21, 0, 0, 0, 0], sizes = [1, 1, 1, 1, 8], strides = [1, 1, 1, 1, 1]} : vector<25x1x1x1x8xf32> to vector<1x1x1x1x8xf32>
    %154 = vector.shape_cast %153 : vector<1x1x1x1x8xf32> to vector<1x1x1x8xf32>
    %155 = vector.broadcast %152 : vector<1x12x12x1xf32> to vector<1x12x12x8xf32>
    %156 = vector.broadcast %154 : vector<1x1x1x8xf32> to vector<1x12x12x8xf32>
    %157 = arith.mulf %155, %156 : vector<1x12x12x8xf32>
    %158 = arith.addf %151, %157 : vector<1x12x12x8xf32>
    %159 = vector.extract_strided_slice %0 {offsets = [0, 4, 2, 0], sizes = [1, 12, 12, 1], strides = [1, 1, 1, 1]} : vector<1x16x16x1xf32> to vector<1x12x12x1xf32>
    %160 = vector.extract_strided_slice %1 {offsets = [22, 0, 0, 0, 0], sizes = [1, 1, 1, 1, 8], strides = [1, 1, 1, 1, 1]} : vector<25x1x1x1x8xf32> to vector<1x1x1x1x8xf32>
    %161 = vector.shape_cast %160 : vector<1x1x1x1x8xf32> to vector<1x1x1x8xf32>
    %162 = vector.broadcast %159 : vector<1x12x12x1xf32> to vector<1x12x12x8xf32>
    %163 = vector.broadcast %161 : vector<1x1x1x8xf32> to vector<1x12x12x8xf32>
    %164 = arith.mulf %162, %163 : vector<1x12x12x8xf32>
    %165 = arith.addf %158, %164 : vector<1x12x12x8xf32>
    %166 = vector.extract_strided_slice %0 {offsets = [0, 4, 3, 0], sizes = [1, 12, 12, 1], strides = [1, 1, 1, 1]} : vector<1x16x16x1xf32> to vector<1x12x12x1xf32>
    %167 = vector.extract_strided_slice %1 {offsets = [23, 0, 0, 0, 0], sizes = [1, 1, 1, 1, 8], strides = [1, 1, 1, 1, 1]} : vector<25x1x1x1x8xf32> to vector<1x1x1x1x8xf32>
    %168 = vector.shape_cast %167 : vector<1x1x1x1x8xf32> to vector<1x1x1x8xf32>
    %169 = vector.broadcast %166 : vector<1x12x12x1xf32> to vector<1x12x12x8xf32>
    %170 = vector.broadcast %168 : vector<1x1x1x8xf32> to vector<1x12x12x8xf32>
    %171 = arith.mulf %169, %170 : vector<1x12x12x8xf32>
    %172 = arith.addf %165, %171 : vector<1x12x12x8xf32>
    %173 = vector.extract_strided_slice %0 {offsets = [0, 4, 4, 0], sizes = [1, 12, 12, 1], strides = [1, 1, 1, 1]} : vector<1x16x16x1xf32> to vector<1x12x12x1xf32>
    %174 = vector.extract_strided_slice %1 {offsets = [24, 0, 0, 0, 0], sizes = [1, 1, 1, 1, 8], strides = [1, 1, 1, 1, 1]} : vector<25x1x1x1x8xf32> to vector<1x1x1x1x8xf32>
    %175 = vector.shape_cast %174 : vector<1x1x1x1x8xf32> to vector<1x1x1x8xf32>
    %176 = vector.broadcast %173 : vector<1x12x12x1xf32> to vector<1x12x12x8xf32>
    %177 = vector.broadcast %175 : vector<1x1x1x8xf32> to vector<1x12x12x8xf32>
    %178 = arith.mulf %176, %177 : vector<1x12x12x8xf32>
    %179 = arith.addf %172, %178 : vector<1x12x12x8xf32>
    %c0_12 = arith.constant 0 : index
    %180 = memref.load %arg11[%c0_12] : memref<3xf32, #tpu.memory_space<smem>>
    %cst = arith.constant 0.000000e+00 : f32
    %181 = vector.broadcast %cst : f32 to vector<1x12x12x8xf32>
    %182 = arith.cmpf ogt, %179, %181 : vector<1x12x12x8xf32>
    %183 = vector.broadcast %180 : f32 to vector<1x12x12x8xf32>
    %184 = arith.mulf %183, %179 : vector<1x12x12x8xf32>
    %185 = arith.select %182, %179, %184 : vector<1x12x12x8xi1>, vector<1x12x12x8xf32>
    %186 = vector.extract_strided_slice %185 {offsets = [0, 0, 0, 0], sizes = [1, 11, 11, 8], strides = [1, 1, 1, 1]} : vector<1x12x12x8xf32> to vector<1x11x11x8xf32>
    %187 = vector.extract_strided_slice %185 {offsets = [0, 0, 1, 0], sizes = [1, 11, 11, 8], strides = [1, 1, 1, 1]} : vector<1x12x12x8xf32> to vector<1x11x11x8xf32>
    %188 = arith.maximumf %186, %187 : vector<1x11x11x8xf32>
    %189 = vector.extract_strided_slice %185 {offsets = [0, 1, 0, 0], sizes = [1, 11, 11, 8], strides = [1, 1, 1, 1]} : vector<1x12x12x8xf32> to vector<1x11x11x8xf32>
    %190 = vector.extract_strided_slice %185 {offsets = [0, 1, 1, 0], sizes = [1, 11, 11, 8], strides = [1, 1, 1, 1]} : vector<1x12x12x8xf32> to vector<1x11x11x8xf32>
    %191 = arith.maximumf %189, %190 : vector<1x11x11x8xf32>
    %192 = arith.maximumf %188, %191 : vector<1x11x11x8xf32>
    %193 = vector.extract_strided_slice %192 {offsets = [0, 0, 0, 0], sizes = [1, 1, 11, 8], strides = [1, 1, 1, 1]} : vector<1x11x11x8xf32> to vector<1x1x11x8xf32>
    %194 = vector.shape_cast %193 : vector<1x1x11x8xf32> to vector<1x11x8xf32>
    %195 = vector.extract_strided_slice %192 {offsets = [0, 2, 0, 0], sizes = [1, 1, 11, 8], strides = [1, 1, 1, 1]} : vector<1x11x11x8xf32> to vector<1x1x11x8xf32>
    %196 = vector.shape_cast %195 : vector<1x1x11x8xf32> to vector<1x11x8xf32>
    %197 = vector.extract_strided_slice %192 {offsets = [0, 4, 0, 0], sizes = [1, 1, 11, 8], strides = [1, 1, 1, 1]} : vector<1x11x11x8xf32> to vector<1x1x11x8xf32>
    %198 = vector.shape_cast %197 : vector<1x1x11x8xf32> to vector<1x11x8xf32>
    %199 = vector.extract_strided_slice %192 {offsets = [0, 6, 0, 0], sizes = [1, 1, 11, 8], strides = [1, 1, 1, 1]} : vector<1x11x11x8xf32> to vector<1x1x11x8xf32>
    %200 = vector.shape_cast %199 : vector<1x1x11x8xf32> to vector<1x11x8xf32>
    %201 = vector.extract_strided_slice %192 {offsets = [0, 8, 0, 0], sizes = [1, 1, 11, 8], strides = [1, 1, 1, 1]} : vector<1x11x11x8xf32> to vector<1x1x11x8xf32>
    %202 = vector.shape_cast %201 : vector<1x1x11x8xf32> to vector<1x11x8xf32>
    %203 = vector.extract_strided_slice %192 {offsets = [0, 10, 0, 0], sizes = [1, 1, 11, 8], strides = [1, 1, 1, 1]} : vector<1x11x11x8xf32> to vector<1x1x11x8xf32>
    %204 = vector.shape_cast %203 : vector<1x1x11x8xf32> to vector<1x11x8xf32>
    %205 = vector.shape_cast %194 : vector<1x11x8xf32> to vector<1x1x11x8xf32>
    %206 = vector.shape_cast %196 : vector<1x11x8xf32> to vector<1x1x11x8xf32>
    %207 = vector.shape_cast %198 : vector<1x11x8xf32> to vector<1x1x11x8xf32>
    %208 = vector.shape_cast %200 : vector<1x11x8xf32> to vector<1x1x11x8xf32>
    %209 = vector.shape_cast %202 : vector<1x11x8xf32> to vector<1x1x11x8xf32>
    %210 = vector.shape_cast %204 : vector<1x11x8xf32> to vector<1x1x11x8xf32>
    %211 = tpu.concatenate %205, %206, %207, %208, %209, %210 in 1 : vector<1x1x11x8xf32>, vector<1x1x11x8xf32>, vector<1x1x11x8xf32>, vector<1x1x11x8xf32>, vector<1x1x11x8xf32>, vector<1x1x11x8xf32> -> vector<1x6x11x8xf32>
    %c0_13 = arith.constant 0 : index
    %c0_14 = arith.constant 0 : index
    %212 = vector.load %arg4[%c0_13, %c0_14] : memref<6x11xf32, #tpu.memory_space<vmem>>, vector<6x11xf32>
    %213 = vector.shape_cast %212 : vector<6x11xf32> to vector<1x6x11xf32>
    %214 = vector.shape_cast %213 : vector<1x6x11xf32> to vector<1x6x11xf32>
    %215 = vector.broadcast %214 : vector<1x6x11xf32> to vector<6x6x11xf32>
    %216 = vector.shape_cast %211 : vector<1x6x11x8xf32> to vector<6x11x8xf32>
    "tpu.trace_start"() <{level = 10 : i32, message = "kbc,kcj->kbj"}> : () -> ()
    %cst_15 = arith.constant dense<0.000000e+00> : vector<6x6x8xf32>
    %217 = tpu.matmul %215, %216, %cst_15 {dimension_numbers = #tpu.dot_dimension_numbers<[2], [1], [1], [2], [0, 0, 0, 1, 1, 2], [0], [0]>} : vector<6x6x11xf32>, vector<6x11x8xf32>, vector<6x6x8xf32> -> vector<6x6x8xf32>
    "tpu.trace_stop"() : () -> ()
    %218 = vector.shape_cast %217 : vector<6x6x8xf32> to vector<1x6x6x8xf32>
    %c0_16 = arith.constant 0 : index
    %c0_17 = arith.constant 0 : index
    %c0_18 = arith.constant 0 : index
    %219 = vector.load %arg5[%c0_16, %c0_17, %c0_18] : memref<25x8x16xf32, #tpu.memory_space<vmem>>, vector<25x8x16xf32>
    %cst_19 = arith.constant 0.000000e+00 : f32
    %220 = vector.broadcast %cst_19 : f32 to vector<2x2x16xf32>
    %221 = vector.extract_strided_slice %218 {offsets = [0, 0, 0, 0], sizes = [1, 2, 2, 8], strides = [1, 1, 1, 1]} : vector<1x6x6x8xf32> to vector<1x2x2x8xf32>
    %222 = vector.shape_cast %221 : vector<1x2x2x8xf32> to vector<2x2x8xf32>
    %223 = vector.extract_strided_slice %219 {offsets = [0, 0, 0], sizes = [1, 8, 16], strides = [1, 1, 1]} : vector<25x8x16xf32> to vector<1x8x16xf32>
    %224 = vector.shape_cast %223 : vector<1x8x16xf32> to vector<8x16xf32>
    %225 = vector.shape_cast %224 : vector<8x16xf32> to vector<1x8x16xf32>
    %226 = vector.shape_cast %225 : vector<1x8x16xf32> to vector<1x8x16xf32>
    %227 = vector.broadcast %226 : vector<1x8x16xf32> to vector<2x8x16xf32>
    "tpu.trace_start"() <{level = 10 : i32, message = "kij,kjo->kio"}> : () -> ()
    %cst_20 = arith.constant dense<0.000000e+00> : vector<2x2x16xf32>
    %228 = tpu.matmul %222, %227, %cst_20 {dimension_numbers = #tpu.dot_dimension_numbers<[2], [1], [1], [2], [0, 0, 0, 1, 1, 2], [0], [0]>} : vector<2x2x8xf32>, vector<2x8x16xf32>, vector<2x2x16xf32> -> vector<2x2x16xf32>
    "tpu.trace_stop"() : () -> ()
    %229 = arith.addf %220, %228 : vector<2x2x16xf32>
    %230 = vector.extract_strided_slice %218 {offsets = [0, 0, 1, 0], sizes = [1, 2, 2, 8], strides = [1, 1, 1, 1]} : vector<1x6x6x8xf32> to vector<1x2x2x8xf32>
    %231 = vector.shape_cast %230 : vector<1x2x2x8xf32> to vector<2x2x8xf32>
    %232 = vector.extract_strided_slice %219 {offsets = [1, 0, 0], sizes = [1, 8, 16], strides = [1, 1, 1]} : vector<25x8x16xf32> to vector<1x8x16xf32>
    %233 = vector.shape_cast %232 : vector<1x8x16xf32> to vector<8x16xf32>
    %234 = vector.shape_cast %233 : vector<8x16xf32> to vector<1x8x16xf32>
    %235 = vector.shape_cast %234 : vector<1x8x16xf32> to vector<1x8x16xf32>
    %236 = vector.broadcast %235 : vector<1x8x16xf32> to vector<2x8x16xf32>
    "tpu.trace_start"() <{level = 10 : i32, message = "kij,kjo->kio"}> : () -> ()
    %cst_21 = arith.constant dense<0.000000e+00> : vector<2x2x16xf32>
    %237 = tpu.matmul %231, %236, %cst_21 {dimension_numbers = #tpu.dot_dimension_numbers<[2], [1], [1], [2], [0, 0, 0, 1, 1, 2], [0], [0]>} : vector<2x2x8xf32>, vector<2x8x16xf32>, vector<2x2x16xf32> -> vector<2x2x16xf32>
    "tpu.trace_stop"() : () -> ()
    %238 = arith.addf %229, %237 : vector<2x2x16xf32>
    %239 = vector.extract_strided_slice %218 {offsets = [0, 0, 2, 0], sizes = [1, 2, 2, 8], strides = [1, 1, 1, 1]} : vector<1x6x6x8xf32> to vector<1x2x2x8xf32>
    %240 = vector.shape_cast %239 : vector<1x2x2x8xf32> to vector<2x2x8xf32>
    %241 = vector.extract_strided_slice %219 {offsets = [2, 0, 0], sizes = [1, 8, 16], strides = [1, 1, 1]} : vector<25x8x16xf32> to vector<1x8x16xf32>
    %242 = vector.shape_cast %241 : vector<1x8x16xf32> to vector<8x16xf32>
    %243 = vector.shape_cast %242 : vector<8x16xf32> to vector<1x8x16xf32>
    %244 = vector.shape_cast %243 : vector<1x8x16xf32> to vector<1x8x16xf32>
    %245 = vector.broadcast %244 : vector<1x8x16xf32> to vector<2x8x16xf32>
    "tpu.trace_start"() <{level = 10 : i32, message = "kij,kjo->kio"}> : () -> ()
    %cst_22 = arith.constant dense<0.000000e+00> : vector<2x2x16xf32>
    %246 = tpu.matmul %240, %245, %cst_22 {dimension_numbers = #tpu.dot_dimension_numbers<[2], [1], [1], [2], [0, 0, 0, 1, 1, 2], [0], [0]>} : vector<2x2x8xf32>, vector<2x8x16xf32>, vector<2x2x16xf32> -> vector<2x2x16xf32>
    "tpu.trace_stop"() : () -> ()
    %247 = arith.addf %238, %246 : vector<2x2x16xf32>
    %248 = vector.extract_strided_slice %218 {offsets = [0, 0, 3, 0], sizes = [1, 2, 2, 8], strides = [1, 1, 1, 1]} : vector<1x6x6x8xf32> to vector<1x2x2x8xf32>
    %249 = vector.shape_cast %248 : vector<1x2x2x8xf32> to vector<2x2x8xf32>
    %250 = vector.extract_strided_slice %219 {offsets = [3, 0, 0], sizes = [1, 8, 16], strides = [1, 1, 1]} : vector<25x8x16xf32> to vector<1x8x16xf32>
    %251 = vector.shape_cast %250 : vector<1x8x16xf32> to vector<8x16xf32>
    %252 = vector.shape_cast %251 : vector<8x16xf32> to vector<1x8x16xf32>
    %253 = vector.shape_cast %252 : vector<1x8x16xf32> to vector<1x8x16xf32>
    %254 = vector.broadcast %253 : vector<1x8x16xf32> to vector<2x8x16xf32>
    "tpu.trace_start"() <{level = 10 : i32, message = "kij,kjo->kio"}> : () -> ()
    %cst_23 = arith.constant dense<0.000000e+00> : vector<2x2x16xf32>
    %255 = tpu.matmul %249, %254, %cst_23 {dimension_numbers = #tpu.dot_dimension_numbers<[2], [1], [1], [2], [0, 0, 0, 1, 1, 2], [0], [0]>} : vector<2x2x8xf32>, vector<2x8x16xf32>, vector<2x2x16xf32> -> vector<2x2x16xf32>
    "tpu.trace_stop"() : () -> ()
    %256 = arith.addf %247, %255 : vector<2x2x16xf32>
    %257 = vector.extract_strided_slice %218 {offsets = [0, 0, 4, 0], sizes = [1, 2, 2, 8], strides = [1, 1, 1, 1]} : vector<1x6x6x8xf32> to vector<1x2x2x8xf32>
    %258 = vector.shape_cast %257 : vector<1x2x2x8xf32> to vector<2x2x8xf32>
    %259 = vector.extract_strided_slice %219 {offsets = [4, 0, 0], sizes = [1, 8, 16], strides = [1, 1, 1]} : vector<25x8x16xf32> to vector<1x8x16xf32>
    %260 = vector.shape_cast %259 : vector<1x8x16xf32> to vector<8x16xf32>
    %261 = vector.shape_cast %260 : vector<8x16xf32> to vector<1x8x16xf32>
    %262 = vector.shape_cast %261 : vector<1x8x16xf32> to vector<1x8x16xf32>
    %263 = vector.broadcast %262 : vector<1x8x16xf32> to vector<2x8x16xf32>
    "tpu.trace_start"() <{level = 10 : i32, message = "kij,kjo->kio"}> : () -> ()
    %cst_24 = arith.constant dense<0.000000e+00> : vector<2x2x16xf32>
    %264 = tpu.matmul %258, %263, %cst_24 {dimension_numbers = #tpu.dot_dimension_numbers<[2], [1], [1], [2], [0, 0, 0, 1, 1, 2], [0], [0]>} : vector<2x2x8xf32>, vector<2x8x16xf32>, vector<2x2x16xf32> -> vector<2x2x16xf32>
    "tpu.trace_stop"() : () -> ()
    %265 = arith.addf %256, %264 : vector<2x2x16xf32>
    %266 = vector.extract_strided_slice %218 {offsets = [0, 1, 0, 0], sizes = [1, 2, 2, 8], strides = [1, 1, 1, 1]} : vector<1x6x6x8xf32> to vector<1x2x2x8xf32>
    %267 = vector.shape_cast %266 : vector<1x2x2x8xf32> to vector<2x2x8xf32>
    %268 = vector.extract_strided_slice %219 {offsets = [5, 0, 0], sizes = [1, 8, 16], strides = [1, 1, 1]} : vector<25x8x16xf32> to vector<1x8x16xf32>
    %269 = vector.shape_cast %268 : vector<1x8x16xf32> to vector<8x16xf32>
    %270 = vector.shape_cast %269 : vector<8x16xf32> to vector<1x8x16xf32>
    %271 = vector.shape_cast %270 : vector<1x8x16xf32> to vector<1x8x16xf32>
    %272 = vector.broadcast %271 : vector<1x8x16xf32> to vector<2x8x16xf32>
    "tpu.trace_start"() <{level = 10 : i32, message = "kij,kjo->kio"}> : () -> ()
    %cst_25 = arith.constant dense<0.000000e+00> : vector<2x2x16xf32>
    %273 = tpu.matmul %267, %272, %cst_25 {dimension_numbers = #tpu.dot_dimension_numbers<[2], [1], [1], [2], [0, 0, 0, 1, 1, 2], [0], [0]>} : vector<2x2x8xf32>, vector<2x8x16xf32>, vector<2x2x16xf32> -> vector<2x2x16xf32>
    "tpu.trace_stop"() : () -> ()
    %274 = arith.addf %265, %273 : vector<2x2x16xf32>
    %275 = vector.extract_strided_slice %218 {offsets = [0, 1, 1, 0], sizes = [1, 2, 2, 8], strides = [1, 1, 1, 1]} : vector<1x6x6x8xf32> to vector<1x2x2x8xf32>
    %276 = vector.shape_cast %275 : vector<1x2x2x8xf32> to vector<2x2x8xf32>
    %277 = vector.extract_strided_slice %219 {offsets = [6, 0, 0], sizes = [1, 8, 16], strides = [1, 1, 1]} : vector<25x8x16xf32> to vector<1x8x16xf32>
    %278 = vector.shape_cast %277 : vector<1x8x16xf32> to vector<8x16xf32>
    %279 = vector.shape_cast %278 : vector<8x16xf32> to vector<1x8x16xf32>
    %280 = vector.shape_cast %279 : vector<1x8x16xf32> to vector<1x8x16xf32>
    %281 = vector.broadcast %280 : vector<1x8x16xf32> to vector<2x8x16xf32>
    "tpu.trace_start"() <{level = 10 : i32, message = "kij,kjo->kio"}> : () -> ()
    %cst_26 = arith.constant dense<0.000000e+00> : vector<2x2x16xf32>
    %282 = tpu.matmul %276, %281, %cst_26 {dimension_numbers = #tpu.dot_dimension_numbers<[2], [1], [1], [2], [0, 0, 0, 1, 1, 2], [0], [0]>} : vector<2x2x8xf32>, vector<2x8x16xf32>, vector<2x2x16xf32> -> vector<2x2x16xf32>
    "tpu.trace_stop"() : () -> ()
    %283 = arith.addf %274, %282 : vector<2x2x16xf32>
    %284 = vector.extract_strided_slice %218 {offsets = [0, 1, 2, 0], sizes = [1, 2, 2, 8], strides = [1, 1, 1, 1]} : vector<1x6x6x8xf32> to vector<1x2x2x8xf32>
    %285 = vector.shape_cast %284 : vector<1x2x2x8xf32> to vector<2x2x8xf32>
    %286 = vector.extract_strided_slice %219 {offsets = [7, 0, 0], sizes = [1, 8, 16], strides = [1, 1, 1]} : vector<25x8x16xf32> to vector<1x8x16xf32>
    %287 = vector.shape_cast %286 : vector<1x8x16xf32> to vector<8x16xf32>
    %288 = vector.shape_cast %287 : vector<8x16xf32> to vector<1x8x16xf32>
    %289 = vector.shape_cast %288 : vector<1x8x16xf32> to vector<1x8x16xf32>
    %290 = vector.broadcast %289 : vector<1x8x16xf32> to vector<2x8x16xf32>
    "tpu.trace_start"() <{level = 10 : i32, message = "kij,kjo->kio"}> : () -> ()
    %cst_27 = arith.constant dense<0.000000e+00> : vector<2x2x16xf32>
    %291 = tpu.matmul %285, %290, %cst_27 {dimension_numbers = #tpu.dot_dimension_numbers<[2], [1], [1], [2], [0, 0, 0, 1, 1, 2], [0], [0]>} : vector<2x2x8xf32>, vector<2x8x16xf32>, vector<2x2x16xf32> -> vector<2x2x16xf32>
    "tpu.trace_stop"() : () -> ()
    %292 = arith.addf %283, %291 : vector<2x2x16xf32>
    %293 = vector.extract_strided_slice %218 {offsets = [0, 1, 3, 0], sizes = [1, 2, 2, 8], strides = [1, 1, 1, 1]} : vector<1x6x6x8xf32> to vector<1x2x2x8xf32>
    %294 = vector.shape_cast %293 : vector<1x2x2x8xf32> to vector<2x2x8xf32>
    %295 = vector.extract_strided_slice %219 {offsets = [8, 0, 0], sizes = [1, 8, 16], strides = [1, 1, 1]} : vector<25x8x16xf32> to vector<1x8x16xf32>
    %296 = vector.shape_cast %295 : vector<1x8x16xf32> to vector<8x16xf32>
    %297 = vector.shape_cast %296 : vector<8x16xf32> to vector<1x8x16xf32>
    %298 = vector.shape_cast %297 : vector<1x8x16xf32> to vector<1x8x16xf32>
    %299 = vector.broadcast %298 : vector<1x8x16xf32> to vector<2x8x16xf32>
    "tpu.trace_start"() <{level = 10 : i32, message = "kij,kjo->kio"}> : () -> ()
    %cst_28 = arith.constant dense<0.000000e+00> : vector<2x2x16xf32>
    %300 = tpu.matmul %294, %299, %cst_28 {dimension_numbers = #tpu.dot_dimension_numbers<[2], [1], [1], [2], [0, 0, 0, 1, 1, 2], [0], [0]>} : vector<2x2x8xf32>, vector<2x8x16xf32>, vector<2x2x16xf32> -> vector<2x2x16xf32>
    "tpu.trace_stop"() : () -> ()
    %301 = arith.addf %292, %300 : vector<2x2x16xf32>
    %302 = vector.extract_strided_slice %218 {offsets = [0, 1, 4, 0], sizes = [1, 2, 2, 8], strides = [1, 1, 1, 1]} : vector<1x6x6x8xf32> to vector<1x2x2x8xf32>
    %303 = vector.shape_cast %302 : vector<1x2x2x8xf32> to vector<2x2x8xf32>
    %304 = vector.extract_strided_slice %219 {offsets = [9, 0, 0], sizes = [1, 8, 16], strides = [1, 1, 1]} : vector<25x8x16xf32> to vector<1x8x16xf32>
    %305 = vector.shape_cast %304 : vector<1x8x16xf32> to vector<8x16xf32>
    %306 = vector.shape_cast %305 : vector<8x16xf32> to vector<1x8x16xf32>
    %307 = vector.shape_cast %306 : vector<1x8x16xf32> to vector<1x8x16xf32>
    %308 = vector.broadcast %307 : vector<1x8x16xf32> to vector<2x8x16xf32>
    "tpu.trace_start"() <{level = 10 : i32, message = "kij,kjo->kio"}> : () -> ()
    %cst_29 = arith.constant dense<0.000000e+00> : vector<2x2x16xf32>
    %309 = tpu.matmul %303, %308, %cst_29 {dimension_numbers = #tpu.dot_dimension_numbers<[2], [1], [1], [2], [0, 0, 0, 1, 1, 2], [0], [0]>} : vector<2x2x8xf32>, vector<2x8x16xf32>, vector<2x2x16xf32> -> vector<2x2x16xf32>
    "tpu.trace_stop"() : () -> ()
    %310 = arith.addf %301, %309 : vector<2x2x16xf32>
    %311 = vector.extract_strided_slice %218 {offsets = [0, 2, 0, 0], sizes = [1, 2, 2, 8], strides = [1, 1, 1, 1]} : vector<1x6x6x8xf32> to vector<1x2x2x8xf32>
    %312 = vector.shape_cast %311 : vector<1x2x2x8xf32> to vector<2x2x8xf32>
    %313 = vector.extract_strided_slice %219 {offsets = [10, 0, 0], sizes = [1, 8, 16], strides = [1, 1, 1]} : vector<25x8x16xf32> to vector<1x8x16xf32>
    %314 = vector.shape_cast %313 : vector<1x8x16xf32> to vector<8x16xf32>
    %315 = vector.shape_cast %314 : vector<8x16xf32> to vector<1x8x16xf32>
    %316 = vector.shape_cast %315 : vector<1x8x16xf32> to vector<1x8x16xf32>
    %317 = vector.broadcast %316 : vector<1x8x16xf32> to vector<2x8x16xf32>
    "tpu.trace_start"() <{level = 10 : i32, message = "kij,kjo->kio"}> : () -> ()
    %cst_30 = arith.constant dense<0.000000e+00> : vector<2x2x16xf32>
    %318 = tpu.matmul %312, %317, %cst_30 {dimension_numbers = #tpu.dot_dimension_numbers<[2], [1], [1], [2], [0, 0, 0, 1, 1, 2], [0], [0]>} : vector<2x2x8xf32>, vector<2x8x16xf32>, vector<2x2x16xf32> -> vector<2x2x16xf32>
    "tpu.trace_stop"() : () -> ()
    %319 = arith.addf %310, %318 : vector<2x2x16xf32>
    %320 = vector.extract_strided_slice %218 {offsets = [0, 2, 1, 0], sizes = [1, 2, 2, 8], strides = [1, 1, 1, 1]} : vector<1x6x6x8xf32> to vector<1x2x2x8xf32>
    %321 = vector.shape_cast %320 : vector<1x2x2x8xf32> to vector<2x2x8xf32>
    %322 = vector.extract_strided_slice %219 {offsets = [11, 0, 0], sizes = [1, 8, 16], strides = [1, 1, 1]} : vector<25x8x16xf32> to vector<1x8x16xf32>
    %323 = vector.shape_cast %322 : vector<1x8x16xf32> to vector<8x16xf32>
    %324 = vector.shape_cast %323 : vector<8x16xf32> to vector<1x8x16xf32>
    %325 = vector.shape_cast %324 : vector<1x8x16xf32> to vector<1x8x16xf32>
    %326 = vector.broadcast %325 : vector<1x8x16xf32> to vector<2x8x16xf32>
    "tpu.trace_start"() <{level = 10 : i32, message = "kij,kjo->kio"}> : () -> ()
    %cst_31 = arith.constant dense<0.000000e+00> : vector<2x2x16xf32>
    %327 = tpu.matmul %321, %326, %cst_31 {dimension_numbers = #tpu.dot_dimension_numbers<[2], [1], [1], [2], [0, 0, 0, 1, 1, 2], [0], [0]>} : vector<2x2x8xf32>, vector<2x8x16xf32>, vector<2x2x16xf32> -> vector<2x2x16xf32>
    "tpu.trace_stop"() : () -> ()
    %328 = arith.addf %319, %327 : vector<2x2x16xf32>
    %329 = vector.extract_strided_slice %218 {offsets = [0, 2, 2, 0], sizes = [1, 2, 2, 8], strides = [1, 1, 1, 1]} : vector<1x6x6x8xf32> to vector<1x2x2x8xf32>
    %330 = vector.shape_cast %329 : vector<1x2x2x8xf32> to vector<2x2x8xf32>
    %331 = vector.extract_strided_slice %219 {offsets = [12, 0, 0], sizes = [1, 8, 16], strides = [1, 1, 1]} : vector<25x8x16xf32> to vector<1x8x16xf32>
    %332 = vector.shape_cast %331 : vector<1x8x16xf32> to vector<8x16xf32>
    %333 = vector.shape_cast %332 : vector<8x16xf32> to vector<1x8x16xf32>
    %334 = vector.shape_cast %333 : vector<1x8x16xf32> to vector<1x8x16xf32>
    %335 = vector.broadcast %334 : vector<1x8x16xf32> to vector<2x8x16xf32>
    "tpu.trace_start"() <{level = 10 : i32, message = "kij,kjo->kio"}> : () -> ()
    %cst_32 = arith.constant dense<0.000000e+00> : vector<2x2x16xf32>
    %336 = tpu.matmul %330, %335, %cst_32 {dimension_numbers = #tpu.dot_dimension_numbers<[2], [1], [1], [2], [0, 0, 0, 1, 1, 2], [0], [0]>} : vector<2x2x8xf32>, vector<2x8x16xf32>, vector<2x2x16xf32> -> vector<2x2x16xf32>
    "tpu.trace_stop"() : () -> ()
    %337 = arith.addf %328, %336 : vector<2x2x16xf32>
    %338 = vector.extract_strided_slice %218 {offsets = [0, 2, 3, 0], sizes = [1, 2, 2, 8], strides = [1, 1, 1, 1]} : vector<1x6x6x8xf32> to vector<1x2x2x8xf32>
    %339 = vector.shape_cast %338 : vector<1x2x2x8xf32> to vector<2x2x8xf32>
    %340 = vector.extract_strided_slice %219 {offsets = [13, 0, 0], sizes = [1, 8, 16], strides = [1, 1, 1]} : vector<25x8x16xf32> to vector<1x8x16xf32>
    %341 = vector.shape_cast %340 : vector<1x8x16xf32> to vector<8x16xf32>
    %342 = vector.shape_cast %341 : vector<8x16xf32> to vector<1x8x16xf32>
    %343 = vector.shape_cast %342 : vector<1x8x16xf32> to vector<1x8x16xf32>
    %344 = vector.broadcast %343 : vector<1x8x16xf32> to vector<2x8x16xf32>
    "tpu.trace_start"() <{level = 10 : i32, message = "kij,kjo->kio"}> : () -> ()
    %cst_33 = arith.constant dense<0.000000e+00> : vector<2x2x16xf32>
    %345 = tpu.matmul %339, %344, %cst_33 {dimension_numbers = #tpu.dot_dimension_numbers<[2], [1], [1], [2], [0, 0, 0, 1, 1, 2], [0], [0]>} : vector<2x2x8xf32>, vector<2x8x16xf32>, vector<2x2x16xf32> -> vector<2x2x16xf32>
    "tpu.trace_stop"() : () -> ()
    %346 = arith.addf %337, %345 : vector<2x2x16xf32>
    %347 = vector.extract_strided_slice %218 {offsets = [0, 2, 4, 0], sizes = [1, 2, 2, 8], strides = [1, 1, 1, 1]} : vector<1x6x6x8xf32> to vector<1x2x2x8xf32>
    %348 = vector.shape_cast %347 : vector<1x2x2x8xf32> to vector<2x2x8xf32>
    %349 = vector.extract_strided_slice %219 {offsets = [14, 0, 0], sizes = [1, 8, 16], strides = [1, 1, 1]} : vector<25x8x16xf32> to vector<1x8x16xf32>
    %350 = vector.shape_cast %349 : vector<1x8x16xf32> to vector<8x16xf32>
    %351 = vector.shape_cast %350 : vector<8x16xf32> to vector<1x8x16xf32>
    %352 = vector.shape_cast %351 : vector<1x8x16xf32> to vector<1x8x16xf32>
    %353 = vector.broadcast %352 : vector<1x8x16xf32> to vector<2x8x16xf32>
    "tpu.trace_start"() <{level = 10 : i32, message = "kij,kjo->kio"}> : () -> ()
    %cst_34 = arith.constant dense<0.000000e+00> : vector<2x2x16xf32>
    %354 = tpu.matmul %348, %353, %cst_34 {dimension_numbers = #tpu.dot_dimension_numbers<[2], [1], [1], [2], [0, 0, 0, 1, 1, 2], [0], [0]>} : vector<2x2x8xf32>, vector<2x8x16xf32>, vector<2x2x16xf32> -> vector<2x2x16xf32>
    "tpu.trace_stop"() : () -> ()
    %355 = arith.addf %346, %354 : vector<2x2x16xf32>
    %356 = vector.extract_strided_slice %218 {offsets = [0, 3, 0, 0], sizes = [1, 2, 2, 8], strides = [1, 1, 1, 1]} : vector<1x6x6x8xf32> to vector<1x2x2x8xf32>
    %357 = vector.shape_cast %356 : vector<1x2x2x8xf32> to vector<2x2x8xf32>
    %358 = vector.extract_strided_slice %219 {offsets = [15, 0, 0], sizes = [1, 8, 16], strides = [1, 1, 1]} : vector<25x8x16xf32> to vector<1x8x16xf32>
    %359 = vector.shape_cast %358 : vector<1x8x16xf32> to vector<8x16xf32>
    %360 = vector.shape_cast %359 : vector<8x16xf32> to vector<1x8x16xf32>
    %361 = vector.shape_cast %360 : vector<1x8x16xf32> to vector<1x8x16xf32>
    %362 = vector.broadcast %361 : vector<1x8x16xf32> to vector<2x8x16xf32>
    "tpu.trace_start"() <{level = 10 : i32, message = "kij,kjo->kio"}> : () -> ()
    %cst_35 = arith.constant dense<0.000000e+00> : vector<2x2x16xf32>
    %363 = tpu.matmul %357, %362, %cst_35 {dimension_numbers = #tpu.dot_dimension_numbers<[2], [1], [1], [2], [0, 0, 0, 1, 1, 2], [0], [0]>} : vector<2x2x8xf32>, vector<2x8x16xf32>, vector<2x2x16xf32> -> vector<2x2x16xf32>
    "tpu.trace_stop"() : () -> ()
    %364 = arith.addf %355, %363 : vector<2x2x16xf32>
    %365 = vector.extract_strided_slice %218 {offsets = [0, 3, 1, 0], sizes = [1, 2, 2, 8], strides = [1, 1, 1, 1]} : vector<1x6x6x8xf32> to vector<1x2x2x8xf32>
    %366 = vector.shape_cast %365 : vector<1x2x2x8xf32> to vector<2x2x8xf32>
    %367 = vector.extract_strided_slice %219 {offsets = [16, 0, 0], sizes = [1, 8, 16], strides = [1, 1, 1]} : vector<25x8x16xf32> to vector<1x8x16xf32>
    %368 = vector.shape_cast %367 : vector<1x8x16xf32> to vector<8x16xf32>
    %369 = vector.shape_cast %368 : vector<8x16xf32> to vector<1x8x16xf32>
    %370 = vector.shape_cast %369 : vector<1x8x16xf32> to vector<1x8x16xf32>
    %371 = vector.broadcast %370 : vector<1x8x16xf32> to vector<2x8x16xf32>
    "tpu.trace_start"() <{level = 10 : i32, message = "kij,kjo->kio"}> : () -> ()
    %cst_36 = arith.constant dense<0.000000e+00> : vector<2x2x16xf32>
    %372 = tpu.matmul %366, %371, %cst_36 {dimension_numbers = #tpu.dot_dimension_numbers<[2], [1], [1], [2], [0, 0, 0, 1, 1, 2], [0], [0]>} : vector<2x2x8xf32>, vector<2x8x16xf32>, vector<2x2x16xf32> -> vector<2x2x16xf32>
    "tpu.trace_stop"() : () -> ()
    %373 = arith.addf %364, %372 : vector<2x2x16xf32>
    %374 = vector.extract_strided_slice %218 {offsets = [0, 3, 2, 0], sizes = [1, 2, 2, 8], strides = [1, 1, 1, 1]} : vector<1x6x6x8xf32> to vector<1x2x2x8xf32>
    %375 = vector.shape_cast %374 : vector<1x2x2x8xf32> to vector<2x2x8xf32>
    %376 = vector.extract_strided_slice %219 {offsets = [17, 0, 0], sizes = [1, 8, 16], strides = [1, 1, 1]} : vector<25x8x16xf32> to vector<1x8x16xf32>
    %377 = vector.shape_cast %376 : vector<1x8x16xf32> to vector<8x16xf32>
    %378 = vector.shape_cast %377 : vector<8x16xf32> to vector<1x8x16xf32>
    %379 = vector.shape_cast %378 : vector<1x8x16xf32> to vector<1x8x16xf32>
    %380 = vector.broadcast %379 : vector<1x8x16xf32> to vector<2x8x16xf32>
    "tpu.trace_start"() <{level = 10 : i32, message = "kij,kjo->kio"}> : () -> ()
    %cst_37 = arith.constant dense<0.000000e+00> : vector<2x2x16xf32>
    %381 = tpu.matmul %375, %380, %cst_37 {dimension_numbers = #tpu.dot_dimension_numbers<[2], [1], [1], [2], [0, 0, 0, 1, 1, 2], [0], [0]>} : vector<2x2x8xf32>, vector<2x8x16xf32>, vector<2x2x16xf32> -> vector<2x2x16xf32>
    "tpu.trace_stop"() : () -> ()
    %382 = arith.addf %373, %381 : vector<2x2x16xf32>
    %383 = vector.extract_strided_slice %218 {offsets = [0, 3, 3, 0], sizes = [1, 2, 2, 8], strides = [1, 1, 1, 1]} : vector<1x6x6x8xf32> to vector<1x2x2x8xf32>
    %384 = vector.shape_cast %383 : vector<1x2x2x8xf32> to vector<2x2x8xf32>
    %385 = vector.extract_strided_slice %219 {offsets = [18, 0, 0], sizes = [1, 8, 16], strides = [1, 1, 1]} : vector<25x8x16xf32> to vector<1x8x16xf32>
    %386 = vector.shape_cast %385 : vector<1x8x16xf32> to vector<8x16xf32>
    %387 = vector.shape_cast %386 : vector<8x16xf32> to vector<1x8x16xf32>
    %388 = vector.shape_cast %387 : vector<1x8x16xf32> to vector<1x8x16xf32>
    %389 = vector.broadcast %388 : vector<1x8x16xf32> to vector<2x8x16xf32>
    "tpu.trace_start"() <{level = 10 : i32, message = "kij,kjo->kio"}> : () -> ()
    %cst_38 = arith.constant dense<0.000000e+00> : vector<2x2x16xf32>
    %390 = tpu.matmul %384, %389, %cst_38 {dimension_numbers = #tpu.dot_dimension_numbers<[2], [1], [1], [2], [0, 0, 0, 1, 1, 2], [0], [0]>} : vector<2x2x8xf32>, vector<2x8x16xf32>, vector<2x2x16xf32> -> vector<2x2x16xf32>
    "tpu.trace_stop"() : () -> ()
    %391 = arith.addf %382, %390 : vector<2x2x16xf32>
    %392 = vector.extract_strided_slice %218 {offsets = [0, 3, 4, 0], sizes = [1, 2, 2, 8], strides = [1, 1, 1, 1]} : vector<1x6x6x8xf32> to vector<1x2x2x8xf32>
    %393 = vector.shape_cast %392 : vector<1x2x2x8xf32> to vector<2x2x8xf32>
    %394 = vector.extract_strided_slice %219 {offsets = [19, 0, 0], sizes = [1, 8, 16], strides = [1, 1, 1]} : vector<25x8x16xf32> to vector<1x8x16xf32>
    %395 = vector.shape_cast %394 : vector<1x8x16xf32> to vector<8x16xf32>
    %396 = vector.shape_cast %395 : vector<8x16xf32> to vector<1x8x16xf32>
    %397 = vector.shape_cast %396 : vector<1x8x16xf32> to vector<1x8x16xf32>
    %398 = vector.broadcast %397 : vector<1x8x16xf32> to vector<2x8x16xf32>
    "tpu.trace_start"() <{level = 10 : i32, message = "kij,kjo->kio"}> : () -> ()
    %cst_39 = arith.constant dense<0.000000e+00> : vector<2x2x16xf32>
    %399 = tpu.matmul %393, %398, %cst_39 {dimension_numbers = #tpu.dot_dimension_numbers<[2], [1], [1], [2], [0, 0, 0, 1, 1, 2], [0], [0]>} : vector<2x2x8xf32>, vector<2x8x16xf32>, vector<2x2x16xf32> -> vector<2x2x16xf32>
    "tpu.trace_stop"() : () -> ()
    %400 = arith.addf %391, %399 : vector<2x2x16xf32>
    %401 = vector.extract_strided_slice %218 {offsets = [0, 4, 0, 0], sizes = [1, 2, 2, 8], strides = [1, 1, 1, 1]} : vector<1x6x6x8xf32> to vector<1x2x2x8xf32>
    %402 = vector.shape_cast %401 : vector<1x2x2x8xf32> to vector<2x2x8xf32>
    %403 = vector.extract_strided_slice %219 {offsets = [20, 0, 0], sizes = [1, 8, 16], strides = [1, 1, 1]} : vector<25x8x16xf32> to vector<1x8x16xf32>
    %404 = vector.shape_cast %403 : vector<1x8x16xf32> to vector<8x16xf32>
    %405 = vector.shape_cast %404 : vector<8x16xf32> to vector<1x8x16xf32>
    %406 = vector.shape_cast %405 : vector<1x8x16xf32> to vector<1x8x16xf32>
    %407 = vector.broadcast %406 : vector<1x8x16xf32> to vector<2x8x16xf32>
    "tpu.trace_start"() <{level = 10 : i32, message = "kij,kjo->kio"}> : () -> ()
    %cst_40 = arith.constant dense<0.000000e+00> : vector<2x2x16xf32>
    %408 = tpu.matmul %402, %407, %cst_40 {dimension_numbers = #tpu.dot_dimension_numbers<[2], [1], [1], [2], [0, 0, 0, 1, 1, 2], [0], [0]>} : vector<2x2x8xf32>, vector<2x8x16xf32>, vector<2x2x16xf32> -> vector<2x2x16xf32>
    "tpu.trace_stop"() : () -> ()
    %409 = arith.addf %400, %408 : vector<2x2x16xf32>
    %410 = vector.extract_strided_slice %218 {offsets = [0, 4, 1, 0], sizes = [1, 2, 2, 8], strides = [1, 1, 1, 1]} : vector<1x6x6x8xf32> to vector<1x2x2x8xf32>
    %411 = vector.shape_cast %410 : vector<1x2x2x8xf32> to vector<2x2x8xf32>
    %412 = vector.extract_strided_slice %219 {offsets = [21, 0, 0], sizes = [1, 8, 16], strides = [1, 1, 1]} : vector<25x8x16xf32> to vector<1x8x16xf32>
    %413 = vector.shape_cast %412 : vector<1x8x16xf32> to vector<8x16xf32>
    %414 = vector.shape_cast %413 : vector<8x16xf32> to vector<1x8x16xf32>
    %415 = vector.shape_cast %414 : vector<1x8x16xf32> to vector<1x8x16xf32>
    %416 = vector.broadcast %415 : vector<1x8x16xf32> to vector<2x8x16xf32>
    "tpu.trace_start"() <{level = 10 : i32, message = "kij,kjo->kio"}> : () -> ()
    %cst_41 = arith.constant dense<0.000000e+00> : vector<2x2x16xf32>
    %417 = tpu.matmul %411, %416, %cst_41 {dimension_numbers = #tpu.dot_dimension_numbers<[2], [1], [1], [2], [0, 0, 0, 1, 1, 2], [0], [0]>} : vector<2x2x8xf32>, vector<2x8x16xf32>, vector<2x2x16xf32> -> vector<2x2x16xf32>
    "tpu.trace_stop"() : () -> ()
    %418 = arith.addf %409, %417 : vector<2x2x16xf32>
    %419 = vector.extract_strided_slice %218 {offsets = [0, 4, 2, 0], sizes = [1, 2, 2, 8], strides = [1, 1, 1, 1]} : vector<1x6x6x8xf32> to vector<1x2x2x8xf32>
    %420 = vector.shape_cast %419 : vector<1x2x2x8xf32> to vector<2x2x8xf32>
    %421 = vector.extract_strided_slice %219 {offsets = [22, 0, 0], sizes = [1, 8, 16], strides = [1, 1, 1]} : vector<25x8x16xf32> to vector<1x8x16xf32>
    %422 = vector.shape_cast %421 : vector<1x8x16xf32> to vector<8x16xf32>
    %423 = vector.shape_cast %422 : vector<8x16xf32> to vector<1x8x16xf32>
    %424 = vector.shape_cast %423 : vector<1x8x16xf32> to vector<1x8x16xf32>
    %425 = vector.broadcast %424 : vector<1x8x16xf32> to vector<2x8x16xf32>
    "tpu.trace_start"() <{level = 10 : i32, message = "kij,kjo->kio"}> : () -> ()
    %cst_42 = arith.constant dense<0.000000e+00> : vector<2x2x16xf32>
    %426 = tpu.matmul %420, %425, %cst_42 {dimension_numbers = #tpu.dot_dimension_numbers<[2], [1], [1], [2], [0, 0, 0, 1, 1, 2], [0], [0]>} : vector<2x2x8xf32>, vector<2x8x16xf32>, vector<2x2x16xf32> -> vector<2x2x16xf32>
    "tpu.trace_stop"() : () -> ()
    %427 = arith.addf %418, %426 : vector<2x2x16xf32>
    %428 = vector.extract_strided_slice %218 {offsets = [0, 4, 3, 0], sizes = [1, 2, 2, 8], strides = [1, 1, 1, 1]} : vector<1x6x6x8xf32> to vector<1x2x2x8xf32>
    %429 = vector.shape_cast %428 : vector<1x2x2x8xf32> to vector<2x2x8xf32>
    %430 = vector.extract_strided_slice %219 {offsets = [23, 0, 0], sizes = [1, 8, 16], strides = [1, 1, 1]} : vector<25x8x16xf32> to vector<1x8x16xf32>
    %431 = vector.shape_cast %430 : vector<1x8x16xf32> to vector<8x16xf32>
    %432 = vector.shape_cast %431 : vector<8x16xf32> to vector<1x8x16xf32>
    %433 = vector.shape_cast %432 : vector<1x8x16xf32> to vector<1x8x16xf32>
    %434 = vector.broadcast %433 : vector<1x8x16xf32> to vector<2x8x16xf32>
    "tpu.trace_start"() <{level = 10 : i32, message = "kij,kjo->kio"}> : () -> ()
    %cst_43 = arith.constant dense<0.000000e+00> : vector<2x2x16xf32>
    %435 = tpu.matmul %429, %434, %cst_43 {dimension_numbers = #tpu.dot_dimension_numbers<[2], [1], [1], [2], [0, 0, 0, 1, 1, 2], [0], [0]>} : vector<2x2x8xf32>, vector<2x8x16xf32>, vector<2x2x16xf32> -> vector<2x2x16xf32>
    "tpu.trace_stop"() : () -> ()
    %436 = arith.addf %427, %435 : vector<2x2x16xf32>
    %437 = vector.extract_strided_slice %218 {offsets = [0, 4, 4, 0], sizes = [1, 2, 2, 8], strides = [1, 1, 1, 1]} : vector<1x6x6x8xf32> to vector<1x2x2x8xf32>
    %438 = vector.shape_cast %437 : vector<1x2x2x8xf32> to vector<2x2x8xf32>
    %439 = vector.extract_strided_slice %219 {offsets = [24, 0, 0], sizes = [1, 8, 16], strides = [1, 1, 1]} : vector<25x8x16xf32> to vector<1x8x16xf32>
    %440 = vector.shape_cast %439 : vector<1x8x16xf32> to vector<8x16xf32>
    %441 = vector.shape_cast %440 : vector<8x16xf32> to vector<1x8x16xf32>
    %442 = vector.shape_cast %441 : vector<1x8x16xf32> to vector<1x8x16xf32>
    %443 = vector.broadcast %442 : vector<1x8x16xf32> to vector<2x8x16xf32>
    "tpu.trace_start"() <{level = 10 : i32, message = "kij,kjo->kio"}> : () -> ()
    %cst_44 = arith.constant dense<0.000000e+00> : vector<2x2x16xf32>
    %444 = tpu.matmul %438, %443, %cst_44 {dimension_numbers = #tpu.dot_dimension_numbers<[2], [1], [1], [2], [0, 0, 0, 1, 1, 2], [0], [0]>} : vector<2x2x8xf32>, vector<2x8x16xf32>, vector<2x2x16xf32> -> vector<2x2x16xf32>
    "tpu.trace_stop"() : () -> ()
    %445 = arith.addf %436, %444 : vector<2x2x16xf32>
    %c0_45 = arith.constant 0 : index
    %c0_46 = arith.constant 0 : index
    %c0_47 = arith.constant 0 : index
    %446 = vector.load %arg6[%c0_45, %c0_46, %c0_47] : memref<1x1x16xf32, #tpu.memory_space<vmem>>, vector<1x1x16xf32>
    %447 = vector.broadcast %446 : vector<1x1x16xf32> to vector<2x2x16xf32>
    %448 = arith.addf %445, %447 : vector<2x2x16xf32>
    %c1 = arith.constant 1 : index
    %449 = memref.load %arg11[%c1] : memref<3xf32, #tpu.memory_space<smem>>
    %cst_48 = arith.constant 0.000000e+00 : f32
    %450 = vector.broadcast %cst_48 : f32 to vector<2x2x16xf32>
    %451 = arith.cmpf ogt, %448, %450 : vector<2x2x16xf32>
    %452 = vector.broadcast %449 : f32 to vector<2x2x16xf32>
    %453 = arith.mulf %452, %448 : vector<2x2x16xf32>
    %454 = arith.select %451, %448, %453 : vector<2x2x16xi1>, vector<2x2x16xf32>
    %455 = vector.shape_cast %454 : vector<2x2x16xf32> to vector<1x2x2x16xf32>
    %456 = vector.extract_strided_slice %455 {offsets = [0, 0, 0, 0], sizes = [1, 1, 2, 16], strides = [1, 1, 1, 1]} : vector<1x2x2x16xf32> to vector<1x1x2x16xf32>
    %457 = vector.shape_cast %456 : vector<1x1x2x16xf32> to vector<1x2x16xf32>
    %458 = vector.extract_strided_slice %455 {offsets = [0, 1, 0, 0], sizes = [1, 1, 2, 16], strides = [1, 1, 1, 1]} : vector<1x2x2x16xf32> to vector<1x1x2x16xf32>
    %459 = vector.shape_cast %458 : vector<1x1x2x16xf32> to vector<1x2x16xf32>
    %460 = arith.maximumf %457, %459 : vector<1x2x16xf32>
    %461 = vector.extract_strided_slice %460 {offsets = [0, 0, 0], sizes = [1, 1, 16], strides = [1, 1, 1]} : vector<1x2x16xf32> to vector<1x1x16xf32>
    %462 = vector.extract_strided_slice %460 {offsets = [0, 1, 0], sizes = [1, 1, 16], strides = [1, 1, 1]} : vector<1x2x16xf32> to vector<1x1x16xf32>
    %463 = arith.maximumf %461, %462 : vector<1x1x16xf32>
    %c0_49 = arith.constant 0 : index
    %c0_50 = arith.constant 0 : index
    %464 = vector.load %arg7[%c0_49, %c0_50] : memref<16x32xf32, #tpu.memory_space<vmem>>, vector<16x32xf32>
    %465 = vector.shape_cast %464 : vector<16x32xf32> to vector<1x16x32xf32>
    "tpu.trace_start"() <{level = 10 : i32, message = "nij,njk->nik"}> : () -> ()
    %cst_51 = arith.constant dense<0.000000e+00> : vector<1x1x32xf32>
    %466 = tpu.matmul %463, %465, %cst_51 {dimension_numbers = #tpu.dot_dimension_numbers<[2], [1], [1], [2], [0, 0, 0, 1, 1, 2], [0], [0]>} : vector<1x1x16xf32>, vector<1x16x32xf32>, vector<1x1x32xf32> -> vector<1x1x32xf32>
    "tpu.trace_stop"() : () -> ()
    %c0_52 = arith.constant 0 : index
    %c0_53 = arith.constant 0 : index
    %c0_54 = arith.constant 0 : index
    %467 = vector.load %arg8[%c0_52, %c0_53, %c0_54] : memref<1x1x32xf32, #tpu.memory_space<vmem>>, vector<1x1x32xf32>
    %468 = arith.addf %466, %467 : vector<1x1x32xf32>
    %c2 = arith.constant 2 : index
    %469 = memref.load %arg11[%c2] : memref<3xf32, #tpu.memory_space<smem>>
    %cst_55 = arith.constant 0.000000e+00 : f32
    %470 = vector.broadcast %cst_55 : f32 to vector<1x1x32xf32>
    %471 = arith.cmpf ogt, %468, %470 : vector<1x1x32xf32>
    %472 = vector.broadcast %469 : f32 to vector<1x1x32xf32>
    %473 = arith.mulf %472, %468 : vector<1x1x32xf32>
    %474 = arith.select %471, %468, %473 : vector<1x1x32xi1>, vector<1x1x32xf32>
    %c0_56 = arith.constant 0 : index
    %c0_57 = arith.constant 0 : index
    %475 = vector.load %arg9[%c0_56, %c0_57] : memref<32x8xf32, #tpu.memory_space<vmem>>, vector<32x8xf32>
    %476 = vector.shape_cast %475 : vector<32x8xf32> to vector<1x32x8xf32>
    "tpu.trace_start"() <{level = 10 : i32, message = "nij,njk->nik"}> : () -> ()
    %cst_58 = arith.constant dense<0.000000e+00> : vector<1x1x8xf32>
    %477 = tpu.matmul %474, %476, %cst_58 {dimension_numbers = #tpu.dot_dimension_numbers<[2], [1], [1], [2], [0, 0, 0, 1, 1, 2], [0], [0]>} : vector<1x1x32xf32>, vector<1x32x8xf32>, vector<1x1x8xf32> -> vector<1x1x8xf32>
    "tpu.trace_stop"() : () -> ()
    %c0_59 = arith.constant 0 : index
    %c0_60 = arith.constant 0 : index
    %c0_61 = arith.constant 0 : index
    %478 = vector.load %arg10[%c0_59, %c0_60, %c0_61] : memref<1x1x8xf32, #tpu.memory_space<vmem>>, vector<1x1x8xf32>
    %479 = arith.addf %477, %478 : vector<1x1x8xf32>
    %c0_62 = arith.constant 0 : index
    %c0_63 = arith.constant 0 : index
    %c0_64 = arith.constant 0 : index
    %480 = vector.load %arg12[%c0_62, %c0_63, %c0_64] : memref<1x1x8xf32, #tpu.memory_space<vmem>>, vector<1x1x8xf32>
    tpu.vector_store %arg12[%c0_62, %c0_63, %c0_64], %479 {strides = array<i32>} : memref<1x1x8xf32, #tpu.memory_space<vmem>>, vector<1x1x8xf32>,
    return
  }
  func.func @transform_0(%arg0: i32) -> (i32, i32, i32, i32) {
    %c0_i32 = arith.constant 0 : i32
    %c0_i32_0 = arith.constant 0 : i32
    %c0_i32_1 = arith.constant 0 : i32
    %c0_i32_2 = arith.constant 0 : i32
    return %arg0, %c0_i32, %c0_i32_0, %c0_i32_1 : i32, i32, i32, i32
  }
  func.func @transform_1(%arg0: i32) -> (i32, i32, i32, i32, i32) {
    %c0_i32 = arith.constant 0 : i32
    %c0_i32_0 = arith.constant 0 : i32
    %c0_i32_1 = arith.constant 0 : i32
    %c0_i32_2 = arith.constant 0 : i32
    %c0_i32_3 = arith.constant 0 : i32
    %c0_i32_4 = arith.constant 0 : i32
    return %c0_i32, %c0_i32_0, %c0_i32_1, %c0_i32_2, %c0_i32_3 : i32, i32, i32, i32, i32
  }
  func.func @transform_2(%arg0: i32) -> (i32, i32, i32, i32) {
    %c0_i32 = arith.constant 0 : i32
    %c0_i32_0 = arith.constant 0 : i32
    %c0_i32_1 = arith.constant 0 : i32
    %c0_i32_2 = arith.constant 0 : i32
    %c0_i32_3 = arith.constant 0 : i32
    return %c0_i32, %c0_i32_0, %c0_i32_1, %c0_i32_2 : i32, i32, i32, i32
  }
  func.func @transform_3(%arg0: i32) -> (i32, i32) {
    %c0_i32 = arith.constant 0 : i32
    %c0_i32_0 = arith.constant 0 : i32
    %c0_i32_1 = arith.constant 0 : i32
    return %c0_i32, %c0_i32_0 : i32, i32
  }
  func.func @transform_4(%arg0: i32) -> (i32, i32, i32) {
    %c0_i32 = arith.constant 0 : i32
    %c0_i32_0 = arith.constant 0 : i32
    %c0_i32_1 = arith.constant 0 : i32
    %c0_i32_2 = arith.constant 0 : i32
    return %c0_i32, %c0_i32_0, %c0_i32_1 : i32, i32, i32
  }
  func.func @transform_5(%arg0: i32) -> (i32, i32, i32) {
    %c0_i32 = arith.constant 0 : i32
    %c0_i32_0 = arith.constant 0 : i32
    %c0_i32_1 = arith.constant 0 : i32
    %c0_i32_2 = arith.constant 0 : i32
    return %c0_i32, %c0_i32_0, %c0_i32_1 : i32, i32, i32
  }
  func.func @transform_6(%arg0: i32) -> (i32, i32) {
    %c0_i32 = arith.constant 0 : i32
    %c0_i32_0 = arith.constant 0 : i32
    %c0_i32_1 = arith.constant 0 : i32
    return %c0_i32, %c0_i32_0 : i32, i32
  }
  func.func @transform_7(%arg0: i32) -> (i32, i32, i32) {
    %c0_i32 = arith.constant 0 : i32
    %c0_i32_0 = arith.constant 0 : i32
    %c0_i32_1 = arith.constant 0 : i32
    %c0_i32_2 = arith.constant 0 : i32
    return %c0_i32, %c0_i32_0, %c0_i32_1 : i32, i32, i32
  }
  func.func @transform_8(%arg0: i32) -> (i32, i32) {
    %c0_i32 = arith.constant 0 : i32
    %c0_i32_0 = arith.constant 0 : i32
    %c0_i32_1 = arith.constant 0 : i32
    return %c0_i32, %c0_i32_0 : i32, i32
  }
  func.func @transform_9(%arg0: i32) -> (i32, i32, i32) {
    %c0_i32 = arith.constant 0 : i32
    %c0_i32_0 = arith.constant 0 : i32
    %c0_i32_1 = arith.constant 0 : i32
    %c0_i32_2 = arith.constant 0 : i32
    return %c0_i32, %c0_i32_0, %c0_i32_1 : i32, i32, i32
  }
  func.func @transform_10(%arg0: i32) -> i32 {
    %c0_i32 = arith.constant 0 : i32
    %c0_i32_0 = arith.constant 0 : i32
    return %c0_i32 : i32
  }
  func.func @transform_11(%arg0: i32) -> (i32, i32, i32) {
    %c0_i32 = arith.constant 0 : i32
    %c0_i32_0 = arith.constant 0 : i32
    %c0_i32_1 = arith.constant 0 : i32
    return %arg0, %c0_i32, %c0_i32_0 : i32, i32, i32
  }
}

</mosaic_0001>

<llo_original>
// kernel: embedding_model_forward.1
$region0: #{embedding_model_forward.1}
  #allocation0 [shape = 'u32[]', space=smem, size = 0x4, offset = 0x4, fixed_abs, tag = 'smem constant byte address 0x4 - core index']
  #allocation1 [shape = 'u32[72,128]{1,0:T(1,128)}', space=vmem, size = 0x9000, scoped, tag = 'internal scratch']
  %s0 = inlined_call_operand.vmem [shape: f32[2,16,16,1], index: 0, kind: input, shape index: {}]
  %s1 = inlined_call_operand.vmem [shape: f32[25,1,1,1,8], index: 1, kind: input, shape index: {}]
  %s2 = inlined_call_operand.vmem [shape: f32[1,1,1,8], index: 2, kind: input, shape index: {}]
  %s3 = inlined_call_operand.vmem [shape: f32[6,11], index: 3, kind: input, shape index: {}]
  %s4 = inlined_call_operand.vmem [shape: f32[25,8,16], index: 4, kind: input, shape index: {}]
  %s5 = inlined_call_operand.vmem [shape: f32[1,1,16], index: 5, kind: input, shape index: {}]
  %s6 = inlined_call_operand.vmem [shape: f32[16,32], index: 6, kind: input, shape index: {}]
  %s7 = inlined_call_operand.vmem [shape: f32[1,1,32], index: 7, kind: input, shape index: {}]
  %s8 = inlined_call_operand.vmem [shape: f32[32,8], index: 8, kind: input, shape index: {}]
  %s9 = inlined_call_operand.vmem [shape: f32[1,1,8], index: 9, kind: input, shape index: {}]
  %s10 = inlined_call_operand.vmem [shape: f32[3], index: 10, kind: input, shape index: {}]
  %s11 = inlined_call_operand.hbm [shape: f32[2,1,8], index: 11, kind: output, shape index: {}]
  %s12 = sld [smem:[#allocation0]]
  $region81: #{embedding_model_forward.1} parent=0
    _
  %s14 = ssub.s32 1, %s12
  %s15 = scalar_select 0, %s14, %s12
  $region1: #{embedding_model_forward.1} parent=0
    #allocation2 [shape = 'u8[512]{0}', space=smem, size = 0x200, scoped, tag = 'input window, operand 10, single buffered']
    #allocation3 [shape = 's32[2]{0}', space=sflag, size = 0x8, scoped, tag = 'scoped memory for embedding_model_forward.1']
    #allocation4 [shape = 's32[2]{0}', space=sflag, size = 0x8, scoped, tag = 'scoped memory for embedding_model_forward.1']
    #allocation5 [shape = 'u8[1024]{0}', space=vmem, size = 0x400, scoped, tag = 'output window, operand 0']
    %16 = vsyncpa [#allocation4], 0
    %17 = vsyncpa [#allocation3], 0
    %s18 = scalar_lea.sflag [#allocation3], 1
    %19 = vsyncpa %s18, 0
    loop: start=0, step=1, limit=4
    $region2: #{embedding_model_forward.1} parent=1 // loop_pre_header
      _
    $region3: #{embedding_model_forward.1} parent=1 // loop_header
      %s21 = sphi 0, %s25
      %p22 = scmp.ge.s32.totalorder %s21, 4
      %s31 = sphi 0, %s33
      %s34 = sphi 0, %s31
      %s35 = sphi 0, %s34
      %s51 = sphi 0, %s35
      %s55 = sphi 0, %s55
      %s57 = sphi 0, %s55
      %s58 = sphi 0, %s57
      %s72 = sphi 0, %s58
      %s76 = sphi 0, %s76
      %s78 = sphi 0, %s76
      %s79 = sphi 0, %s78
      %s93 = sphi 0, %s79
      %s97 = sphi 0, %s97
      %s99 = sphi 0, %s97
      %s100 = sphi 0, %s99
      %s114 = sphi 0, %s100
      %s118 = sphi 0, %s118
      %s120 = sphi 0, %s118
      %s121 = sphi 0, %s120
      %s135 = sphi 0, %s121
      %s139 = sphi 0, %s139
      %s141 = sphi 0, %s139
      %s142 = sphi 0, %s141
      %s156 = sphi 0, %s142
      %s160 = sphi 0, %s160
      %s162 = sphi 0, %s160
      %s163 = sphi 0, %s162
      %s177 = sphi 0, %s163
      %s181 = sphi 0, %s181
      %s183 = sphi 0, %s181
      %s184 = sphi 0, %s183
      %s198 = sphi 0, %s184
      %s202 = sphi 0, %s202
      %s204 = sphi 0, %s202
      %s205 = sphi 0, %s204
      %s219 = sphi 0, %s205
      %s223 = sphi 0, %s223
      %s225 = sphi 0, %s223
      %s226 = sphi 0, %s225
      %s240 = sphi 0, %s226
      %s244 = sphi 0, %s244
      %s246 = sphi 0, %s244
      %s247 = sphi 0, %s246
      %s261 = sphi 0, %s247
      %s267 = sphi 0, %s269
      %s270 = sphi 0, %s267
      %s271 = sphi 0, %s270
      %s287 = sphi 0, %s271
    $region4: #{embedding_model_forward.1} parent=1 // loop_header_branch
      %24 = sbr.rel (%p22) target = $region8
    $region5: #{embedding_model_forward.1} parent=1 // loop_body
      %s26 = ssub.s32 %s21, 1
      %s27 = ssub.s32 %s21, 2
      %s28 = sadd.s32 %s21, 1
      %s29 = ssub.s32 %s21, %s28
      %p30 = scmp.eq.s32.totalorder %s29, 0
      %s32 = sadd.s32 %s31, 1
      %s33 = scalar_select %p30, %s31, %s32
      %p36 = pneg %p30
      %p37 = scmp.eq.s32.totalorder %s21, 1
      %p38 = por %p36, %p37
      %p39 = scmp.ne.s32.totalorder %s31, %s34
      %p40 = scmp.eq.s32.totalorder %s21, 0
      %p41 = por %p39, %p40
      %p42 = scmp.ne.s32.totalorder %s31, %s34
      %p43 = scmp.eq.s32.totalorder %s26, 1
      %p44 = por %p42, %p43
      %p45 = scmp.ne.s32.totalorder %s34, %s35
      %p46 = scmp.eq.s32.totalorder %s26, 0
      %p47 = por %p45, %p46
      %p48 = scmp.ne.s32.totalorder %s34, %s35
      %p49 = scmp.eq.s32.totalorder %s27, 1
      %p50 = por %p48, %p49
      %p52 = scmp.ne.s32.totalorder %s35, %s51
      %p53 = scmp.eq.s32.totalorder %s27, 0
      %p54 = por %p52, %p53
      %s56 = sadd.s32 %s55, 1
      %p59 = scmp.eq.s32.totalorder %s21, 1
      %p60 = scmp.ne.s32.totalorder %s55, %s57
      %p61 = scmp.eq.s32.totalorder %s21, 0
      %p62 = por %p60, %p61
      %p63 = scmp.ne.s32.totalorder %s55, %s57
      %p64 = scmp.eq.s32.totalorder %s26, 1
      %p65 = por %p63, %p64
      %p66 = scmp.ne.s32.totalorder %s57, %s58
      %p67 = scmp.eq.s32.totalorder %s26, 0
      %p68 = por %p66, %p67
      %p69 = scmp.ne.s32.totalorder %s57, %s58
      %p70 = scmp.eq.s32.totalorder %s27, 1
      %p71 = por %p69, %p70
      %p73 = scmp.ne.s32.totalorder %s58, %s72
      %p74 = scmp.eq.s32.totalorder %s27, 0
      %p75 = por %p73, %p74
      %s77 = sadd.s32 %s76, 1
      %p80 = scmp.eq.s32.totalorder %s21, 1
      %p81 = scmp.ne.s32.totalorder %s76, %s78
      %p82 = scmp.eq.s32.totalorder %s21, 0
      %p83 = por %p81, %p82
      %p84 = scmp.ne.s32.totalorder %s76, %s78
      %p85 = scmp.eq.s32.totalorder %s26, 1
      %p86 = por %p84, %p85
      %p87 = scmp.ne.s32.totalorder %s78, %s79
      %p88 = scmp.eq.s32.totalorder %s26, 0
      %p89 = por %p87, %p88
      %p90 = scmp.ne.s32.totalorder %s78, %s79
      %p91 = scmp.eq.s32.totalorder %s27, 1
      %p92 = por %p90, %p91
      %p94 = scmp.ne.s32.totalorder %s79, %s93
      %p95 = scmp.eq.s32.totalorder %s27, 0
      %p96 = por %p94, %p95
      %s98 = sadd.s32 %s97, 1
      %p101 = scmp.eq.s32.totalorder %s21, 1
      %p102 = scmp.ne.s32.totalorder %s97, %s99
      %p103 = scmp.eq.s32.totalorder %s21, 0
      %p104 = por %p102, %p103
      %p105 = scmp.ne.s32.totalorder %s97, %s99
      %p106 = scmp.eq.s32.totalorder %s26, 1
      %p107 = por %p105, %p106
      %p108 = scmp.ne.s32.totalorder %s99, %s100
      %p109 = scmp.eq.s32.totalorder %s26, 0
      %p110 = por %p108, %p109
      %p111 = scmp.ne.s32.totalorder %s99, %s100
      %p112 = scmp.eq.s32.totalorder %s27, 1
      %p113 = por %p111, %p112
      %p115 = scmp.ne.s32.totalorder %s100, %s114
      %p116 = scmp.eq.s32.totalorder %s27, 0
      %p117 = por %p115, %p116
      %s119 = sadd.s32 %s118, 1
      %p122 = scmp.eq.s32.totalorder %s21, 1
      %p123 = scmp.ne.s32.totalorder %s118, %s120
      %p124 = scmp.eq.s32.totalorder %s21, 0
      %p125 = por %p123, %p124
      %p126 = scmp.ne.s32.totalorder %s118, %s120
      %p127 = scmp.eq.s32.totalorder %s26, 1
      %p128 = por %p126, %p127
      %p129 = scmp.ne.s32.totalorder %s120, %s121
      %p130 = scmp.eq.s32.totalorder %s26, 0
      %p131 = por %p129, %p130
      %p132 = scmp.ne.s32.totalorder %s120, %s121
      %p133 = scmp.eq.s32.totalorder %s27, 1
      %p134 = por %p132, %p133
      %p136 = scmp.ne.s32.totalorder %s121, %s135
      %p137 = scmp.eq.s32.totalorder %s27, 0
      %p138 = por %p136, %p137
      %s140 = sadd.s32 %s139, 1
      %p143 = scmp.eq.s32.totalorder %s21, 1
      %p144 = scmp.ne.s32.totalorder %s139, %s141
      %p145 = scmp.eq.s32.totalorder %s21, 0
      %p146 = por %p144, %p145
      %p147 = scmp.ne.s32.totalorder %s139, %s141
      %p148 = scmp.eq.s32.totalorder %s26, 1
      %p149 = por %p147, %p148
      %p150 = scmp.ne.s32.totalorder %s141, %s142
      %p151 = scmp.eq.s32.totalorder %s26, 0
      %p152 = por %p150, %p151
      %p153 = scmp.ne.s32.totalorder %s141, %s142
      %p154 = scmp.eq.s32.totalorder %s27, 1
      %p155 = por %p153, %p154
      %p157 = scmp.ne.s32.totalorder %s142, %s156
      %p158 = scmp.eq.s32.totalorder %s27, 0
      %p159 = por %p157, %p158
      %s161 = sadd.s32 %s160, 1
      %p164 = scmp.eq.s32.totalorder %s21, 1
      %p165 = scmp.ne.s32.totalorder %s160, %s162
      %p166 = scmp.eq.s32.totalorder %s21, 0
      %p167 = por %p165, %p166
      %p168 = scmp.ne.s32.totalorder %s160, %s162
      %p169 = scmp.eq.s32.totalorder %s26, 1
      %p170 = por %p168, %p169
      %p171 = scmp.ne.s32.totalorder %s162, %s163
      %p172 = scmp.eq.s32.totalorder %s26, 0
      %p173 = por %p171, %p172
      %p174 = scmp.ne.s32.totalorder %s162, %s163
      %p175 = scmp.eq.s32.totalorder %s27, 1
      %p176 = por %p174, %p175
      %p178 = scmp.ne.s32.totalorder %s163, %s177
      %p179 = scmp.eq.s32.totalorder %s27, 0
      %p180 = por %p178, %p179
      %s182 = sadd.s32 %s181, 1
      %p185 = scmp.eq.s32.totalorder %s21, 1
      %p186 = scmp.ne.s32.totalorder %s181, %s183
      %p187 = scmp.eq.s32.totalorder %s21, 0
      %p188 = por %p186, %p187
      %p189 = scmp.ne.s32.totalorder %s181, %s183
      %p190 = scmp.eq.s32.totalorder %s26, 1
      %p191 = por %p189, %p190
      %p192 = scmp.ne.s32.totalorder %s183, %s184
      %p193 = scmp.eq.s32.totalorder %s26, 0
      %p194 = por %p192, %p193
      %p195 = scmp.ne.s32.totalorder %s183, %s184
      %p196 = scmp.eq.s32.totalorder %s27, 1
      %p197 = por %p195, %p196
      %p199 = scmp.ne.s32.totalorder %s184, %s198
      %p200 = scmp.eq.s32.totalorder %s27, 0
      %p201 = por %p199, %p200
      %s203 = sadd.s32 %s202, 1
      %p206 = scmp.eq.s32.totalorder %s21, 1
      %p207 = scmp.ne.s32.totalorder %s202, %s204
      %p208 = scmp.eq.s32.totalorder %s21, 0
      %p209 = por %p207, %p208
      %p210 = scmp.ne.s32.totalorder %s202, %s204
      %p211 = scmp.eq.s32.totalorder %s26, 1
      %p212 = por %p210, %p211
      %p213 = scmp.ne.s32.totalorder %s204, %s205
      %p214 = scmp.eq.s32.totalorder %s26, 0
      %p215 = por %p213, %p214
      %p216 = scmp.ne.s32.totalorder %s204, %s205
      %p217 = scmp.eq.s32.totalorder %s27, 1
      %p218 = por %p216, %p217
      %p220 = scmp.ne.s32.totalorder %s205, %s219
      %p221 = scmp.eq.s32.totalorder %s27, 0
      %p222 = por %p220, %p221
      %s224 = sadd.s32 %s223, 1
      %p227 = scmp.eq.s32.totalorder %s21, 1
      %p228 = scmp.ne.s32.totalorder %s223, %s225
      %p229 = scmp.eq.s32.totalorder %s21, 0
      %p230 = por %p228, %p229
      %p231 = scmp.ne.s32.totalorder %s223, %s225
      %p232 = scmp.eq.s32.totalorder %s26, 1
      %p233 = por %p231, %p232
      %p234 = scmp.ne.s32.totalorder %s225, %s226
      %p235 = scmp.eq.s32.totalorder %s26, 0
      %p236 = por %p234, %p235
      %p237 = scmp.ne.s32.totalorder %s225, %s226
      %p238 = scmp.eq.s32.totalorder %s27, 1
      %p239 = por %p237, %p238
      %p241 = scmp.ne.s32.totalorder %s226, %s240
      %p242 = scmp.eq.s32.totalorder %s27, 0
      %p243 = por %p241, %p242
      %s245 = sadd.s32 %s244, 1
      %p248 = scmp.eq.s32.totalorder %s21, 1
      %p249 = scmp.ne.s32.totalorder %s244, %s246
      %p250 = scmp.eq.s32.totalorder %s21, 0
      %p251 = por %p249, %p250
      %p252 = scmp.ne.s32.totalorder %s244, %s246
      %p253 = scmp.eq.s32.totalorder %s26, 1
      %p254 = por %p252, %p253
      %p255 = scmp.ne.s32.totalorder %s246, %s247
      %p256 = scmp.eq.s32.totalorder %s26, 0
      %p257 = por %p255, %p256
      %p258 = scmp.ne.s32.totalorder %s246, %s247
      %p259 = scmp.eq.s32.totalorder %s27, 1
      %p260 = por %p258, %p259
      %p262 = scmp.ne.s32.totalorder %s247, %s261
      %p263 = scmp.eq.s32.totalorder %s27, 0
      %p264 = por %p262, %p263
      %s265 = ssub.s32 %s21, %s28
      %p266 = scmp.eq.s32.totalorder %s265, 0
      %s268 = sadd.s32 %s267, 1
      %s269 = scalar_select %p266, %s267, %s268
      %p272 = pneg %p266
      %p273 = scmp.eq.s32.totalorder %s21, 1
      %p274 = por %p272, %p273
      %p275 = scmp.ne.s32.totalorder %s267, %s270
      %p276 = scmp.eq.s32.totalorder %s21, 0
      %p277 = por %p275, %p276
      %p278 = scmp.ne.s32.totalorder %s267, %s270
      %p279 = scmp.eq.s32.totalorder %s26, 1
      %p280 = por %p278, %p279
      %p281 = scmp.ne.s32.totalorder %s270, %s271
      %p282 = scmp.eq.s32.totalorder %s26, 0
      %p283 = por %p281, %p282
      %p284 = scmp.ne.s32.totalorder %s270, %s271
      %p285 = scmp.eq.s32.totalorder %s27, 1
      %p286 = por %p284, %p285
      %p288 = scmp.ne.s32.totalorder %s271, %s287
      %p289 = scmp.eq.s32.totalorder %s27, 0
      %p290 = por %p288, %p289
      %p291 = scmp.le.s32.totalorder 1, %s21
      %p292 = scmp.lt.s32.totalorder %s21, 3
      %p293 = pnand %p291, %p292
      %p294 = pneg %p293
      // Predicated region
      $region9: #{embedding_model_forward.1} parent=5 // pred_check
        _
      $region10: #{embedding_model_forward.1} parent=5 // pred_check_branch
        %296 = sbr.rel (%p293) target = $region12
      $region11: #{embedding_model_forward.1} parent=5 // pred_region
        %s297 = ssub.s32 %s21, 1
        // Predicated region
        $region13: #{embedding_model_forward.1} parent=11 // pred_check
          %p298 = pneg %p68
        $region14: #{embedding_model_forward.1} parent=11 // pred_check_branch
          %300 = sbr.rel (%p298) target = $region16
        $region15: #{embedding_model_forward.1} parent=11 // pred_region
          _
        $region16: #{embedding_model_forward.1} parent=11 // pred_fallthru
          _
        // Predicated region
        $region17: #{embedding_model_forward.1} parent=11 // pred_check
          %p301 = pneg %p89
        $region18: #{embedding_model_forward.1} parent=11 // pred_check_branch
          %303 = sbr.rel (%p301) target = $region20
        $region19: #{embedding_model_forward.1} parent=11 // pred_region
          _
        $region20: #{embedding_model_forward.1} parent=11 // pred_fallthru
          _
        // Predicated region
        $region21: #{embedding_model_forward.1} parent=11 // pred_check
          %p304 = pneg %p110
        $region22: #{embedding_model_forward.1} parent=11 // pred_check_branch
          %306 = sbr.rel (%p304) target = $region24
        $region23: #{embedding_model_forward.1} parent=11 // pred_region
          _
        $region24: #{embedding_model_forward.1} parent=11 // pred_fallthru
          _
        // Predicated region
        $region25: #{embedding_model_forward.1} parent=11 // pred_check
          %p307 = pneg %p131
        $region26: #{embedding_model_forward.1} parent=11 // pred_check_branch
          %309 = sbr.rel (%p307) target = $region28
        $region27: #{embedding_model_forward.1} parent=11 // pred_region
          _
        $region28: #{embedding_model_forward.1} parent=11 // pred_fallthru
          _
        // Predicated region
        $region29: #{embedding_model_forward.1} parent=11 // pred_check
          %p310 = pneg %p152
        $region30: #{embedding_model_forward.1} parent=11 // pred_check_branch
          %312 = sbr.rel (%p310) target = $region32
        $region31: #{embedding_model_forward.1} parent=11 // pred_region
          _
        $region32: #{embedding_model_forward.1} parent=11 // pred_fallthru
          _
        // Predicated region
        $region33: #{embedding_model_forward.1} parent=11 // pred_check
          %p313 = pneg %p173
        $region34: #{embedding_model_forward.1} parent=11 // pred_check_branch
          %315 = sbr.rel (%p313) target = $region36
        $region35: #{embedding_model_forward.1} parent=11 // pred_region
          _
        $region36: #{embedding_model_forward.1} parent=11 // pred_fallthru
          _
        // Predicated region
        $region37: #{embedding_model_forward.1} parent=11 // pred_check
          %p316 = pneg %p194
        $region38: #{embedding_model_forward.1} parent=11 // pred_check_branch
          %318 = sbr.rel (%p316) target = $region40
        $region39: #{embedding_model_forward.1} parent=11 // pred_region
          _
        $region40: #{embedding_model_forward.1} parent=11 // pred_fallthru
          _
        // Predicated region
        $region41: #{embedding_model_forward.1} parent=11 // pred_check
          %p319 = pneg %p215
        $region42: #{embedding_model_forward.1} parent=11 // pred_check_branch
          %321 = sbr.rel (%p319) target = $region44
        $region43: #{embedding_model_forward.1} parent=11 // pred_region
          _
        $region44: #{embedding_model_forward.1} parent=11 // pred_fallthru
          _
        // Predicated region
        $region45: #{embedding_model_forward.1} parent=11 // pred_check
          %p322 = pneg %p236
        $region46: #{embedding_model_forward.1} parent=11 // pred_check_branch
          %324 = sbr.rel (%p322) target = $region48
        $region47: #{embedding_model_forward.1} parent=11 // pred_region
          _
        $region48: #{embedding_model_forward.1} parent=11 // pred_fallthru
          _
        // Predicated region
        $region49: #{embedding_model_forward.1} parent=11 // pred_check
          %p325 = pneg %p257
        $region50: #{embedding_model_forward.1} parent=11 // pred_check_branch
          %327 = sbr.rel (%p325) target = $region52
        $region51: #{embedding_model_forward.1} parent=11 // pred_region
          %329 = vsyncadd [#allocation4], 0
          %s331 = sshll.u32 %s10, 4
          %s332 = int_to_ptr.vmem [resolvable:$true] %s331
          %334 = dma.vmem_to_smem %s332, 16, [#allocation2], [#allocation4]
        $region52: #{embedding_model_forward.1} parent=11 // pred_fallthru
          _
      $region12: #{embedding_model_forward.1} parent=5 // pred_fallthru
        _
      %p335 = scmp.lt.s32.totalorder %s21, 2
      // Predicated region
      $region53: #{embedding_model_forward.1} parent=5 // pred_check
        %p336 = pneg %p335
      $region54: #{embedding_model_forward.1} parent=5 // pred_check_branch
        %338 = sbr.rel (%p336) target = $region56
      $region55: #{embedding_model_forward.1} parent=5 // pred_region
        // Predicated region
        $region57: #{embedding_model_forward.1} parent=55 // pred_check
          %p339 = pneg %p41
        $region58: #{embedding_model_forward.1} parent=55 // pred_check_branch
          %341 = sbr.rel (%p339) target = $region60
        $region59: #{embedding_model_forward.1} parent=55 // pred_region
          %p342 = scmp.lt.s32.totalorder %s21, 1
          %s343 = scalar_select %p342, %s21, 1
          %s344 = smul.addr %s343, 32
          %s345 = smul.addr %s344, 8
          %s346 = scalar_lea.vmem %s0, %s345
        $region60: #{embedding_model_forward.1} parent=55 // pred_fallthru
          _
      $region56: #{embedding_model_forward.1} parent=5 // pred_fallthru
        _
      %p347 = scmp.le.s32.totalorder 1, %s21
      %p348 = scmp.lt.s32.totalorder %s21, 3
      %p349 = pnand %p347, %p348
      %p350 = pneg %p349
      // Predicated region
      $region61: #{embedding_model_forward.1} parent=5 // pred_check
        _
      $region62: #{embedding_model_forward.1} parent=5 // pred_check_branch
        %352 = sbr.rel (%p349) target = $region64
      $region63: #{embedding_model_forward.1} parent=5 // pred_region
        %s353 = ssub.s32 %s21, 1
        // Predicated region
        $region65: #{embedding_model_forward.1} parent=63 // pred_check
          %p354 = pneg %p257
        $region66: #{embedding_model_forward.1} parent=63 // pred_check_branch
          %356 = sbr.rel (%p354) target = $region68
        $region67: #{embedding_model_forward.1} parent=63 // pred_region
          %358 = dma.done [#allocation4], 16
        $region68: #{embedding_model_forward.1} parent=63 // pred_fallthru
          _
        %359 = sfence
        %p360 = scmp.lt.s32.totalorder %s26, 1
        %s361 = scalar_select %p360, %s26, 1
        %s362 = smul.addr %s361, 32
        %s363 = smul.addr %s362, 8
        %s364 = scalar_lea.vmem %s0, %s363
        %p365 = pneg %p47
        %p366 = pneg %p44
        %p367 = pneg %p68
        %p368 = pneg %p65
        %p369 = pneg %p89
        %p370 = pneg %p86
        %p371 = pneg %p110
        %p372 = pneg %p107
        %p373 = pneg %p131
        %p374 = pneg %p128
        %p375 = pneg %p152
        %p376 = pneg %p149
        %p377 = pneg %p173
        %p378 = pneg %p170
        %p379 = pneg %p194
        %p380 = pneg %p191
        %p381 = pneg %p215
        %p382 = pneg %p212
        %p383 = pneg %p236
        %p384 = pneg %p233
        %p385 = pneg %p257
        %p386 = pneg %p254
        %p387 = pneg %p283
        %p388 = pneg %p280
        %s389 = sand.u32 %s270, 1
        %s390 = scalar_lea.sflag [#allocation3], %s389
        %s391 = sand.u32 %s270, 1
        %s392 = scalar_lea.vmem [#allocation5], %s391
        %p393 = scmp.lt.s32.totalorder %s26, 1
        %s394 = scalar_select %p393, %s26, 1
        %s395 = smul.addr %s394, 32
        %s396 = smul.addr %s395, 8
        %s397 = scalar_lea.vmem %s0, %s396
        %v398 = vld [vmem:[%s397] sm:$0xff]
        %v399 = vld [vmem:[%s397 + $0x8] sm:$0xff]
        %v400 = vld [vmem:[%s397 + $0x10] sm:$0xff]
        %v401 = vld [vmem:[%s397 + $0x18] sm:$0xff]
        %v402 = vld [vmem:[%s397 + $0x20] sm:$0xff]
        %v403 = vld [vmem:[%s397 + $0x28] sm:$0xff]
        %v404 = vld [vmem:[%s397 + $0x30] sm:$0xff]
        %v405 = vld [vmem:[%s397 + $0x38] sm:$0xff]
        %v406 = vld [vmem:[%s397 + $0x40] sm:$0xff]
        %v407 = vld [vmem:[%s397 + $0x48] sm:$0xff]
        %v408 = vld [vmem:[%s397 + $0x50] sm:$0xff]
        %v409 = vld [vmem:[%s397 + $0x58] sm:$0xff]
        %v410 = vld [vmem:[%s397 + $0x60] sm:$0xff]
        %v411 = vld [vmem:[%s397 + $0x68] sm:$0xff]
        %v412 = vld [vmem:[%s397 + $0x70] sm:$0xff]
        %v413 = vld [vmem:[%s397 + $0x78] sm:$0xff]
        %v414 = vld [vmem:[%s397 + $0x80] sm:$0xff]
        %v415 = vld [vmem:[%s397 + $0x88] sm:$0xff]
        %v416 = vld [vmem:[%s397 + $0x90] sm:$0xff]
        %v417 = vld [vmem:[%s397 + $0x98] sm:$0xff]
        %v418 = vld [vmem:[%s397 + $0xa0] sm:$0xff]
        %v419 = vld [vmem:[%s397 + $0xa8] sm:$0xff]
        %v420 = vld [vmem:[%s397 + $0xb0] sm:$0xff]
        %v421 = vld [vmem:[%s397 + $0xb8] sm:$0xff]
        %v422 = vld [vmem:[%s397 + $0xc0] sm:$0xff]
        %v423 = vld [vmem:[%s397 + $0xc8] sm:$0xff]
        %v424 = vld [vmem:[%s397 + $0xd0] sm:$0xff]
        %v425 = vld [vmem:[%s397 + $0xd8] sm:$0xff]
        %v426 = vld [vmem:[%s397 + $0xe0] sm:$0xff]
        %v427 = vld [vmem:[%s397 + $0xe8] sm:$0xff]
        %v428 = vld [vmem:[%s397 + $0xf0] sm:$0xff]
        %v429 = vld [vmem:[%s397 + $0xf8] sm:$0xff]
        %v430 = vld [vmem:[%s1] sm:$0x1]
        %v431 = vld [vmem:[%s1 + $0x1] sm:$0x1]
        %v432 = vld [vmem:[%s1 + $0x2] sm:$0x1]
        %v433 = vld [vmem:[%s1 + $0x3] sm:$0x1]
        %v434 = vld [vmem:[%s1 + $0x4] sm:$0x1]
        %v435 = vld [vmem:[%s1 + $0x5] sm:$0x1]
        %v436 = vld [vmem:[%s1 + $0x6] sm:$0x1]
        %v437 = vld [vmem:[%s1 + $0x7] sm:$0x1]
        %v438 = vld [vmem:[%s1 + $0x8] sm:$0x1]
        %v439 = vld [vmem:[%s1 + $0x9] sm:$0x1]
        %v440 = vld [vmem:[%s1 + $0xa] sm:$0x1]
        %v441 = vld [vmem:[%s1 + $0xb] sm:$0x1]
        %v442 = vld [vmem:[%s1 + $0xc] sm:$0x1]
        %v443 = vld [vmem:[%s1 + $0xd] sm:$0x1]
        %v444 = vld [vmem:[%s1 + $0xe] sm:$0x1]
        %v445 = vld [vmem:[%s1 + $0xf] sm:$0x1]
        %v446 = vld [vmem:[%s1 + $0x10] sm:$0x1]
        %v447 = vld [vmem:[%s1 + $0x11] sm:$0x1]
        %v448 = vld [vmem:[%s1 + $0x12] sm:$0x1]
        %v449 = vld [vmem:[%s1 + $0x13] sm:$0x1]
        %v450 = vld [vmem:[%s1 + $0x14] sm:$0x1]
        %v451 = vld [vmem:[%s1 + $0x15] sm:$0x1]
        %v452 = vld [vmem:[%s1 + $0x16] sm:$0x1]
        %v453 = vld [vmem:[%s1 + $0x17] sm:$0x1]
        %v454 = vld [vmem:[%s1 + $0x18] sm:$0x1]
        %v455 = vld [vmem:[%s2] sm:$0x1]
        %v457 = vperm.slane %v455, 0
        %460 = vset.pattern.permute.xlu0 0
        %461 = vperm.xlu0 %460, %v398
        %v462 = vpop.permute.xlu0 %461
        %465 = vset.pattern.permute.xlu0 0
        %466 = vperm.xlu0 %465, %v399
        %v467 = vpop.permute.xlu0 %466
        %470 = vset.pattern.permute.xlu0 0
        %471 = vperm.xlu0 %470, %v400
        %v472 = vpop.permute.xlu0 %471
        %475 = vset.pattern.permute.xlu0 0
        %476 = vperm.xlu0 %475, %v401
        %v477 = vpop.permute.xlu0 %476
        %480 = vset.pattern.permute.xlu0 0
        %481 = vperm.xlu0 %480, %v402
        %v482 = vpop.permute.xlu0 %481
        %485 = vset.pattern.permute.xlu0 0
        %486 = vperm.xlu0 %485, %v403
        %v487 = vpop.permute.xlu0 %486
        %490 = vset.pattern.permute.xlu0 0
        %491 = vperm.xlu0 %490, %v404
        %v492 = vpop.permute.xlu0 %491
        %495 = vset.pattern.permute.xlu0 0
        %496 = vperm.xlu0 %495, %v405
        %v497 = vpop.permute.xlu0 %496
        %500 = vset.pattern.permute.xlu0 0
        %501 = vperm.xlu0 %500, %v406
        %v502 = vpop.permute.xlu0 %501
        %505 = vset.pattern.permute.xlu0 0
        %506 = vperm.xlu0 %505, %v407
        %v507 = vpop.permute.xlu0 %506
        %510 = vset.pattern.permute.xlu0 0
        %511 = vperm.xlu0 %510, %v408
        %v512 = vpop.permute.xlu0 %511
        %515 = vset.pattern.permute.xlu0 0
        %516 = vperm.xlu0 %515, %v409
        %v517 = vpop.permute.xlu0 %516
        %520 = vset.pattern.permute.xlu0 0
        %521 = vperm.xlu0 %520, %v410
        %v522 = vpop.permute.xlu0 %521
        %525 = vset.pattern.permute.xlu0 0
        %526 = vperm.xlu0 %525, %v411
        %v527 = vpop.permute.xlu0 %526
        %530 = vset.pattern.permute.xlu0 0
        %531 = vperm.xlu0 %530, %v412
        %v532 = vpop.permute.xlu0 %531
        %535 = vset.pattern.permute.xlu0 0
        %536 = vperm.xlu0 %535, %v413
        %v537 = vpop.permute.xlu0 %536
        %540 = vset.pattern.permute.xlu0 0
        %541 = vperm.xlu0 %540, %v414
        %v542 = vpop.permute.xlu0 %541
        %545 = vset.pattern.permute.xlu0 0
        %546 = vperm.xlu0 %545, %v415
        %v547 = vpop.permute.xlu0 %546
        %550 = vset.pattern.permute.xlu0 0
        %551 = vperm.xlu0 %550, %v416
        %v552 = vpop.permute.xlu0 %551
        %555 = vset.pattern.permute.xlu0 0
        %556 = vperm.xlu0 %555, %v417
        %v557 = vpop.permute.xlu0 %556
        %560 = vset.pattern.permute.xlu0 0
        %561 = vperm.xlu0 %560, %v418
        %v562 = vpop.permute.xlu0 %561
        %565 = vset.pattern.permute.xlu0 0
        %566 = vperm.xlu0 %565, %v419
        %v567 = vpop.permute.xlu0 %566
        %570 = vset.pattern.permute.xlu0 0
        %571 = vperm.xlu0 %570, %v420
        %v572 = vpop.permute.xlu0 %571
        %575 = vset.pattern.permute.xlu0 0
        %576 = vperm.xlu0 %575, %v421
        %v577 = vpop.permute.xlu0 %576
        %v580 = vperm.slane %v430, 0
        %v582 = vmul.f32 %v462, %v580
        %v583 = vmul.f32 %v467, %v580
        %v584 = vmul.f32 %v472, %v580
        %v585 = vmul.f32 %v477, %v580
        %v586 = vmul.f32 %v482, %v580
        %v587 = vmul.f32 %v487, %v580
        %v588 = vmul.f32 %v492, %v580
        %v589 = vmul.f32 %v497, %v580
        %v590 = vmul.f32 %v502, %v580
        %v591 = vmul.f32 %v507, %v580
        %v592 = vmul.f32 %v512, %v580
        %v593 = vmul.f32 %v517, %v580
        %v594 = vmul.f32 %v522, %v580
        %v595 = vmul.f32 %v527, %v580
        %v596 = vmul.f32 %v532, %v580
        %v597 = vmul.f32 %v537, %v580
        %v598 = vmul.f32 %v542, %v580
        %v599 = vmul.f32 %v547, %v580
        %v600 = vmul.f32 %v552, %v580
        %v601 = vmul.f32 %v557, %v580
        %v602 = vmul.f32 %v562, %v580
        %v603 = vmul.f32 %v567, %v580
        %v604 = vmul.f32 %v572, %v580
        %v605 = vmul.f32 %v577, %v580
        %v606 = vadd.f32 %v457, %v582
        %v607 = vadd.f32 %v457, %v583
        %v608 = vadd.f32 %v457, %v584
        %v609 = vadd.f32 %v457, %v585
        %v610 = vadd.f32 %v457, %v586
        %v611 = vadd.f32 %v457, %v587
        %v612 = vadd.f32 %v457, %v588
        %v613 = vadd.f32 %v457, %v589
        %v614 = vadd.f32 %v457, %v590
        %v615 = vadd.f32 %v457, %v591
        %v616 = vadd.f32 %v457, %v592
        %v617 = vadd.f32 %v457, %v593
        %v618 = vadd.f32 %v457, %v594
        %v619 = vadd.f32 %v457, %v595
        %v620 = vadd.f32 %v457, %v596
        %v621 = vadd.f32 %v457, %v597
        %v622 = vadd.f32 %v457, %v598
        %v623 = vadd.f32 %v457, %v599
        %v624 = vadd.f32 %v457, %v600
        %v625 = vadd.f32 %v457, %v601
        %v626 = vadd.f32 %v457, %v602
        %v627 = vadd.f32 %v457, %v603
        %v628 = vadd.f32 %v457, %v604
        %v629 = vadd.f32 %v457, %v605
        %v631 = vperm.slane %v431, 0
        %v633 = vmul.f32 %v462, %v631
        %v634 = vmul.f32 %v467, %v631
        %v635 = vmul.f32 %v472, %v631
        %v636 = vmul.f32 %v477, %v631
        %v637 = vmul.f32 %v482, %v631
        %v638 = vmul.f32 %v487, %v631
        %v639 = vmul.f32 %v492, %v631
        %v640 = vmul.f32 %v497, %v631
        %v641 = vmul.f32 %v502, %v631
        %v642 = vmul.f32 %v507, %v631
        %v643 = vmul.f32 %v512, %v631
        %v644 = vmul.f32 %v517, %v631
        %v645 = vmul.f32 %v522, %v631
        %v646 = vmul.f32 %v527, %v631
        %v647 = vmul.f32 %v532, %v631
        %v648 = vmul.f32 %v537, %v631
        %v649 = vmul.f32 %v542, %v631
        %v650 = vmul.f32 %v547, %v631
        %v651 = vmul.f32 %v552, %v631
        %v652 = vmul.f32 %v557, %v631
        %v653 = vmul.f32 %v562, %v631
        %v654 = vmul.f32 %v567, %v631
        %v655 = vmul.f32 %v572, %v631
        %v656 = vmul.f32 %v577, %v631
        %vm681 = vcmask 1046528
        %v682 = vrot.slane %v633, 1
        %v683 = vrot.slane %v634, 1
        %v684 = vsel %vm681, %v682, %v683
        %v685 = vrot.slane %v635, 1
        %v686 = vrot.slane %v636, 1
        %v687 = vsel %vm681, %v685, %v686
        %v688 = vrot.slane %v637, 1
        %v689 = vrot.slane %v638, 1
        %v690 = vsel %vm681, %v688, %v689
        %v691 = vrot.slane %v639, 1
        %v692 = vrot.slane %v640, 1
        %v693 = vsel %vm681, %v691, %v692
        %v694 = vrot.slane %v641, 1
        %v695 = vrot.slane %v642, 1
        %v696 = vsel %vm681, %v694, %v695
        %v697 = vrot.slane %v643, 1
        %v698 = vrot.slane %v644, 1
        %v699 = vsel %vm681, %v697, %v698
        %v700 = vrot.slane %v645, 1
        %v701 = vrot.slane %v646, 1
        %v702 = vsel %vm681, %v700, %v701
        %v703 = vrot.slane %v647, 1
        %v704 = vrot.slane %v648, 1
        %v705 = vsel %vm681, %v703, %v704
        %v706 = vrot.slane %v649, 1
        %v707 = vrot.slane %v650, 1
        %v708 = vsel %vm681, %v706, %v707
        %v709 = vrot.slane %v651, 1
        %v710 = vrot.slane %v652, 1
        %v711 = vsel %vm681, %v709, %v710
        %v712 = vrot.slane %v653, 1
        %v713 = vrot.slane %v654, 1
        %v714 = vsel %vm681, %v712, %v713
        %v715 = vrot.slane %v655, 1
        %v716 = vrot.slane %v656, 1
        %v717 = vsel %vm681, %v715, %v716
        %v742 = vadd.f32 %v606, %v684
        %v743 = vadd.f32 %v607, %v683
        %v744 = vadd.f32 %v608, %v687
        %v745 = vadd.f32 %v609, %v686
        %v746 = vadd.f32 %v610, %v690
        %v747 = vadd.f32 %v611, %v689
        %v748 = vadd.f32 %v612, %v693
        %v749 = vadd.f32 %v613, %v692
        %v750 = vadd.f32 %v614, %v696
        %v751 = vadd.f32 %v615, %v695
        %v752 = vadd.f32 %v616, %v699
        %v753 = vadd.f32 %v617, %v698
        %v754 = vadd.f32 %v618, %v702
        %v755 = vadd.f32 %v619, %v701
        %v756 = vadd.f32 %v620, %v705
        %v757 = vadd.f32 %v621, %v704
        %v758 = vadd.f32 %v622, %v708
        %v759 = vadd.f32 %v623, %v707
        %v760 = vadd.f32 %v624, %v711
        %v761 = vadd.f32 %v625, %v710
        %v762 = vadd.f32 %v626, %v714
        %v763 = vadd.f32 %v627, %v713
        %v764 = vadd.f32 %v628, %v717
        %v765 = vadd.f32 %v629, %v716
        %v767 = vperm.slane %v432, 0
        %v769 = vmul.f32 %v462, %v767
        %v770 = vmul.f32 %v467, %v767
        %v771 = vmul.f32 %v472, %v767
        %v772 = vmul.f32 %v477, %v767
        %v773 = vmul.f32 %v482, %v767
        %v774 = vmul.f32 %v487, %v767
        %v775 = vmul.f32 %v492, %v767
        %v776 = vmul.f32 %v497, %v767
        %v777 = vmul.f32 %v502, %v767
        %v778 = vmul.f32 %v507, %v767
        %v779 = vmul.f32 %v512, %v767
        %v780 = vmul.f32 %v517, %v767
        %v781 = vmul.f32 %v522, %v767
        %v782 = vmul.f32 %v527, %v767
        %v783 = vmul.f32 %v532, %v767
        %v784 = vmul.f32 %v537, %v767
        %v785 = vmul.f32 %v542, %v767
        %v786 = vmul.f32 %v547, %v767
        %v787 = vmul.f32 %v552, %v767
        %v788 = vmul.f32 %v557, %v767
        %v789 = vmul.f32 %v562, %v767
        %v790 = vmul.f32 %v567, %v767
        %v791 = vmul.f32 %v572, %v767
        %v792 = vmul.f32 %v577, %v767
        %vm817 = vcmask 1045504
        %v818 = vrot.slane %v769, 2
        %v819 = vrot.slane %v770, 2
        %v820 = vsel %vm817, %v818, %v819
        %v821 = vrot.slane %v771, 2
        %v822 = vrot.slane %v772, 2
        %v823 = vsel %vm817, %v821, %v822
        %v824 = vrot.slane %v773, 2
        %v825 = vrot.slane %v774, 2
        %v826 = vsel %vm817, %v824, %v825
        %v827 = vrot.slane %v775, 2
        %v828 = vrot.slane %v776, 2
        %v829 = vsel %vm817, %v827, %v828
        %v830 = vrot.slane %v777, 2
        %v831 = vrot.slane %v778, 2
        %v832 = vsel %vm817, %v830, %v831
        %v833 = vrot.slane %v779, 2
        %v834 = vrot.slane %v780, 2
        %v835 = vsel %vm817, %v833, %v834
        %v836 = vrot.slane %v781, 2
        %v837 = vrot.slane %v782, 2
        %v838 = vsel %vm817, %v836, %v837
        %v839 = vrot.slane %v783, 2
        %v840 = vrot.slane %v784, 2
        %v841 = vsel %vm817, %v839, %v840
        %v842 = vrot.slane %v785, 2
        %v843 = vrot.slane %v786, 2
        %v844 = vsel %vm817, %v842, %v843
        %v845 = vrot.slane %v787, 2
        %v846 = vrot.slane %v788, 2
        %v847 = vsel %vm817, %v845, %v846
        %v848 = vrot.slane %v789, 2
        %v849 = vrot.slane %v790, 2
        %v850 = vsel %vm817, %v848, %v849
        %v851 = vrot.slane %v791, 2
        %v852 = vrot.slane %v792, 2
        %v853 = vsel %vm817, %v851, %v852
        %v878 = vadd.f32 %v742, %v820
        %v879 = vadd.f32 %v743, %v819
        %v880 = vadd.f32 %v744, %v823
        %v881 = vadd.f32 %v745, %v822
        %v882 = vadd.f32 %v746, %v826
        %v883 = vadd.f32 %v747, %v825
        %v884 = vadd.f32 %v748, %v829
        %v885 = vadd.f32 %v749, %v828
        %v886 = vadd.f32 %v750, %v832
        %v887 = vadd.f32 %v751, %v831
        %v888 = vadd.f32 %v752, %v835
        %v889 = vadd.f32 %v753, %v834
        %v890 = vadd.f32 %v754, %v838
        %v891 = vadd.f32 %v755, %v837
        %v892 = vadd.f32 %v756, %v841
        %v893 = vadd.f32 %v757, %v840
        %v894 = vadd.f32 %v758, %v844
        %v895 = vadd.f32 %v759, %v843
        %v896 = vadd.f32 %v760, %v847
        %v897 = vadd.f32 %v761, %v846
        %v898 = vadd.f32 %v762, %v850
        %v899 = vadd.f32 %v763, %v849
        %v900 = vadd.f32 %v764, %v853
        %v901 = vadd.f32 %v765, %v852
        %v903 = vperm.slane %v433, 0
        %v905 = vmul.f32 %v462, %v903
        %v906 = vmul.f32 %v467, %v903
        %v907 = vmul.f32 %v472, %v903
        %v908 = vmul.f32 %v477, %v903
        %v909 = vmul.f32 %v482, %v903
        %v910 = vmul.f32 %v487, %v903
        %v911 = vmul.f32 %v492, %v903
        %v912 = vmul.f32 %v497, %v903
        %v913 = vmul.f32 %v502, %v903
        %v914 = vmul.f32 %v507, %v903
        %v915 = vmul.f32 %v512, %v903
        %v916 = vmul.f32 %v517, %v903
        %v917 = vmul.f32 %v522, %v903
        %v918 = vmul.f32 %v527, %v903
        %v919 = vmul.f32 %v532, %v903
        %v920 = vmul.f32 %v537, %v903
        %v921 = vmul.f32 %v542, %v903
        %v922 = vmul.f32 %v547, %v903
        %v923 = vmul.f32 %v552, %v903
        %v924 = vmul.f32 %v557, %v903
        %v925 = vmul.f32 %v562, %v903
        %v926 = vmul.f32 %v567, %v903
        %v927 = vmul.f32 %v572, %v903
        %v928 = vmul.f32 %v577, %v903
        %vm953 = vcmask 1044480
        %v954 = vrot.slane %v905, 3
        %v955 = vrot.slane %v906, 3
        %v956 = vsel %vm953, %v954, %v955
        %v957 = vrot.slane %v907, 3
        %v958 = vrot.slane %v908, 3
        %v959 = vsel %vm953, %v957, %v958
        %v960 = vrot.slane %v909, 3
        %v961 = vrot.slane %v910, 3
        %v962 = vsel %vm953, %v960, %v961
        %v963 = vrot.slane %v911, 3
        %v964 = vrot.slane %v912, 3
        %v965 = vsel %vm953, %v963, %v964
        %v966 = vrot.slane %v913, 3
        %v967 = vrot.slane %v914, 3
        %v968 = vsel %vm953, %v966, %v967
        %v969 = vrot.slane %v915, 3
        %v970 = vrot.slane %v916, 3
        %v971 = vsel %vm953, %v969, %v970
        %v972 = vrot.slane %v917, 3
        %v973 = vrot.slane %v918, 3
        %v974 = vsel %vm953, %v972, %v973
        %v975 = vrot.slane %v919, 3
        %v976 = vrot.slane %v920, 3
        %v977 = vsel %vm953, %v975, %v976
        %v978 = vrot.slane %v921, 3
        %v979 = vrot.slane %v922, 3
        %v980 = vsel %vm953, %v978, %v979
        %v981 = vrot.slane %v923, 3
        %v982 = vrot.slane %v924, 3
        %v983 = vsel %vm953, %v981, %v982
        %v984 = vrot.slane %v925, 3
        %v985 = vrot.slane %v926, 3
        %v986 = vsel %vm953, %v984, %v985
        %v987 = vrot.slane %v927, 3
        %v988 = vrot.slane %v928, 3
        %v989 = vsel %vm953, %v987, %v988
        %v1014 = vadd.f32 %v878, %v956
        %v1015 = vadd.f32 %v879, %v955
        %v1016 = vadd.f32 %v880, %v959
        %v1017 = vadd.f32 %v881, %v958
        %v1018 = vadd.f32 %v882, %v962
        %v1019 = vadd.f32 %v883, %v961
        %v1020 = vadd.f32 %v884, %v965
        %v1021 = vadd.f32 %v885, %v964
        %v1022 = vadd.f32 %v886, %v968
        %v1023 = vadd.f32 %v887, %v967
        %v1024 = vadd.f32 %v888, %v971
        %v1025 = vadd.f32 %v889, %v970
        %v1026 = vadd.f32 %v890, %v974
        %v1027 = vadd.f32 %v891, %v973
        %v1028 = vadd.f32 %v892, %v977
        %v1029 = vadd.f32 %v893, %v976
        %v1030 = vadd.f32 %v894, %v980
        %v1031 = vadd.f32 %v895, %v979
        %v1032 = vadd.f32 %v896, %v983
        %v1033 = vadd.f32 %v897, %v982
        %v1034 = vadd.f32 %v898, %v986
        %v1035 = vadd.f32 %v899, %v985
        %v1036 = vadd.f32 %v900, %v989
        %v1037 = vadd.f32 %v901, %v988
        %v1039 = vperm.slane %v434, 0
        %v1041 = vmul.f32 %v462, %v1039
        %v1042 = vmul.f32 %v467, %v1039
        %v1043 = vmul.f32 %v472, %v1039
        %v1044 = vmul.f32 %v477, %v1039
        %v1045 = vmul.f32 %v482, %v1039
        %v1046 = vmul.f32 %v487, %v1039
        %v1047 = vmul.f32 %v492, %v1039
        %v1048 = vmul.f32 %v497, %v1039
        %v1049 = vmul.f32 %v502, %v1039
        %v1050 = vmul.f32 %v507, %v1039
        %v1051 = vmul.f32 %v512, %v1039
        %v1052 = vmul.f32 %v517, %v1039
        %v1053 = vmul.f32 %v522, %v1039
        %v1054 = vmul.f32 %v527, %v1039
        %v1055 = vmul.f32 %v532, %v1039
        %v1056 = vmul.f32 %v537, %v1039
        %v1057 = vmul.f32 %v542, %v1039
        %v1058 = vmul.f32 %v547, %v1039
        %v1059 = vmul.f32 %v552, %v1039
        %v1060 = vmul.f32 %v557, %v1039
        %v1061 = vmul.f32 %v562, %v1039
        %v1062 = vmul.f32 %v567, %v1039
        %v1063 = vmul.f32 %v572, %v1039
        %v1064 = vmul.f32 %v577, %v1039
        %vm1089 = vcmask 1043456
        %v1090 = vrot.slane %v1041, 4
        %v1091 = vrot.slane %v1042, 4
        %v1092 = vsel %vm1089, %v1090, %v1091
        %v1093 = vrot.slane %v1043, 4
        %v1094 = vrot.slane %v1044, 4
        %v1095 = vsel %vm1089, %v1093, %v1094
        %v1096 = vrot.slane %v1045, 4
        %v1097 = vrot.slane %v1046, 4
        %v1098 = vsel %vm1089, %v1096, %v1097
        %v1099 = vrot.slane %v1047, 4
        %v1100 = vrot.slane %v1048, 4
        %v1101 = vsel %vm1089, %v1099, %v1100
        %v1102 = vrot.slane %v1049, 4
        %v1103 = vrot.slane %v1050, 4
        %v1104 = vsel %vm1089, %v1102, %v1103
        %v1105 = vrot.slane %v1051, 4
        %v1106 = vrot.slane %v1052, 4
        %v1107 = vsel %vm1089, %v1105, %v1106
        %v1108 = vrot.slane %v1053, 4
        %v1109 = vrot.slane %v1054, 4
        %v1110 = vsel %vm1089, %v1108, %v1109
        %v1111 = vrot.slane %v1055, 4
        %v1112 = vrot.slane %v1056, 4
        %v1113 = vsel %vm1089, %v1111, %v1112
        %v1114 = vrot.slane %v1057, 4
        %v1115 = vrot.slane %v1058, 4
        %v1116 = vsel %vm1089, %v1114, %v1115
        %v1117 = vrot.slane %v1059, 4
        %v1118 = vrot.slane %v1060, 4
        %v1119 = vsel %vm1089, %v1117, %v1118
        %v1120 = vrot.slane %v1061, 4
        %v1121 = vrot.slane %v1062, 4
        %v1122 = vsel %vm1089, %v1120, %v1121
        %v1123 = vrot.slane %v1063, 4
        %v1124 = vrot.slane %v1064, 4
        %v1125 = vsel %vm1089, %v1123, %v1124
        %v1150 = vadd.f32 %v1014, %v1092
        %v1151 = vadd.f32 %v1015, %v1091
        %v1152 = vadd.f32 %v1016, %v1095
        %v1153 = vadd.f32 %v1017, %v1094
        %v1154 = vadd.f32 %v1018, %v1098
        %v1155 = vadd.f32 %v1019, %v1097
        %v1156 = vadd.f32 %v1020, %v1101
        %v1157 = vadd.f32 %v1021, %v1100
        %v1158 = vadd.f32 %v1022, %v1104
        %v1159 = vadd.f32 %v1023, %v1103
        %v1160 = vadd.f32 %v1024, %v1107
        %v1161 = vadd.f32 %v1025, %v1106
        %v1162 = vadd.f32 %v1026, %v1110
        %v1163 = vadd.f32 %v1027, %v1109
        %v1164 = vadd.f32 %v1028, %v1113
        %v1165 = vadd.f32 %v1029, %v1112
        %v1166 = vadd.f32 %v1030, %v1116
        %v1167 = vadd.f32 %v1031, %v1115
        %v1168 = vadd.f32 %v1032, %v1119
        %v1169 = vadd.f32 %v1033, %v1118
        %v1170 = vadd.f32 %v1034, %v1122
        %v1171 = vadd.f32 %v1035, %v1121
        %v1172 = vadd.f32 %v1036, %v1125
        %v1173 = vadd.f32 %v1037, %v1124
        %1175 = vset.pattern.permute.xlu0 0
        %1176 = vperm.xlu0 %1175, %v422
        %v1177 = vpop.permute.xlu0 %1176
        %1180 = vset.pattern.permute.xlu0 0
        %1181 = vperm.xlu0 %1180, %v423
        %v1182 = vpop.permute.xlu0 %1181
        %v1185 = vperm.slane %v435, 0
        %v1187 = vmul.f32 %v472, %v1185
        %v1188 = vmul.f32 %v477, %v1185
        %v1189 = vmul.f32 %v482, %v1185
        %v1190 = vmul.f32 %v487, %v1185
        %v1191 = vmul.f32 %v492, %v1185
        %v1192 = vmul.f32 %v497, %v1185
        %v1193 = vmul.f32 %v502, %v1185
        %v1194 = vmul.f32 %v507, %v1185
        %v1195 = vmul.f32 %v512, %v1185
        %v1196 = vmul.f32 %v517, %v1185
        %v1197 = vmul.f32 %v522, %v1185
        %v1198 = vmul.f32 %v527, %v1185
        %v1199 = vmul.f32 %v532, %v1185
        %v1200 = vmul.f32 %v537, %v1185
        %v1201 = vmul.f32 %v542, %v1185
        %v1202 = vmul.f32 %v547, %v1185
        %v1203 = vmul.f32 %v552, %v1185
        %v1204 = vmul.f32 %v557, %v1185
        %v1205 = vmul.f32 %v562, %v1185
        %v1206 = vmul.f32 %v567, %v1185
        %v1207 = vmul.f32 %v572, %v1185
        %v1208 = vmul.f32 %v577, %v1185
        %v1209 = vmul.f32 %v1177, %v1185
        %v1210 = vmul.f32 %v1182, %v1185
        %v1211 = vadd.f32 %v1150, %v1187
        %v1212 = vadd.f32 %v1151, %v1188
        %v1213 = vadd.f32 %v1152, %v1189
        %v1214 = vadd.f32 %v1153, %v1190
        %v1215 = vadd.f32 %v1154, %v1191
        %v1216 = vadd.f32 %v1155, %v1192
        %v1217 = vadd.f32 %v1156, %v1193
        %v1218 = vadd.f32 %v1157, %v1194
        %v1219 = vadd.f32 %v1158, %v1195
        %v1220 = vadd.f32 %v1159, %v1196
        %v1221 = vadd.f32 %v1160, %v1197
        %v1222 = vadd.f32 %v1161, %v1198
        %v1223 = vadd.f32 %v1162, %v1199
        %v1224 = vadd.f32 %v1163, %v1200
        %v1225 = vadd.f32 %v1164, %v1201
        %v1226 = vadd.f32 %v1165, %v1202
        %v1227 = vadd.f32 %v1166, %v1203
        %v1228 = vadd.f32 %v1167, %v1204
        %v1229 = vadd.f32 %v1168, %v1205
        %v1230 = vadd.f32 %v1169, %v1206
        %v1231 = vadd.f32 %v1170, %v1207
        %v1232 = vadd.f32 %v1171, %v1208
        %v1233 = vadd.f32 %v1172, %v1209
        %v1234 = vadd.f32 %v1173, %v1210
        %v1236 = vperm.slane %v436, 0
        %v1238 = vmul.f32 %v472, %v1236
        %v1239 = vmul.f32 %v477, %v1236
        %v1240 = vmul.f32 %v482, %v1236
        %v1241 = vmul.f32 %v487, %v1236
        %v1242 = vmul.f32 %v492, %v1236
        %v1243 = vmul.f32 %v497, %v1236
        %v1244 = vmul.f32 %v502, %v1236
        %v1245 = vmul.f32 %v507, %v1236
        %v1246 = vmul.f32 %v512, %v1236
        %v1247 = vmul.f32 %v517, %v1236
        %v1248 = vmul.f32 %v522, %v1236
        %v1249 = vmul.f32 %v527, %v1236
        %v1250 = vmul.f32 %v532, %v1236
        %v1251 = vmul.f32 %v537, %v1236
        %v1252 = vmul.f32 %v542, %v1236
        %v1253 = vmul.f32 %v547, %v1236
        %v1254 = vmul.f32 %v552, %v1236
        %v1255 = vmul.f32 %v557, %v1236
        %v1256 = vmul.f32 %v562, %v1236
        %v1257 = vmul.f32 %v567, %v1236
        %v1258 = vmul.f32 %v572, %v1236
        %v1259 = vmul.f32 %v577, %v1236
        %v1260 = vmul.f32 %v1177, %v1236
        %v1261 = vmul.f32 %v1182, %v1236
        %v1286 = vrot.slane %v1238, 1
        %v1287 = vrot.slane %v1239, 1
        %v1288 = vsel %vm681, %v1286, %v1287
        %v1289 = vrot.slane %v1240, 1
        %v1290 = vrot.slane %v1241, 1
        %v1291 = vsel %vm681, %v1289, %v1290
        %v1292 = vrot.slane %v1242, 1
        %v1293 = vrot.slane %v1243, 1
        %v1294 = vsel %vm681, %v1292, %v1293
        %v1295 = vrot.slane %v1244, 1
        %v1296 = vrot.slane %v1245, 1
        %v1297 = vsel %vm681, %v1295, %v1296
        %v1298 = vrot.slane %v1246, 1
        %v1299 = vrot.slane %v1247, 1
        %v1300 = vsel %vm681, %v1298, %v1299
        %v1301 = vrot.slane %v1248, 1
        %v1302 = vrot.slane %v1249, 1
        %v1303 = vsel %vm681, %v1301, %v1302
        %v1304 = vrot.slane %v1250, 1
        %v1305 = vrot.slane %v1251, 1
        %v1306 = vsel %vm681, %v1304, %v1305
        %v1307 = vrot.slane %v1252, 1
        %v1308 = vrot.slane %v1253, 1
        %v1309 = vsel %vm681, %v1307, %v1308
        %v1310 = vrot.slane %v1254, 1
        %v1311 = vrot.slane %v1255, 1
        %v1312 = vsel %vm681, %v1310, %v1311
        %v1313 = vrot.slane %v1256, 1
        %v1314 = vrot.slane %v1257, 1
        %v1315 = vsel %vm681, %v1313, %v1314
        %v1316 = vrot.slane %v1258, 1
        %v1317 = vrot.slane %v1259, 1
        %v1318 = vsel %vm681, %v1316, %v1317
        %v1319 = vrot.slane %v1260, 1
        %v1320 = vrot.slane %v1261, 1
        %v1321 = vsel %vm681, %v1319, %v1320
        %v1346 = vadd.f32 %v1211, %v1288
        %v1347 = vadd.f32 %v1212, %v1287
        %v1348 = vadd.f32 %v1213, %v1291
        %v1349 = vadd.f32 %v1214, %v1290
        %v1350 = vadd.f32 %v1215, %v1294
        %v1351 = vadd.f32 %v1216, %v1293
        %v1352 = vadd.f32 %v1217, %v1297
        %v1353 = vadd.f32 %v1218, %v1296
        %v1354 = vadd.f32 %v1219, %v1300
        %v1355 = vadd.f32 %v1220, %v1299
        %v1356 = vadd.f32 %v1221, %v1303
        %v1357 = vadd.f32 %v1222, %v1302
        %v1358 = vadd.f32 %v1223, %v1306
        %v1359 = vadd.f32 %v1224, %v1305
        %v1360 = vadd.f32 %v1225, %v1309
        %v1361 = vadd.f32 %v1226, %v1308
        %v1362 = vadd.f32 %v1227, %v1312
        %v1363 = vadd.f32 %v1228, %v1311
        %v1364 = vadd.f32 %v1229, %v1315
        %v1365 = vadd.f32 %v1230, %v1314
        %v1366 = vadd.f32 %v1231, %v1318
        %v1367 = vadd.f32 %v1232, %v1317
        %v1368 = vadd.f32 %v1233, %v1321
        %v1369 = vadd.f32 %v1234, %v1320
        %v1371 = vperm.slane %v437, 0
        %v1373 = vmul.f32 %v472, %v1371
        %v1374 = vmul.f32 %v477, %v1371
        %v1375 = vmul.f32 %v482, %v1371
        %v1376 = vmul.f32 %v487, %v1371
        %v1377 = vmul.f32 %v492, %v1371
        %v1378 = vmul.f32 %v497, %v1371
        %v1379 = vmul.f32 %v502, %v1371
        %v1380 = vmul.f32 %v507, %v1371
        %v1381 = vmul.f32 %v512, %v1371
        %v1382 = vmul.f32 %v517, %v1371
        %v1383 = vmul.f32 %v522, %v1371
        %v1384 = vmul.f32 %v527, %v1371
        %v1385 = vmul.f32 %v532, %v1371
        %v1386 = vmul.f32 %v537, %v1371
        %v1387 = vmul.f32 %v542, %v1371
        %v1388 = vmul.f32 %v547, %v1371
        %v1389 = vmul.f32 %v552, %v1371
        %v1390 = vmul.f32 %v557, %v1371
        %v1391 = vmul.f32 %v562, %v1371
        %v1392 = vmul.f32 %v567, %v1371
        %v1393 = vmul.f32 %v572, %v1371
        %v1394 = vmul.f32 %v577, %v1371
        %v1395 = vmul.f32 %v1177, %v1371
        %v1396 = vmul.f32 %v1182, %v1371
        %v1421 = vrot.slane %v1373, 2
        %v1422 = vrot.slane %v1374, 2
        %v1423 = vsel %vm817, %v1421, %v1422
        %v1424 = vrot.slane %v1375, 2
        %v1425 = vrot.slane %v1376, 2
        %v1426 = vsel %vm817, %v1424, %v1425
        %v1427 = vrot.slane %v1377, 2
        %v1428 = vrot.slane %v1378, 2
        %v1429 = vsel %vm817, %v1427, %v1428
        %v1430 = vrot.slane %v1379, 2
        %v1431 = vrot.slane %v1380, 2
        %v1432 = vsel %vm817, %v1430, %v1431
        %v1433 = vrot.slane %v1381, 2
        %v1434 = vrot.slane %v1382, 2
        %v1435 = vsel %vm817, %v1433, %v1434
        %v1436 = vrot.slane %v1383, 2
        %v1437 = vrot.slane %v1384, 2
        %v1438 = vsel %vm817, %v1436, %v1437
        %v1439 = vrot.slane %v1385, 2
        %v1440 = vrot.slane %v1386, 2
        %v1441 = vsel %vm817, %v1439, %v1440
        %v1442 = vrot.slane %v1387, 2
        %v1443 = vrot.slane %v1388, 2
        %v1444 = vsel %vm817, %v1442, %v1443
        %v1445 = vrot.slane %v1389, 2
        %v1446 = vrot.slane %v1390, 2
        %v1447 = vsel %vm817, %v1445, %v1446
        %v1448 = vrot.slane %v1391, 2
        %v1449 = vrot.slane %v1392, 2
        %v1450 = vsel %vm817, %v1448, %v1449
        %v1451 = vrot.slane %v1393, 2
        %v1452 = vrot.slane %v1394, 2
        %v1453 = vsel %vm817, %v1451, %v1452
        %v1454 = vrot.slane %v1395, 2
        %v1455 = vrot.slane %v1396, 2
        %v1456 = vsel %vm817, %v1454, %v1455
        %v1481 = vadd.f32 %v1346, %v1423
        %v1482 = vadd.f32 %v1347, %v1422
        %v1483 = vadd.f32 %v1348, %v1426
        %v1484 = vadd.f32 %v1349, %v1425
        %v1485 = vadd.f32 %v1350, %v1429
        %v1486 = vadd.f32 %v1351, %v1428
        %v1487 = vadd.f32 %v1352, %v1432
        %v1488 = vadd.f32 %v1353, %v1431
        %v1489 = vadd.f32 %v1354, %v1435
        %v1490 = vadd.f32 %v1355, %v1434
        %v1491 = vadd.f32 %v1356, %v1438
        %v1492 = vadd.f32 %v1357, %v1437
        %v1493 = vadd.f32 %v1358, %v1441
        %v1494 = vadd.f32 %v1359, %v1440
        %v1495 = vadd.f32 %v1360, %v1444
        %v1496 = vadd.f32 %v1361, %v1443
        %v1497 = vadd.f32 %v1362, %v1447
        %v1498 = vadd.f32 %v1363, %v1446
        %v1499 = vadd.f32 %v1364, %v1450
        %v1500 = vadd.f32 %v1365, %v1449
        %v1501 = vadd.f32 %v1366, %v1453
        %v1502 = vadd.f32 %v1367, %v1452
        %v1503 = vadd.f32 %v1368, %v1456
        %v1504 = vadd.f32 %v1369, %v1455
        %v1506 = vperm.slane %v438, 0
        %v1508 = vmul.f32 %v472, %v1506
        %v1509 = vmul.f32 %v477, %v1506
        %v1510 = vmul.f32 %v482, %v1506
        %v1511 = vmul.f32 %v487, %v1506
        %v1512 = vmul.f32 %v492, %v1506
        %v1513 = vmul.f32 %v497, %v1506
        %v1514 = vmul.f32 %v502, %v1506
        %v1515 = vmul.f32 %v507, %v1506
        %v1516 = vmul.f32 %v512, %v1506
        %v1517 = vmul.f32 %v517, %v1506
        %v1518 = vmul.f32 %v522, %v1506
        %v1519 = vmul.f32 %v527, %v1506
        %v1520 = vmul.f32 %v532, %v1506
        %v1521 = vmul.f32 %v537, %v1506
        %v1522 = vmul.f32 %v542, %v1506
        %v1523 = vmul.f32 %v547, %v1506
        %v1524 = vmul.f32 %v552, %v1506
        %v1525 = vmul.f32 %v557, %v1506
        %v1526 = vmul.f32 %v562, %v1506
        %v1527 = vmul.f32 %v567, %v1506
        %v1528 = vmul.f32 %v572, %v1506
        %v1529 = vmul.f32 %v577, %v1506
        %v1530 = vmul.f32 %v1177, %v1506
        %v1531 = vmul.f32 %v1182, %v1506
        %v1556 = vrot.slane %v1508, 3
        %v1557 = vrot.slane %v1509, 3
        %v1558 = vsel %vm953, %v1556, %v1557
        %v1559 = vrot.slane %v1510, 3
        %v1560 = vrot.slane %v1511, 3
        %v1561 = vsel %vm953, %v1559, %v1560
        %v1562 = vrot.slane %v1512, 3
        %v1563 = vrot.slane %v1513, 3
        %v1564 = vsel %vm953, %v1562, %v1563
        %v1565 = vrot.slane %v1514, 3
        %v1566 = vrot.slane %v1515, 3
        %v1567 = vsel %vm953, %v1565, %v1566
        %v1568 = vrot.slane %v1516, 3
        %v1569 = vrot.slane %v1517, 3
        %v1570 = vsel %vm953, %v1568, %v1569
        %v1571 = vrot.slane %v1518, 3
        %v1572 = vrot.slane %v1519, 3
        %v1573 = vsel %vm953, %v1571, %v1572
        %v1574 = vrot.slane %v1520, 3
        %v1575 = vrot.slane %v1521, 3
        %v1576 = vsel %vm953, %v1574, %v1575
        %v1577 = vrot.slane %v1522, 3
        %v1578 = vrot.slane %v1523, 3
        %v1579 = vsel %vm953, %v1577, %v1578
        %v1580 = vrot.slane %v1524, 3
        %v1581 = vrot.slane %v1525, 3
        %v1582 = vsel %vm953, %v1580, %v1581
        %v1583 = vrot.slane %v1526, 3
        %v1584 = vrot.slane %v1527, 3
        %v1585 = vsel %vm953, %v1583, %v1584
        %v1586 = vrot.slane %v1528, 3
        %v1587 = vrot.slane %v1529, 3
        %v1588 = vsel %vm953, %v1586, %v1587
        %v1589 = vrot.slane %v1530, 3
        %v1590 = vrot.slane %v1531, 3
        %v1591 = vsel %vm953, %v1589, %v1590
        %v1616 = vadd.f32 %v1481, %v1558
        %v1617 = vadd.f32 %v1482, %v1557
        %v1618 = vadd.f32 %v1483, %v1561
        %v1619 = vadd.f32 %v1484, %v1560
        %v1620 = vadd.f32 %v1485, %v1564
        %v1621 = vadd.f32 %v1486, %v1563
        %v1622 = vadd.f32 %v1487, %v1567
        %v1623 = vadd.f32 %v1488, %v1566
        %v1624 = vadd.f32 %v1489, %v1570
        %v1625 = vadd.f32 %v1490, %v1569
        %v1626 = vadd.f32 %v1491, %v1573
        %v1627 = vadd.f32 %v1492, %v1572
        %v1628 = vadd.f32 %v1493, %v1576
        %v1629 = vadd.f32 %v1494, %v1575
        %v1630 = vadd.f32 %v1495, %v1579
        %v1631 = vadd.f32 %v1496, %v1578
        %v1632 = vadd.f32 %v1497, %v1582
        %v1633 = vadd.f32 %v1498, %v1581
        %v1634 = vadd.f32 %v1499, %v1585
        %v1635 = vadd.f32 %v1500, %v1584
        %v1636 = vadd.f32 %v1501, %v1588
        %v1637 = vadd.f32 %v1502, %v1587
        %v1638 = vadd.f32 %v1503, %v1591
        %v1639 = vadd.f32 %v1504, %v1590
        %v1641 = vperm.slane %v439, 0
        %v1643 = vmul.f32 %v472, %v1641
        %v1644 = vmul.f32 %v477, %v1641
        %v1645 = vmul.f32 %v482, %v1641
        %v1646 = vmul.f32 %v487, %v1641
        %v1647 = vmul.f32 %v492, %v1641
        %v1648 = vmul.f32 %v497, %v1641
        %v1649 = vmul.f32 %v502, %v1641
        %v1650 = vmul.f32 %v507, %v1641
        %v1651 = vmul.f32 %v512, %v1641
        %v1652 = vmul.f32 %v517, %v1641
        %v1653 = vmul.f32 %v522, %v1641
        %v1654 = vmul.f32 %v527, %v1641
        %v1655 = vmul.f32 %v532, %v1641
        %v1656 = vmul.f32 %v537, %v1641
        %v1657 = vmul.f32 %v542, %v1641
        %v1658 = vmul.f32 %v547, %v1641
        %v1659 = vmul.f32 %v552, %v1641
        %v1660 = vmul.f32 %v557, %v1641
        %v1661 = vmul.f32 %v562, %v1641
        %v1662 = vmul.f32 %v567, %v1641
        %v1663 = vmul.f32 %v572, %v1641
        %v1664 = vmul.f32 %v577, %v1641
        %v1665 = vmul.f32 %v1177, %v1641
        %v1666 = vmul.f32 %v1182, %v1641
        %v1691 = vrot.slane %v1643, 4
        %v1692 = vrot.slane %v1644, 4
        %v1693 = vsel %vm1089, %v1691, %v1692
        %v1694 = vrot.slane %v1645, 4
        %v1695 = vrot.slane %v1646, 4
        %v1696 = vsel %vm1089, %v1694, %v1695
        %v1697 = vrot.slane %v1647, 4
        %v1698 = vrot.slane %v1648, 4
        %v1699 = vsel %vm1089, %v1697, %v1698
        %v1700 = vrot.slane %v1649, 4
        %v1701 = vrot.slane %v1650, 4
        %v1702 = vsel %vm1089, %v1700, %v1701
        %v1703 = vrot.slane %v1651, 4
        %v1704 = vrot.slane %v1652, 4
        %v1705 = vsel %vm1089, %v1703, %v1704
        %v1706 = vrot.slane %v1653, 4
        %v1707 = vrot.slane %v1654, 4
        %v1708 = vsel %vm1089, %v1706, %v1707
        %v1709 = vrot.slane %v1655, 4
        %v1710 = vrot.slane %v1656, 4
        %v1711 = vsel %vm1089, %v1709, %v1710
        %v1712 = vrot.slane %v1657, 4
        %v1713 = vrot.slane %v1658, 4
        %v1714 = vsel %vm1089, %v1712, %v1713
        %v1715 = vrot.slane %v1659, 4
        %v1716 = vrot.slane %v1660, 4
        %v1717 = vsel %vm1089, %v1715, %v1716
        %v1718 = vrot.slane %v1661, 4
        %v1719 = vrot.slane %v1662, 4
        %v1720 = vsel %vm1089, %v1718, %v1719
        %v1721 = vrot.slane %v1663, 4
        %v1722 = vrot.slane %v1664, 4
        %v1723 = vsel %vm1089, %v1721, %v1722
        %v1724 = vrot.slane %v1665, 4
        %v1725 = vrot.slane %v1666, 4
        %v1726 = vsel %vm1089, %v1724, %v1725
        %v1751 = vadd.f32 %v1616, %v1693
        %v1752 = vadd.f32 %v1617, %v1692
        %v1753 = vadd.f32 %v1618, %v1696
        %v1754 = vadd.f32 %v1619, %v1695
        %v1755 = vadd.f32 %v1620, %v1699
        %v1756 = vadd.f32 %v1621, %v1698
        %v1757 = vadd.f32 %v1622, %v1702
        %v1758 = vadd.f32 %v1623, %v1701
        %v1759 = vadd.f32 %v1624, %v1705
        %v1760 = vadd.f32 %v1625, %v1704
        %v1761 = vadd.f32 %v1626, %v1708
        %v1762 = vadd.f32 %v1627, %v1707
        %v1763 = vadd.f32 %v1628, %v1711
        %v1764 = vadd.f32 %v1629, %v1710
        %v1765 = vadd.f32 %v1630, %v1714
        %v1766 = vadd.f32 %v1631, %v1713
        %v1767 = vadd.f32 %v1632, %v1717
        %v1768 = vadd.f32 %v1633, %v1716
        %v1769 = vadd.f32 %v1634, %v1720
        %v1770 = vadd.f32 %v1635, %v1719
        %v1771 = vadd.f32 %v1636, %v1723
        %v1772 = vadd.f32 %v1637, %v1722
        %v1773 = vadd.f32 %v1638, %v1726
        %v1774 = vadd.f32 %v1639, %v1725
        %1776 = vset.pattern.permute.xlu0 0
        %1777 = vperm.xlu0 %1776, %v424
        %v1778 = vpop.permute.xlu0 %1777
        %1781 = vset.pattern.permute.xlu0 0
        %1782 = vperm.xlu0 %1781, %v425
        %v1783 = vpop.permute.xlu0 %1782
        %v1786 = vperm.slane %v440, 0
        %v1788 = vmul.f32 %v482, %v1786
        %v1789 = vmul.f32 %v487, %v1786
        %v1790 = vmul.f32 %v492, %v1786
        %v1791 = vmul.f32 %v497, %v1786
        %v1792 = vmul.f32 %v502, %v1786
        %v1793 = vmul.f32 %v507, %v1786
        %v1794 = vmul.f32 %v512, %v1786
        %v1795 = vmul.f32 %v517, %v1786
        %v1796 = vmul.f32 %v522, %v1786
        %v1797 = vmul.f32 %v527, %v1786
        %v1798 = vmul.f32 %v532, %v1786
        %v1799 = vmul.f32 %v537, %v1786
        %v1800 = vmul.f32 %v542, %v1786
        %v1801 = vmul.f32 %v547, %v1786
        %v1802 = vmul.f32 %v552, %v1786
        %v1803 = vmul.f32 %v557, %v1786
        %v1804 = vmul.f32 %v562, %v1786
        %v1805 = vmul.f32 %v567, %v1786
        %v1806 = vmul.f32 %v572, %v1786
        %v1807 = vmul.f32 %v577, %v1786
        %v1808 = vmul.f32 %v1177, %v1786
        %v1809 = vmul.f32 %v1182, %v1786
        %v1810 = vmul.f32 %v1778, %v1786
        %v1811 = vmul.f32 %v1783, %v1786
        %v1812 = vadd.f32 %v1751, %v1788
        %v1813 = vadd.f32 %v1752, %v1789
        %v1814 = vadd.f32 %v1753, %v1790
        %v1815 = vadd.f32 %v1754, %v1791
        %v1816 = vadd.f32 %v1755, %v1792
        %v1817 = vadd.f32 %v1756, %v1793
        %v1818 = vadd.f32 %v1757, %v1794
        %v1819 = vadd.f32 %v1758, %v1795
        %v1820 = vadd.f32 %v1759, %v1796
        %v1821 = vadd.f32 %v1760, %v1797
        %v1822 = vadd.f32 %v1761, %v1798
        %v1823 = vadd.f32 %v1762, %v1799
        %v1824 = vadd.f32 %v1763, %v1800
        %v1825 = vadd.f32 %v1764, %v1801
        %v1826 = vadd.f32 %v1765, %v1802
        %v1827 = vadd.f32 %v1766, %v1803
        %v1828 = vadd.f32 %v1767, %v1804
        %v1829 = vadd.f32 %v1768, %v1805
        %v1830 = vadd.f32 %v1769, %v1806
        %v1831 = vadd.f32 %v1770, %v1807
        %v1832 = vadd.f32 %v1771, %v1808
        %v1833 = vadd.f32 %v1772, %v1809
        %v1834 = vadd.f32 %v1773, %v1810
        %v1835 = vadd.f32 %v1774, %v1811
        %v1837 = vperm.slane %v441, 0
        %v1839 = vmul.f32 %v482, %v1837
        %v1840 = vmul.f32 %v487, %v1837
        %v1841 = vmul.f32 %v492, %v1837
        %v1842 = vmul.f32 %v497, %v1837
        %v1843 = vmul.f32 %v502, %v1837
        %v1844 = vmul.f32 %v507, %v1837
        %v1845 = vmul.f32 %v512, %v1837
        %v1846 = vmul.f32 %v517, %v1837
        %v1847 = vmul.f32 %v522, %v1837
        %v1848 = vmul.f32 %v527, %v1837
        %v1849 = vmul.f32 %v532, %v1837
        %v1850 = vmul.f32 %v537, %v1837
        %v1851 = vmul.f32 %v542, %v1837
        %v1852 = vmul.f32 %v547, %v1837
        %v1853 = vmul.f32 %v552, %v1837
        %v1854 = vmul.f32 %v557, %v1837
        %v1855 = vmul.f32 %v562, %v1837
        %v1856 = vmul.f32 %v567, %v1837
        %v1857 = vmul.f32 %v572, %v1837
        %v1858 = vmul.f32 %v577, %v1837
        %v1859 = vmul.f32 %v1177, %v1837
        %v1860 = vmul.f32 %v1182, %v1837
        %v1861 = vmul.f32 %v1778, %v1837
        %v1862 = vmul.f32 %v1783, %v1837
        %v1887 = vrot.slane %v1839, 1
        %v1888 = vrot.slane %v1840, 1
        %v1889 = vsel %vm681, %v1887, %v1888
        %v1890 = vrot.slane %v1841, 1
        %v1891 = vrot.slane %v1842, 1
        %v1892 = vsel %vm681, %v1890, %v1891
        %v1893 = vrot.slane %v1843, 1
        %v1894 = vrot.slane %v1844, 1
        %v1895 = vsel %vm681, %v1893, %v1894
        %v1896 = vrot.slane %v1845, 1
        %v1897 = vrot.slane %v1846, 1
        %v1898 = vsel %vm681, %v1896, %v1897
        %v1899 = vrot.slane %v1847, 1
        %v1900 = vrot.slane %v1848, 1
        %v1901 = vsel %vm681, %v1899, %v1900
        %v1902 = vrot.slane %v1849, 1
        %v1903 = vrot.slane %v1850, 1
        %v1904 = vsel %vm681, %v1902, %v1903
        %v1905 = vrot.slane %v1851, 1
        %v1906 = vrot.slane %v1852, 1
        %v1907 = vsel %vm681, %v1905, %v1906
        %v1908 = vrot.slane %v1853, 1
        %v1909 = vrot.slane %v1854, 1
        %v1910 = vsel %vm681, %v1908, %v1909
        %v1911 = vrot.slane %v1855, 1
        %v1912 = vrot.slane %v1856, 1
        %v1913 = vsel %vm681, %v1911, %v1912
        %v1914 = vrot.slane %v1857, 1
        %v1915 = vrot.slane %v1858, 1
        %v1916 = vsel %vm681, %v1914, %v1915
        %v1917 = vrot.slane %v1859, 1
        %v1918 = vrot.slane %v1860, 1
        %v1919 = vsel %vm681, %v1917, %v1918
        %v1920 = vrot.slane %v1861, 1
        %v1921 = vrot.slane %v1862, 1
        %v1922 = vsel %vm681, %v1920, %v1921
        %v1947 = vadd.f32 %v1812, %v1889
        %v1948 = vadd.f32 %v1813, %v1888
        %v1949 = vadd.f32 %v1814, %v1892
        %v1950 = vadd.f32 %v1815, %v1891
        %v1951 = vadd.f32 %v1816, %v1895
        %v1952 = vadd.f32 %v1817, %v1894
        %v1953 = vadd.f32 %v1818, %v1898
        %v1954 = vadd.f32 %v1819, %v1897
        %v1955 = vadd.f32 %v1820, %v1901
        %v1956 = vadd.f32 %v1821, %v1900
        %v1957 = vadd.f32 %v1822, %v1904
        %v1958 = vadd.f32 %v1823, %v1903
        %v1959 = vadd.f32 %v1824, %v1907
        %v1960 = vadd.f32 %v1825, %v1906
        %v1961 = vadd.f32 %v1826, %v1910
        %v1962 = vadd.f32 %v1827, %v1909
        %v1963 = vadd.f32 %v1828, %v1913
        %v1964 = vadd.f32 %v1829, %v1912
        %v1965 = vadd.f32 %v1830, %v1916
        %v1966 = vadd.f32 %v1831, %v1915
        %v1967 = vadd.f32 %v1832, %v1919
        %v1968 = vadd.f32 %v1833, %v1918
        %v1969 = vadd.f32 %v1834, %v1922
        %v1970 = vadd.f32 %v1835, %v1921
        %v1972 = vperm.slane %v442, 0
        %v1974 = vmul.f32 %v482, %v1972
        %v1975 = vmul.f32 %v487, %v1972
        %v1976 = vmul.f32 %v492, %v1972
        %v1977 = vmul.f32 %v497, %v1972
        %v1978 = vmul.f32 %v502, %v1972
        %v1979 = vmul.f32 %v507, %v1972
        %v1980 = vmul.f32 %v512, %v1972
        %v1981 = vmul.f32 %v517, %v1972
        %v1982 = vmul.f32 %v522, %v1972
        %v1983 = vmul.f32 %v527, %v1972
        %v1984 = vmul.f32 %v532, %v1972
        %v1985 = vmul.f32 %v537, %v1972
        %v1986 = vmul.f32 %v542, %v1972
        %v1987 = vmul.f32 %v547, %v1972
        %v1988 = vmul.f32 %v552, %v1972
        %v1989 = vmul.f32 %v557, %v1972
        %v1990 = vmul.f32 %v562, %v1972
        %v1991 = vmul.f32 %v567, %v1972
        %v1992 = vmul.f32 %v572, %v1972
        %v1993 = vmul.f32 %v577, %v1972
        %v1994 = vmul.f32 %v1177, %v1972
        %v1995 = vmul.f32 %v1182, %v1972
        %v1996 = vmul.f32 %v1778, %v1972
        %v1997 = vmul.f32 %v1783, %v1972
        %v2022 = vrot.slane %v1974, 2
        %v2023 = vrot.slane %v1975, 2
        %v2024 = vsel %vm817, %v2022, %v2023
        %v2025 = vrot.slane %v1976, 2
        %v2026 = vrot.slane %v1977, 2
        %v2027 = vsel %vm817, %v2025, %v2026
        %v2028 = vrot.slane %v1978, 2
        %v2029 = vrot.slane %v1979, 2
        %v2030 = vsel %vm817, %v2028, %v2029
        %v2031 = vrot.slane %v1980, 2
        %v2032 = vrot.slane %v1981, 2
        %v2033 = vsel %vm817, %v2031, %v2032
        %v2034 = vrot.slane %v1982, 2
        %v2035 = vrot.slane %v1983, 2
        %v2036 = vsel %vm817, %v2034, %v2035
        %v2037 = vrot.slane %v1984, 2
        %v2038 = vrot.slane %v1985, 2
        %v2039 = vsel %vm817, %v2037, %v2038
        %v2040 = vrot.slane %v1986, 2
        %v2041 = vrot.slane %v1987, 2
        %v2042 = vsel %vm817, %v2040, %v2041
        %v2043 = vrot.slane %v1988, 2
        %v2044 = vrot.slane %v1989, 2
        %v2045 = vsel %vm817, %v2043, %v2044
        %v2046 = vrot.slane %v1990, 2
        %v2047 = vrot.slane %v1991, 2
        %v2048 = vsel %vm817, %v2046, %v2047
        %v2049 = vrot.slane %v1992, 2
        %v2050 = vrot.slane %v1993, 2
        %v2051 = vsel %vm817, %v2049, %v2050
        %v2052 = vrot.slane %v1994, 2
        %v2053 = vrot.slane %v1995, 2
        %v2054 = vsel %vm817, %v2052, %v2053
        %v2055 = vrot.slane %v1996, 2
        %v2056 = vrot.slane %v1997, 2
        %v2057 = vsel %vm817, %v2055, %v2056
        %v2082 = vadd.f32 %v1947, %v2024
        %v2083 = vadd.f32 %v1948, %v2023
        %v2084 = vadd.f32 %v1949, %v2027
        %v2085 = vadd.f32 %v1950, %v2026
        %v2086 = vadd.f32 %v1951, %v2030
        %v2087 = vadd.f32 %v1952, %v2029
        %v2088 = vadd.f32 %v1953, %v2033
        %v2089 = vadd.f32 %v1954, %v2032
        %v2090 = vadd.f32 %v1955, %v2036
        %v2091 = vadd.f32 %v1956, %v2035
        %v2092 = vadd.f32 %v1957, %v2039
        %v2093 = vadd.f32 %v1958, %v2038
        %v2094 = vadd.f32 %v1959, %v2042
        %v2095 = vadd.f32 %v1960, %v2041
        %v2096 = vadd.f32 %v1961, %v2045
        %v2097 = vadd.f32 %v1962, %v2044
        %v2098 = vadd.f32 %v1963, %v2048
        %v2099 = vadd.f32 %v1964, %v2047
        %v2100 = vadd.f32 %v1965, %v2051
        %v2101 = vadd.f32 %v1966, %v2050
        %v2102 = vadd.f32 %v1967, %v2054
        %v2103 = vadd.f32 %v1968, %v2053
        %v2104 = vadd.f32 %v1969, %v2057
        %v2105 = vadd.f32 %v1970, %v2056
        %v2107 = vperm.slane %v443, 0
        %v2109 = vmul.f32 %v482, %v2107
        %v2110 = vmul.f32 %v487, %v2107
        %v2111 = vmul.f32 %v492, %v2107
        %v2112 = vmul.f32 %v497, %v2107
        %v2113 = vmul.f32 %v502, %v2107
        %v2114 = vmul.f32 %v507, %v2107
        %v2115 = vmul.f32 %v512, %v2107
        %v2116 = vmul.f32 %v517, %v2107
        %v2117 = vmul.f32 %v522, %v2107
        %v2118 = vmul.f32 %v527, %v2107
        %v2119 = vmul.f32 %v532, %v2107
        %v2120 = vmul.f32 %v537, %v2107
        %v2121 = vmul.f32 %v542, %v2107
        %v2122 = vmul.f32 %v547, %v2107
        %v2123 = vmul.f32 %v552, %v2107
        %v2124 = vmul.f32 %v557, %v2107
        %v2125 = vmul.f32 %v562, %v2107
        %v2126 = vmul.f32 %v567, %v2107
        %v2127 = vmul.f32 %v572, %v2107
        %v2128 = vmul.f32 %v577, %v2107
        %v2129 = vmul.f32 %v1177, %v2107
        %v2130 = vmul.f32 %v1182, %v2107
        %v2131 = vmul.f32 %v1778, %v2107
        %v2132 = vmul.f32 %v1783, %v2107
        %v2157 = vrot.slane %v2109, 3
        %v2158 = vrot.slane %v2110, 3
        %v2159 = vsel %vm953, %v2157, %v2158
        %v2160 = vrot.slane %v2111, 3
        %v2161 = vrot.slane %v2112, 3
        %v2162 = vsel %vm953, %v2160, %v2161
        %v2163 = vrot.slane %v2113, 3
        %v2164 = vrot.slane %v2114, 3
        %v2165 = vsel %vm953, %v2163, %v2164
        %v2166 = vrot.slane %v2115, 3
        %v2167 = vrot.slane %v2116, 3
        %v2168 = vsel %vm953, %v2166, %v2167
        %v2169 = vrot.slane %v2117, 3
        %v2170 = vrot.slane %v2118, 3
        %v2171 = vsel %vm953, %v2169, %v2170
        %v2172 = vrot.slane %v2119, 3
        %v2173 = vrot.slane %v2120, 3
        %v2174 = vsel %vm953, %v2172, %v2173
        %v2175 = vrot.slane %v2121, 3
        %v2176 = vrot.slane %v2122, 3
        %v2177 = vsel %vm953, %v2175, %v2176
        %v2178 = vrot.slane %v2123, 3
        %v2179 = vrot.slane %v2124, 3
        %v2180 = vsel %vm953, %v2178, %v2179
        %v2181 = vrot.slane %v2125, 3
        %v2182 = vrot.slane %v2126, 3
        %v2183 = vsel %vm953, %v2181, %v2182
        %v2184 = vrot.slane %v2127, 3
        %v2185 = vrot.slane %v2128, 3
        %v2186 = vsel %vm953, %v2184, %v2185
        %v2187 = vrot.slane %v2129, 3
        %v2188 = vrot.slane %v2130, 3
        %v2189 = vsel %vm953, %v2187, %v2188
        %v2190 = vrot.slane %v2131, 3
        %v2191 = vrot.slane %v2132, 3
        %v2192 = vsel %vm953, %v2190, %v2191
        %v2217 = vadd.f32 %v2082, %v2159
        %v2218 = vadd.f32 %v2083, %v2158
        %v2219 = vadd.f32 %v2084, %v2162
        %v2220 = vadd.f32 %v2085, %v2161
        %v2221 = vadd.f32 %v2086, %v2165
        %v2222 = vadd.f32 %v2087, %v2164
        %v2223 = vadd.f32 %v2088, %v2168
        %v2224 = vadd.f32 %v2089, %v2167
        %v2225 = vadd.f32 %v2090, %v2171
        %v2226 = vadd.f32 %v2091, %v2170
        %v2227 = vadd.f32 %v2092, %v2174
        %v2228 = vadd.f32 %v2093, %v2173
        %v2229 = vadd.f32 %v2094, %v2177
        %v2230 = vadd.f32 %v2095, %v2176
        %v2231 = vadd.f32 %v2096, %v2180
        %v2232 = vadd.f32 %v2097, %v2179
        %v2233 = vadd.f32 %v2098, %v2183
        %v2234 = vadd.f32 %v2099, %v2182
        %v2235 = vadd.f32 %v2100, %v2186
        %v2236 = vadd.f32 %v2101, %v2185
        %v2237 = vadd.f32 %v2102, %v2189
        %v2238 = vadd.f32 %v2103, %v2188
        %v2239 = vadd.f32 %v2104, %v2192
        %v2240 = vadd.f32 %v2105, %v2191
        %v2242 = vperm.slane %v444, 0
        %v2244 = vmul.f32 %v482, %v2242
        %v2245 = vmul.f32 %v487, %v2242
        %v2246 = vmul.f32 %v492, %v2242
        %v2247 = vmul.f32 %v497, %v2242
        %v2248 = vmul.f32 %v502, %v2242
        %v2249 = vmul.f32 %v507, %v2242
        %v2250 = vmul.f32 %v512, %v2242
        %v2251 = vmul.f32 %v517, %v2242
        %v2252 = vmul.f32 %v522, %v2242
        %v2253 = vmul.f32 %v527, %v2242
        %v2254 = vmul.f32 %v532, %v2242
        %v2255 = vmul.f32 %v537, %v2242
        %v2256 = vmul.f32 %v542, %v2242
        %v2257 = vmul.f32 %v547, %v2242
        %v2258 = vmul.f32 %v552, %v2242
        %v2259 = vmul.f32 %v557, %v2242
        %v2260 = vmul.f32 %v562, %v2242
        %v2261 = vmul.f32 %v567, %v2242
        %v2262 = vmul.f32 %v572, %v2242
        %v2263 = vmul.f32 %v577, %v2242
        %v2264 = vmul.f32 %v1177, %v2242
        %v2265 = vmul.f32 %v1182, %v2242
        %v2266 = vmul.f32 %v1778, %v2242
        %v2267 = vmul.f32 %v1783, %v2242
        %v2292 = vrot.slane %v2244, 4
        %v2293 = vrot.slane %v2245, 4
        %v2294 = vsel %vm1089, %v2292, %v2293
        %v2295 = vrot.slane %v2246, 4
        %v2296 = vrot.slane %v2247, 4
        %v2297 = vsel %vm1089, %v2295, %v2296
        %v2298 = vrot.slane %v2248, 4
        %v2299 = vrot.slane %v2249, 4
        %v2300 = vsel %vm1089, %v2298, %v2299
        %v2301 = vrot.slane %v2250, 4
        %v2302 = vrot.slane %v2251, 4
        %v2303 = vsel %vm1089, %v2301, %v2302
        %v2304 = vrot.slane %v2252, 4
        %v2305 = vrot.slane %v2253, 4
        %v2306 = vsel %vm1089, %v2304, %v2305
        %v2307 = vrot.slane %v2254, 4
        %v2308 = vrot.slane %v2255, 4
        %v2309 = vsel %vm1089, %v2307, %v2308
        %v2310 = vrot.slane %v2256, 4
        %v2311 = vrot.slane %v2257, 4
        %v2312 = vsel %vm1089, %v2310, %v2311
        %v2313 = vrot.slane %v2258, 4
        %v2314 = vrot.slane %v2259, 4
        %v2315 = vsel %vm1089, %v2313, %v2314
        %v2316 = vrot.slane %v2260, 4
        %v2317 = vrot.slane %v2261, 4
        %v2318 = vsel %vm1089, %v2316, %v2317
        %v2319 = vrot.slane %v2262, 4
        %v2320 = vrot.slane %v2263, 4
        %v2321 = vsel %vm1089, %v2319, %v2320
        %v2322 = vrot.slane %v2264, 4
        %v2323 = vrot.slane %v2265, 4
        %v2324 = vsel %vm1089, %v2322, %v2323
        %v2325 = vrot.slane %v2266, 4
        %v2326 = vrot.slane %v2267, 4
        %v2327 = vsel %vm1089, %v2325, %v2326
        %v2352 = vadd.f32 %v2217, %v2294
        %v2353 = vadd.f32 %v2218, %v2293
        %v2354 = vadd.f32 %v2219, %v2297
        %v2355 = vadd.f32 %v2220, %v2296
        %v2356 = vadd.f32 %v2221, %v2300
        %v2357 = vadd.f32 %v2222, %v2299
        %v2358 = vadd.f32 %v2223, %v2303
        %v2359 = vadd.f32 %v2224, %v2302
        %v2360 = vadd.f32 %v2225, %v2306
        %v2361 = vadd.f32 %v2226, %v2305
        %v2362 = vadd.f32 %v2227, %v2309
        %v2363 = vadd.f32 %v2228, %v2308
        %v2364 = vadd.f32 %v2229, %v2312
        %v2365 = vadd.f32 %v2230, %v2311
        %v2366 = vadd.f32 %v2231, %v2315
        %v2367 = vadd.f32 %v2232, %v2314
        %v2368 = vadd.f32 %v2233, %v2318
        %v2369 = vadd.f32 %v2234, %v2317
        %v2370 = vadd.f32 %v2235, %v2321
        %v2371 = vadd.f32 %v2236, %v2320
        %v2372 = vadd.f32 %v2237, %v2324
        %v2373 = vadd.f32 %v2238, %v2323
        %v2374 = vadd.f32 %v2239, %v2327
        %v2375 = vadd.f32 %v2240, %v2326
        %2377 = vset.pattern.permute.xlu0 0
        %2378 = vperm.xlu0 %2377, %v426
        %v2379 = vpop.permute.xlu0 %2378
        %2382 = vset.pattern.permute.xlu0 0
        %2383 = vperm.xlu0 %2382, %v427
        %v2384 = vpop.permute.xlu0 %2383
        %v2387 = vperm.slane %v445, 0
        %v2389 = vmul.f32 %v492, %v2387
        %v2390 = vmul.f32 %v497, %v2387
        %v2391 = vmul.f32 %v502, %v2387
        %v2392 = vmul.f32 %v507, %v2387
        %v2393 = vmul.f32 %v512, %v2387
        %v2394 = vmul.f32 %v517, %v2387
        %v2395 = vmul.f32 %v522, %v2387
        %v2396 = vmul.f32 %v527, %v2387
        %v2397 = vmul.f32 %v532, %v2387
        %v2398 = vmul.f32 %v537, %v2387
        %v2399 = vmul.f32 %v542, %v2387
        %v2400 = vmul.f32 %v547, %v2387
        %v2401 = vmul.f32 %v552, %v2387
        %v2402 = vmul.f32 %v557, %v2387
        %v2403 = vmul.f32 %v562, %v2387
        %v2404 = vmul.f32 %v567, %v2387
        %v2405 = vmul.f32 %v572, %v2387
        %v2406 = vmul.f32 %v577, %v2387
        %v2407 = vmul.f32 %v1177, %v2387
        %v2408 = vmul.f32 %v1182, %v2387
        %v2409 = vmul.f32 %v1778, %v2387
        %v2410 = vmul.f32 %v1783, %v2387
        %v2411 = vmul.f32 %v2379, %v2387
        %v2412 = vmul.f32 %v2384, %v2387
        %v2413 = vadd.f32 %v2352, %v2389
        %v2414 = vadd.f32 %v2353, %v2390
        %v2415 = vadd.f32 %v2354, %v2391
        %v2416 = vadd.f32 %v2355, %v2392
        %v2417 = vadd.f32 %v2356, %v2393
        %v2418 = vadd.f32 %v2357, %v2394
        %v2419 = vadd.f32 %v2358, %v2395
        %v2420 = vadd.f32 %v2359, %v2396
        %v2421 = vadd.f32 %v2360, %v2397
        %v2422 = vadd.f32 %v2361, %v2398
        %v2423 = vadd.f32 %v2362, %v2399
        %v2424 = vadd.f32 %v2363, %v2400
        %v2425 = vadd.f32 %v2364, %v2401
        %v2426 = vadd.f32 %v2365, %v2402
        %v2427 = vadd.f32 %v2366, %v2403
        %v2428 = vadd.f32 %v2367, %v2404
        %v2429 = vadd.f32 %v2368, %v2405
        %v2430 = vadd.f32 %v2369, %v2406
        %v2431 = vadd.f32 %v2370, %v2407
        %v2432 = vadd.f32 %v2371, %v2408
        %v2433 = vadd.f32 %v2372, %v2409
        %v2434 = vadd.f32 %v2373, %v2410
        %v2435 = vadd.f32 %v2374, %v2411
        %v2436 = vadd.f32 %v2375, %v2412
        %v2438 = vperm.slane %v446, 0
        %v2440 = vmul.f32 %v492, %v2438
        %v2441 = vmul.f32 %v497, %v2438
        %v2442 = vmul.f32 %v502, %v2438
        %v2443 = vmul.f32 %v507, %v2438
        %v2444 = vmul.f32 %v512, %v2438
        %v2445 = vmul.f32 %v517, %v2438
        %v2446 = vmul.f32 %v522, %v2438
        %v2447 = vmul.f32 %v527, %v2438
        %v2448 = vmul.f32 %v532, %v2438
        %v2449 = vmul.f32 %v537, %v2438
        %v2450 = vmul.f32 %v542, %v2438
        %v2451 = vmul.f32 %v547, %v2438
        %v2452 = vmul.f32 %v552, %v2438
        %v2453 = vmul.f32 %v557, %v2438
        %v2454 = vmul.f32 %v562, %v2438
        %v2455 = vmul.f32 %v567, %v2438
        %v2456 = vmul.f32 %v572, %v2438
        %v2457 = vmul.f32 %v577, %v2438
        %v2458 = vmul.f32 %v1177, %v2438
        %v2459 = vmul.f32 %v1182, %v2438
        %v2460 = vmul.f32 %v1778, %v2438
        %v2461 = vmul.f32 %v1783, %v2438
        %v2462 = vmul.f32 %v2379, %v2438
        %v2463 = vmul.f32 %v2384, %v2438
        %v2488 = vrot.slane %v2440, 1
        %v2489 = vrot.slane %v2441, 1
        %v2490 = vsel %vm681, %v2488, %v2489
        %v2491 = vrot.slane %v2442, 1
        %v2492 = vrot.slane %v2443, 1
        %v2493 = vsel %vm681, %v2491, %v2492
        %v2494 = vrot.slane %v2444, 1
        %v2495 = vrot.slane %v2445, 1
        %v2496 = vsel %vm681, %v2494, %v2495
        %v2497 = vrot.slane %v2446, 1
        %v2498 = vrot.slane %v2447, 1
        %v2499 = vsel %vm681, %v2497, %v2498
        %v2500 = vrot.slane %v2448, 1
        %v2501 = vrot.slane %v2449, 1
        %v2502 = vsel %vm681, %v2500, %v2501
        %v2503 = vrot.slane %v2450, 1
        %v2504 = vrot.slane %v2451, 1
        %v2505 = vsel %vm681, %v2503, %v2504
        %v2506 = vrot.slane %v2452, 1
        %v2507 = vrot.slane %v2453, 1
        %v2508 = vsel %vm681, %v2506, %v2507
        %v2509 = vrot.slane %v2454, 1
        %v2510 = vrot.slane %v2455, 1
        %v2511 = vsel %vm681, %v2509, %v2510
        %v2512 = vrot.slane %v2456, 1
        %v2513 = vrot.slane %v2457, 1
        %v2514 = vsel %vm681, %v2512, %v2513
        %v2515 = vrot.slane %v2458, 1
        %v2516 = vrot.slane %v2459, 1
        %v2517 = vsel %vm681, %v2515, %v2516
        %v2518 = vrot.slane %v2460, 1
        %v2519 = vrot.slane %v2461, 1
        %v2520 = vsel %vm681, %v2518, %v2519
        %v2521 = vrot.slane %v2462, 1
        %v2522 = vrot.slane %v2463, 1
        %v2523 = vsel %vm681, %v2521, %v2522
        %v2548 = vadd.f32 %v2413, %v2490
        %v2549 = vadd.f32 %v2414, %v2489
        %v2550 = vadd.f32 %v2415, %v2493
        %v2551 = vadd.f32 %v2416, %v2492
        %v2552 = vadd.f32 %v2417, %v2496
        %v2553 = vadd.f32 %v2418, %v2495
        %v2554 = vadd.f32 %v2419, %v2499
        %v2555 = vadd.f32 %v2420, %v2498
        %v2556 = vadd.f32 %v2421, %v2502
        %v2557 = vadd.f32 %v2422, %v2501
        %v2558 = vadd.f32 %v2423, %v2505
        %v2559 = vadd.f32 %v2424, %v2504
        %v2560 = vadd.f32 %v2425, %v2508
        %v2561 = vadd.f32 %v2426, %v2507
        %v2562 = vadd.f32 %v2427, %v2511
        %v2563 = vadd.f32 %v2428, %v2510
        %v2564 = vadd.f32 %v2429, %v2514
        %v2565 = vadd.f32 %v2430, %v2513
        %v2566 = vadd.f32 %v2431, %v2517
        %v2567 = vadd.f32 %v2432, %v2516
        %v2568 = vadd.f32 %v2433, %v2520
        %v2569 = vadd.f32 %v2434, %v2519
        %v2570 = vadd.f32 %v2435, %v2523
        %v2571 = vadd.f32 %v2436, %v2522
        %v2573 = vperm.slane %v447, 0
        %v2575 = vmul.f32 %v492, %v2573
        %v2576 = vmul.f32 %v497, %v2573
        %v2577 = vmul.f32 %v502, %v2573
        %v2578 = vmul.f32 %v507, %v2573
        %v2579 = vmul.f32 %v512, %v2573
        %v2580 = vmul.f32 %v517, %v2573
        %v2581 = vmul.f32 %v522, %v2573
        %v2582 = vmul.f32 %v527, %v2573
        %v2583 = vmul.f32 %v532, %v2573
        %v2584 = vmul.f32 %v537, %v2573
        %v2585 = vmul.f32 %v542, %v2573
        %v2586 = vmul.f32 %v547, %v2573
        %v2587 = vmul.f32 %v552, %v2573
        %v2588 = vmul.f32 %v557, %v2573
        %v2589 = vmul.f32 %v562, %v2573
        %v2590 = vmul.f32 %v567, %v2573
        %v2591 = vmul.f32 %v572, %v2573
        %v2592 = vmul.f32 %v577, %v2573
        %v2593 = vmul.f32 %v1177, %v2573
        %v2594 = vmul.f32 %v1182, %v2573
        %v2595 = vmul.f32 %v1778, %v2573
        %v2596 = vmul.f32 %v1783, %v2573
        %v2597 = vmul.f32 %v2379, %v2573
        %v2598 = vmul.f32 %v2384, %v2573
        %v2623 = vrot.slane %v2575, 2
        %v2624 = vrot.slane %v2576, 2
        %v2625 = vsel %vm817, %v2623, %v2624
        %v2626 = vrot.slane %v2577, 2
        %v2627 = vrot.slane %v2578, 2
        %v2628 = vsel %vm817, %v2626, %v2627
        %v2629 = vrot.slane %v2579, 2
        %v2630 = vrot.slane %v2580, 2
        %v2631 = vsel %vm817, %v2629, %v2630
        %v2632 = vrot.slane %v2581, 2
        %v2633 = vrot.slane %v2582, 2
        %v2634 = vsel %vm817, %v2632, %v2633
        %v2635 = vrot.slane %v2583, 2
        %v2636 = vrot.slane %v2584, 2
        %v2637 = vsel %vm817, %v2635, %v2636
        %v2638 = vrot.slane %v2585, 2
        %v2639 = vrot.slane %v2586, 2
        %v2640 = vsel %vm817, %v2638, %v2639
        %v2641 = vrot.slane %v2587, 2
        %v2642 = vrot.slane %v2588, 2
        %v2643 = vsel %vm817, %v2641, %v2642
        %v2644 = vrot.slane %v2589, 2
        %v2645 = vrot.slane %v2590, 2
        %v2646 = vsel %vm817, %v2644, %v2645
        %v2647 = vrot.slane %v2591, 2
        %v2648 = vrot.slane %v2592, 2
        %v2649 = vsel %vm817, %v2647, %v2648
        %v2650 = vrot.slane %v2593, 2
        %v2651 = vrot.slane %v2594, 2
        %v2652 = vsel %vm817, %v2650, %v2651
        %v2653 = vrot.slane %v2595, 2
        %v2654 = vrot.slane %v2596, 2
        %v2655 = vsel %vm817, %v2653, %v2654
        %v2656 = vrot.slane %v2597, 2
        %v2657 = vrot.slane %v2598, 2
        %v2658 = vsel %vm817, %v2656, %v2657
        %v2683 = vadd.f32 %v2548, %v2625
        %v2684 = vadd.f32 %v2549, %v2624
        %v2685 = vadd.f32 %v2550, %v2628
        %v2686 = vadd.f32 %v2551, %v2627
        %v2687 = vadd.f32 %v2552, %v2631
        %v2688 = vadd.f32 %v2553, %v2630
        %v2689 = vadd.f32 %v2554, %v2634
        %v2690 = vadd.f32 %v2555, %v2633
        %v2691 = vadd.f32 %v2556, %v2637
        %v2692 = vadd.f32 %v2557, %v2636
        %v2693 = vadd.f32 %v2558, %v2640
        %v2694 = vadd.f32 %v2559, %v2639
        %v2695 = vadd.f32 %v2560, %v2643
        %v2696 = vadd.f32 %v2561, %v2642
        %v2697 = vadd.f32 %v2562, %v2646
        %v2698 = vadd.f32 %v2563, %v2645
        %v2699 = vadd.f32 %v2564, %v2649
        %v2700 = vadd.f32 %v2565, %v2648
        %v2701 = vadd.f32 %v2566, %v2652
        %v2702 = vadd.f32 %v2567, %v2651
        %v2703 = vadd.f32 %v2568, %v2655
        %v2704 = vadd.f32 %v2569, %v2654
        %v2705 = vadd.f32 %v2570, %v2658
        %v2706 = vadd.f32 %v2571, %v2657
        %v2708 = vperm.slane %v448, 0
        %v2710 = vmul.f32 %v492, %v2708
        %v2711 = vmul.f32 %v497, %v2708
        %v2712 = vmul.f32 %v502, %v2708
        %v2713 = vmul.f32 %v507, %v2708
        %v2714 = vmul.f32 %v512, %v2708
        %v2715 = vmul.f32 %v517, %v2708
        %v2716 = vmul.f32 %v522, %v2708
        %v2717 = vmul.f32 %v527, %v2708
        %v2718 = vmul.f32 %v532, %v2708
        %v2719 = vmul.f32 %v537, %v2708
        %v2720 = vmul.f32 %v542, %v2708
        %v2721 = vmul.f32 %v547, %v2708
        %v2722 = vmul.f32 %v552, %v2708
        %v2723 = vmul.f32 %v557, %v2708
        %v2724 = vmul.f32 %v562, %v2708
        %v2725 = vmul.f32 %v567, %v2708
        %v2726 = vmul.f32 %v572, %v2708
        %v2727 = vmul.f32 %v577, %v2708
        %v2728 = vmul.f32 %v1177, %v2708
        %v2729 = vmul.f32 %v1182, %v2708
        %v2730 = vmul.f32 %v1778, %v2708
        %v2731 = vmul.f32 %v1783, %v2708
        %v2732 = vmul.f32 %v2379, %v2708
        %v2733 = vmul.f32 %v2384, %v2708
        %v2758 = vrot.slane %v2710, 3
        %v2759 = vrot.slane %v2711, 3
        %v2760 = vsel %vm953, %v2758, %v2759
        %v2761 = vrot.slane %v2712, 3
        %v2762 = vrot.slane %v2713, 3
        %v2763 = vsel %vm953, %v2761, %v2762
        %v2764 = vrot.slane %v2714, 3
        %v2765 = vrot.slane %v2715, 3
        %v2766 = vsel %vm953, %v2764, %v2765
        %v2767 = vrot.slane %v2716, 3
        %v2768 = vrot.slane %v2717, 3
        %v2769 = vsel %vm953, %v2767, %v2768
        %v2770 = vrot.slane %v2718, 3
        %v2771 = vrot.slane %v2719, 3
        %v2772 = vsel %vm953, %v2770, %v2771
        %v2773 = vrot.slane %v2720, 3
        %v2774 = vrot.slane %v2721, 3
        %v2775 = vsel %vm953, %v2773, %v2774
        %v2776 = vrot.slane %v2722, 3
        %v2777 = vrot.slane %v2723, 3
        %v2778 = vsel %vm953, %v2776, %v2777
        %v2779 = vrot.slane %v2724, 3
        %v2780 = vrot.slane %v2725, 3
        %v2781 = vsel %vm953, %v2779, %v2780
        %v2782 = vrot.slane %v2726, 3
        %v2783 = vrot.slane %v2727, 3
        %v2784 = vsel %vm953, %v2782, %v2783
        %v2785 = vrot.slane %v2728, 3
        %v2786 = vrot.slane %v2729, 3
        %v2787 = vsel %vm953, %v2785, %v2786
        %v2788 = vrot.slane %v2730, 3
        %v2789 = vrot.slane %v2731, 3
        %v2790 = vsel %vm953, %v2788, %v2789
        %v2791 = vrot.slane %v2732, 3
        %v2792 = vrot.slane %v2733, 3
        %v2793 = vsel %vm953, %v2791, %v2792
        %v2818 = vadd.f32 %v2683, %v2760
        %v2819 = vadd.f32 %v2684, %v2759
        %v2820 = vadd.f32 %v2685, %v2763
        %v2821 = vadd.f32 %v2686, %v2762
        %v2822 = vadd.f32 %v2687, %v2766
        %v2823 = vadd.f32 %v2688, %v2765
        %v2824 = vadd.f32 %v2689, %v2769
        %v2825 = vadd.f32 %v2690, %v2768
        %v2826 = vadd.f32 %v2691, %v2772
        %v2827 = vadd.f32 %v2692, %v2771
        %v2828 = vadd.f32 %v2693, %v2775
        %v2829 = vadd.f32 %v2694, %v2774
        %v2830 = vadd.f32 %v2695, %v2778
        %v2831 = vadd.f32 %v2696, %v2777
        %v2832 = vadd.f32 %v2697, %v2781
        %v2833 = vadd.f32 %v2698, %v2780
        %v2834 = vadd.f32 %v2699, %v2784
        %v2835 = vadd.f32 %v2700, %v2783
        %v2836 = vadd.f32 %v2701, %v2787
        %v2837 = vadd.f32 %v2702, %v2786
        %v2838 = vadd.f32 %v2703, %v2790
        %v2839 = vadd.f32 %v2704, %v2789
        %v2840 = vadd.f32 %v2705, %v2793
        %v2841 = vadd.f32 %v2706, %v2792
        %v2843 = vperm.slane %v449, 0
        %v2845 = vmul.f32 %v492, %v2843
        %v2846 = vmul.f32 %v497, %v2843
        %v2847 = vmul.f32 %v502, %v2843
        %v2848 = vmul.f32 %v507, %v2843
        %v2849 = vmul.f32 %v512, %v2843
        %v2850 = vmul.f32 %v517, %v2843
        %v2851 = vmul.f32 %v522, %v2843
        %v2852 = vmul.f32 %v527, %v2843
        %v2853 = vmul.f32 %v532, %v2843
        %v2854 = vmul.f32 %v537, %v2843
        %v2855 = vmul.f32 %v542, %v2843
        %v2856 = vmul.f32 %v547, %v2843
        %v2857 = vmul.f32 %v552, %v2843
        %v2858 = vmul.f32 %v557, %v2843
        %v2859 = vmul.f32 %v562, %v2843
        %v2860 = vmul.f32 %v567, %v2843
        %v2861 = vmul.f32 %v572, %v2843
        %v2862 = vmul.f32 %v577, %v2843
        %v2863 = vmul.f32 %v1177, %v2843
        %v2864 = vmul.f32 %v1182, %v2843
        %v2865 = vmul.f32 %v1778, %v2843
        %v2866 = vmul.f32 %v1783, %v2843
        %v2867 = vmul.f32 %v2379, %v2843
        %v2868 = vmul.f32 %v2384, %v2843
        %v2893 = vrot.slane %v2845, 4
        %v2894 = vrot.slane %v2846, 4
        %v2895 = vsel %vm1089, %v2893, %v2894
        %v2896 = vrot.slane %v2847, 4
        %v2897 = vrot.slane %v2848, 4
        %v2898 = vsel %vm1089, %v2896, %v2897
        %v2899 = vrot.slane %v2849, 4
        %v2900 = vrot.slane %v2850, 4
        %v2901 = vsel %vm1089, %v2899, %v2900
        %v2902 = vrot.slane %v2851, 4
        %v2903 = vrot.slane %v2852, 4
        %v2904 = vsel %vm1089, %v2902, %v2903
        %v2905 = vrot.slane %v2853, 4
        %v2906 = vrot.slane %v2854, 4
        %v2907 = vsel %vm1089, %v2905, %v2906
        %v2908 = vrot.slane %v2855, 4
        %v2909 = vrot.slane %v2856, 4
        %v2910 = vsel %vm1089, %v2908, %v2909
        %v2911 = vrot.slane %v2857, 4
        %v2912 = vrot.slane %v2858, 4
        %v2913 = vsel %vm1089, %v2911, %v2912
        %v2914 = vrot.slane %v2859, 4
        %v2915 = vrot.slane %v2860, 4
        %v2916 = vsel %vm1089, %v2914, %v2915
        %v2917 = vrot.slane %v2861, 4
        %v2918 = vrot.slane %v2862, 4
        %v2919 = vsel %vm1089, %v2917, %v2918
        %v2920 = vrot.slane %v2863, 4
        %v2921 = vrot.slane %v2864, 4
        %v2922 = vsel %vm1089, %v2920, %v2921
        %v2923 = vrot.slane %v2865, 4
        %v2924 = vrot.slane %v2866, 4
        %v2925 = vsel %vm1089, %v2923, %v2924
        %v2926 = vrot.slane %v2867, 4
        %v2927 = vrot.slane %v2868, 4
        %v2928 = vsel %vm1089, %v2926, %v2927
        %v2953 = vadd.f32 %v2818, %v2895
        %v2954 = vadd.f32 %v2819, %v2894
        %v2955 = vadd.f32 %v2820, %v2898
        %v2956 = vadd.f32 %v2821, %v2897
        %v2957 = vadd.f32 %v2822, %v2901
        %v2958 = vadd.f32 %v2823, %v2900
        %v2959 = vadd.f32 %v2824, %v2904
        %v2960 = vadd.f32 %v2825, %v2903
        %v2961 = vadd.f32 %v2826, %v2907
        %v2962 = vadd.f32 %v2827, %v2906
        %v2963 = vadd.f32 %v2828, %v2910
        %v2964 = vadd.f32 %v2829, %v2909
        %v2965 = vadd.f32 %v2830, %v2913
        %v2966 = vadd.f32 %v2831, %v2912
        %v2967 = vadd.f32 %v2832, %v2916
        %v2968 = vadd.f32 %v2833, %v2915
        %v2969 = vadd.f32 %v2834, %v2919
        %v2970 = vadd.f32 %v2835, %v2918
        %v2971 = vadd.f32 %v2836, %v2922
        %v2972 = vadd.f32 %v2837, %v2921
        %v2973 = vadd.f32 %v2838, %v2925
        %v2974 = vadd.f32 %v2839, %v2924
        %v2975 = vadd.f32 %v2840, %v2928
        %v2976 = vadd.f32 %v2841, %v2927
        %2978 = vset.pattern.permute.xlu0 0
        %2979 = vperm.xlu0 %2978, %v428
        %v2980 = vpop.permute.xlu0 %2979
        %2983 = vset.pattern.permute.xlu0 0
        %2984 = vperm.xlu0 %2983, %v429
        %v2985 = vpop.permute.xlu0 %2984
        %v2988 = vperm.slane %v450, 0
        %v2990 = vmul.f32 %v502, %v2988
        %v2991 = vmul.f32 %v507, %v2988
        %v2992 = vmul.f32 %v512, %v2988
        %v2993 = vmul.f32 %v517, %v2988
        %v2994 = vmul.f32 %v522, %v2988
        %v2995 = vmul.f32 %v527, %v2988
        %v2996 = vmul.f32 %v532, %v2988
        %v2997 = vmul.f32 %v537, %v2988
        %v2998 = vmul.f32 %v542, %v2988
        %v2999 = vmul.f32 %v547, %v2988
        %v3000 = vmul.f32 %v552, %v2988
        %v3001 = vmul.f32 %v557, %v2988
        %v3002 = vmul.f32 %v562, %v2988
        %v3003 = vmul.f32 %v567, %v2988
        %v3004 = vmul.f32 %v572, %v2988
        %v3005 = vmul.f32 %v577, %v2988
        %v3006 = vmul.f32 %v1177, %v2988
        %v3007 = vmul.f32 %v1182, %v2988
        %v3008 = vmul.f32 %v1778, %v2988
        %v3009 = vmul.f32 %v1783, %v2988
        %v3010 = vmul.f32 %v2379, %v2988
        %v3011 = vmul.f32 %v2384, %v2988
        %v3012 = vmul.f32 %v2980, %v2988
        %v3013 = vmul.f32 %v2985, %v2988
        %v3014 = vadd.f32 %v2953, %v2990
        %v3015 = vadd.f32 %v2954, %v2991
        %v3016 = vadd.f32 %v2955, %v2992
        %v3017 = vadd.f32 %v2956, %v2993
        %v3018 = vadd.f32 %v2957, %v2994
        %v3019 = vadd.f32 %v2958, %v2995
        %v3020 = vadd.f32 %v2959, %v2996
        %v3021 = vadd.f32 %v2960, %v2997
        %v3022 = vadd.f32 %v2961, %v2998
        %v3023 = vadd.f32 %v2962, %v2999
        %v3024 = vadd.f32 %v2963, %v3000
        %v3025 = vadd.f32 %v2964, %v3001
        %v3026 = vadd.f32 %v2965, %v3002
        %v3027 = vadd.f32 %v2966, %v3003
        %v3028 = vadd.f32 %v2967, %v3004
        %v3029 = vadd.f32 %v2968, %v3005
        %v3030 = vadd.f32 %v2969, %v3006
        %v3031 = vadd.f32 %v2970, %v3007
        %v3032 = vadd.f32 %v2971, %v3008
        %v3033 = vadd.f32 %v2972, %v3009
        %v3034 = vadd.f32 %v2973, %v3010
        %v3035 = vadd.f32 %v2974, %v3011
        %v3036 = vadd.f32 %v2975, %v3012
        %v3037 = vadd.f32 %v2976, %v3013
        %v3039 = vperm.slane %v451, 0
        %v3041 = vmul.f32 %v502, %v3039
        %v3042 = vmul.f32 %v507, %v3039
        %v3043 = vmul.f32 %v512, %v3039
        %v3044 = vmul.f32 %v517, %v3039
        %v3045 = vmul.f32 %v522, %v3039
        %v3046 = vmul.f32 %v527, %v3039
        %v3047 = vmul.f32 %v532, %v3039
        %v3048 = vmul.f32 %v537, %v3039
        %v3049 = vmul.f32 %v542, %v3039
        %v3050 = vmul.f32 %v547, %v3039
        %v3051 = vmul.f32 %v552, %v3039
        %v3052 = vmul.f32 %v557, %v3039
        %v3053 = vmul.f32 %v562, %v3039
        %v3054 = vmul.f32 %v567, %v3039
        %v3055 = vmul.f32 %v572, %v3039
        %v3056 = vmul.f32 %v577, %v3039
        %v3057 = vmul.f32 %v1177, %v3039
        %v3058 = vmul.f32 %v1182, %v3039
        %v3059 = vmul.f32 %v1778, %v3039
        %v3060 = vmul.f32 %v1783, %v3039
        %v3061 = vmul.f32 %v2379, %v3039
        %v3062 = vmul.f32 %v2384, %v3039
        %v3063 = vmul.f32 %v2980, %v3039
        %v3064 = vmul.f32 %v2985, %v3039
        %v3089 = vrot.slane %v3041, 1
        %v3090 = vrot.slane %v3042, 1
        %v3091 = vsel %vm681, %v3089, %v3090
        %v3092 = vrot.slane %v3043, 1
        %v3093 = vrot.slane %v3044, 1
        %v3094 = vsel %vm681, %v3092, %v3093
        %v3095 = vrot.slane %v3045, 1
        %v3096 = vrot.slane %v3046, 1
        %v3097 = vsel %vm681, %v3095, %v3096
        %v3098 = vrot.slane %v3047, 1
        %v3099 = vrot.slane %v3048, 1
        %v3100 = vsel %vm681, %v3098, %v3099
        %v3101 = vrot.slane %v3049, 1
        %v3102 = vrot.slane %v3050, 1
        %v3103 = vsel %vm681, %v3101, %v3102
        %v3104 = vrot.slane %v3051, 1
        %v3105 = vrot.slane %v3052, 1
        %v3106 = vsel %vm681, %v3104, %v3105
        %v3107 = vrot.slane %v3053, 1
        %v3108 = vrot.slane %v3054, 1
        %v3109 = vsel %vm681, %v3107, %v3108
        %v3110 = vrot.slane %v3055, 1
        %v3111 = vrot.slane %v3056, 1
        %v3112 = vsel %vm681, %v3110, %v3111
        %v3113 = vrot.slane %v3057, 1
        %v3114 = vrot.slane %v3058, 1
        %v3115 = vsel %vm681, %v3113, %v3114
        %v3116 = vrot.slane %v3059, 1
        %v3117 = vrot.slane %v3060, 1
        %v3118 = vsel %vm681, %v3116, %v3117
        %v3119 = vrot.slane %v3061, 1
        %v3120 = vrot.slane %v3062, 1
        %v3121 = vsel %vm681, %v3119, %v3120
        %v3122 = vrot.slane %v3063, 1
        %v3123 = vrot.slane %v3064, 1
        %v3124 = vsel %vm681, %v3122, %v3123
        %v3149 = vadd.f32 %v3014, %v3091
        %v3150 = vadd.f32 %v3015, %v3090
        %v3151 = vadd.f32 %v3016, %v3094
        %v3152 = vadd.f32 %v3017, %v3093
        %v3153 = vadd.f32 %v3018, %v3097
        %v3154 = vadd.f32 %v3019, %v3096
        %v3155 = vadd.f32 %v3020, %v3100
        %v3156 = vadd.f32 %v3021, %v3099
        %v3157 = vadd.f32 %v3022, %v3103
        %v3158 = vadd.f32 %v3023, %v3102
        %v3159 = vadd.f32 %v3024, %v3106
        %v3160 = vadd.f32 %v3025, %v3105
        %v3161 = vadd.f32 %v3026, %v3109
        %v3162 = vadd.f32 %v3027, %v3108
        %v3163 = vadd.f32 %v3028, %v3112
        %v3164 = vadd.f32 %v3029, %v3111
        %v3165 = vadd.f32 %v3030, %v3115
        %v3166 = vadd.f32 %v3031, %v3114
        %v3167 = vadd.f32 %v3032, %v3118
        %v3168 = vadd.f32 %v3033, %v3117
        %v3169 = vadd.f32 %v3034, %v3121
        %v3170 = vadd.f32 %v3035, %v3120
        %v3171 = vadd.f32 %v3036, %v3124
        %v3172 = vadd.f32 %v3037, %v3123
        %v3174 = vperm.slane %v452, 0
        %v3176 = vmul.f32 %v502, %v3174
        %v3177 = vmul.f32 %v507, %v3174
        %v3178 = vmul.f32 %v512, %v3174
        %v3179 = vmul.f32 %v517, %v3174
        %v3180 = vmul.f32 %v522, %v3174
        %v3181 = vmul.f32 %v527, %v3174
        %v3182 = vmul.f32 %v532, %v3174
        %v3183 = vmul.f32 %v537, %v3174
        %v3184 = vmul.f32 %v542, %v3174
        %v3185 = vmul.f32 %v547, %v3174
        %v3186 = vmul.f32 %v552, %v3174
        %v3187 = vmul.f32 %v557, %v3174
        %v3188 = vmul.f32 %v562, %v3174
        %v3189 = vmul.f32 %v567, %v3174
        %v3190 = vmul.f32 %v572, %v3174
        %v3191 = vmul.f32 %v577, %v3174
        %v3192 = vmul.f32 %v1177, %v3174
        %v3193 = vmul.f32 %v1182, %v3174
        %v3194 = vmul.f32 %v1778, %v3174
        %v3195 = vmul.f32 %v1783, %v3174
        %v3196 = vmul.f32 %v2379, %v3174
        %v3197 = vmul.f32 %v2384, %v3174
        %v3198 = vmul.f32 %v2980, %v3174
        %v3199 = vmul.f32 %v2985, %v3174
        %v3224 = vrot.slane %v3176, 2
        %v3225 = vrot.slane %v3177, 2
        %v3226 = vsel %vm817, %v3224, %v3225
        %v3227 = vrot.slane %v3178, 2
        %v3228 = vrot.slane %v3179, 2
        %v3229 = vsel %vm817, %v3227, %v3228
        %v3230 = vrot.slane %v3180, 2
        %v3231 = vrot.slane %v3181, 2
        %v3232 = vsel %vm817, %v3230, %v3231
        %v3233 = vrot.slane %v3182, 2
        %v3234 = vrot.slane %v3183, 2
        %v3235 = vsel %vm817, %v3233, %v3234
        %v3236 = vrot.slane %v3184, 2
        %v3237 = vrot.slane %v3185, 2
        %v3238 = vsel %vm817, %v3236, %v3237
        %v3239 = vrot.slane %v3186, 2
        %v3240 = vrot.slane %v3187, 2
        %v3241 = vsel %vm817, %v3239, %v3240
        %v3242 = vrot.slane %v3188, 2
        %v3243 = vrot.slane %v3189, 2
        %v3244 = vsel %vm817, %v3242, %v3243
        %v3245 = vrot.slane %v3190, 2
        %v3246 = vrot.slane %v3191, 2
        %v3247 = vsel %vm817, %v3245, %v3246
        %v3248 = vrot.slane %v3192, 2
        %v3249 = vrot.slane %v3193, 2
        %v3250 = vsel %vm817, %v3248, %v3249
        %v3251 = vrot.slane %v3194, 2
        %v3252 = vrot.slane %v3195, 2
        %v3253 = vsel %vm817, %v3251, %v3252
        %v3254 = vrot.slane %v3196, 2
        %v3255 = vrot.slane %v3197, 2
        %v3256 = vsel %vm817, %v3254, %v3255
        %v3257 = vrot.slane %v3198, 2
        %v3258 = vrot.slane %v3199, 2
        %v3259 = vsel %vm817, %v3257, %v3258
        %v3284 = vadd.f32 %v3149, %v3226
        %v3285 = vadd.f32 %v3150, %v3225
        %v3286 = vadd.f32 %v3151, %v3229
        %v3287 = vadd.f32 %v3152, %v3228
        %v3288 = vadd.f32 %v3153, %v3232
        %v3289 = vadd.f32 %v3154, %v3231
        %v3290 = vadd.f32 %v3155, %v3235
        %v3291 = vadd.f32 %v3156, %v3234
        %v3292 = vadd.f32 %v3157, %v3238
        %v3293 = vadd.f32 %v3158, %v3237
        %v3294 = vadd.f32 %v3159, %v3241
        %v3295 = vadd.f32 %v3160, %v3240
        %v3296 = vadd.f32 %v3161, %v3244
        %v3297 = vadd.f32 %v3162, %v3243
        %v3298 = vadd.f32 %v3163, %v3247
        %v3299 = vadd.f32 %v3164, %v3246
        %v3300 = vadd.f32 %v3165, %v3250
        %v3301 = vadd.f32 %v3166, %v3249
        %v3302 = vadd.f32 %v3167, %v3253
        %v3303 = vadd.f32 %v3168, %v3252
        %v3304 = vadd.f32 %v3169, %v3256
        %v3305 = vadd.f32 %v3170, %v3255
        %v3306 = vadd.f32 %v3171, %v3259
        %v3307 = vadd.f32 %v3172, %v3258
        %v3309 = vperm.slane %v453, 0
        %v3311 = vmul.f32 %v502, %v3309
        %v3312 = vmul.f32 %v507, %v3309
        %v3313 = vmul.f32 %v512, %v3309
        %v3314 = vmul.f32 %v517, %v3309
        %v3315 = vmul.f32 %v522, %v3309
        %v3316 = vmul.f32 %v527, %v3309
        %v3317 = vmul.f32 %v532, %v3309
        %v3318 = vmul.f32 %v537, %v3309
        %v3319 = vmul.f32 %v542, %v3309
        %v3320 = vmul.f32 %v547, %v3309
        %v3321 = vmul.f32 %v552, %v3309
        %v3322 = vmul.f32 %v557, %v3309
        %v3323 = vmul.f32 %v562, %v3309
        %v3324 = vmul.f32 %v567, %v3309
        %v3325 = vmul.f32 %v572, %v3309
        %v3326 = vmul.f32 %v577, %v3309
        %v3327 = vmul.f32 %v1177, %v3309
        %v3328 = vmul.f32 %v1182, %v3309
        %v3329 = vmul.f32 %v1778, %v3309
        %v3330 = vmul.f32 %v1783, %v3309
        %v3331 = vmul.f32 %v2379, %v3309
        %v3332 = vmul.f32 %v2384, %v3309
        %v3333 = vmul.f32 %v2980, %v3309
        %v3334 = vmul.f32 %v2985, %v3309
        %v3359 = vrot.slane %v3311, 3
        %v3360 = vrot.slane %v3312, 3
        %v3361 = vsel %vm953, %v3359, %v3360
        %v3362 = vrot.slane %v3313, 3
        %v3363 = vrot.slane %v3314, 3
        %v3364 = vsel %vm953, %v3362, %v3363
        %v3365 = vrot.slane %v3315, 3
        %v3366 = vrot.slane %v3316, 3
        %v3367 = vsel %vm953, %v3365, %v3366
        %v3368 = vrot.slane %v3317, 3
        %v3369 = vrot.slane %v3318, 3
        %v3370 = vsel %vm953, %v3368, %v3369
        %v3371 = vrot.slane %v3319, 3
        %v3372 = vrot.slane %v3320, 3
        %v3373 = vsel %vm953, %v3371, %v3372
        %v3374 = vrot.slane %v3321, 3
        %v3375 = vrot.slane %v3322, 3
        %v3376 = vsel %vm953, %v3374, %v3375
        %v3377 = vrot.slane %v3323, 3
        %v3378 = vrot.slane %v3324, 3
        %v3379 = vsel %vm953, %v3377, %v3378
        %v3380 = vrot.slane %v3325, 3
        %v3381 = vrot.slane %v3326, 3
        %v3382 = vsel %vm953, %v3380, %v3381
        %v3383 = vrot.slane %v3327, 3
        %v3384 = vrot.slane %v3328, 3
        %v3385 = vsel %vm953, %v3383, %v3384
        %v3386 = vrot.slane %v3329, 3
        %v3387 = vrot.slane %v3330, 3
        %v3388 = vsel %vm953, %v3386, %v3387
        %v3389 = vrot.slane %v3331, 3
        %v3390 = vrot.slane %v3332, 3
        %v3391 = vsel %vm953, %v3389, %v3390
        %v3392 = vrot.slane %v3333, 3
        %v3393 = vrot.slane %v3334, 3
        %v3394 = vsel %vm953, %v3392, %v3393
        %v3419 = vadd.f32 %v3284, %v3361
        %v3420 = vadd.f32 %v3285, %v3360
        %v3421 = vadd.f32 %v3286, %v3364
        %v3422 = vadd.f32 %v3287, %v3363
        %v3423 = vadd.f32 %v3288, %v3367
        %v3424 = vadd.f32 %v3289, %v3366
        %v3425 = vadd.f32 %v3290, %v3370
        %v3426 = vadd.f32 %v3291, %v3369
        %v3427 = vadd.f32 %v3292, %v3373
        %v3428 = vadd.f32 %v3293, %v3372
        %v3429 = vadd.f32 %v3294, %v3376
        %v3430 = vadd.f32 %v3295, %v3375
        %v3431 = vadd.f32 %v3296, %v3379
        %v3432 = vadd.f32 %v3297, %v3378
        %v3433 = vadd.f32 %v3298, %v3382
        %v3434 = vadd.f32 %v3299, %v3381
        %v3435 = vadd.f32 %v3300, %v3385
        %v3436 = vadd.f32 %v3301, %v3384
        %v3437 = vadd.f32 %v3302, %v3388
        %v3438 = vadd.f32 %v3303, %v3387
        %v3439 = vadd.f32 %v3304, %v3391
        %v3440 = vadd.f32 %v3305, %v3390
        %v3441 = vadd.f32 %v3306, %v3394
        %v3442 = vadd.f32 %v3307, %v3393
        %v3444 = vperm.slane %v454, 0
        %v3446 = vmul.f32 %v502, %v3444
        %v3447 = vmul.f32 %v507, %v3444
        %v3448 = vmul.f32 %v512, %v3444
        %v3449 = vmul.f32 %v517, %v3444
        %v3450 = vmul.f32 %v522, %v3444
        %v3451 = vmul.f32 %v527, %v3444
        %v3452 = vmul.f32 %v532, %v3444
        %v3453 = vmul.f32 %v537, %v3444
        %v3454 = vmul.f32 %v542, %v3444
        %v3455 = vmul.f32 %v547, %v3444
        %v3456 = vmul.f32 %v552, %v3444
        %v3457 = vmul.f32 %v557, %v3444
        %v3458 = vmul.f32 %v562, %v3444
        %v3459 = vmul.f32 %v567, %v3444
        %v3460 = vmul.f32 %v572, %v3444
        %v3461 = vmul.f32 %v577, %v3444
        %v3462 = vmul.f32 %v1177, %v3444
        %v3463 = vmul.f32 %v1182, %v3444
        %v3464 = vmul.f32 %v1778, %v3444
        %v3465 = vmul.f32 %v1783, %v3444
        %v3466 = vmul.f32 %v2379, %v3444
        %v3467 = vmul.f32 %v2384, %v3444
        %v3468 = vmul.f32 %v2980, %v3444
        %v3469 = vmul.f32 %v2985, %v3444
        %v3494 = vrot.slane %v3446, 4
        %v3495 = vrot.slane %v3447, 4
        %v3496 = vsel %vm1089, %v3494, %v3495
        %v3497 = vrot.slane %v3448, 4
        %v3498 = vrot.slane %v3449, 4
        %v3499 = vsel %vm1089, %v3497, %v3498
        %v3500 = vrot.slane %v3450, 4
        %v3501 = vrot.slane %v3451, 4
        %v3502 = vsel %vm1089, %v3500, %v3501
        %v3503 = vrot.slane %v3452, 4
        %v3504 = vrot.slane %v3453, 4
        %v3505 = vsel %vm1089, %v3503, %v3504
        %v3506 = vrot.slane %v3454, 4
        %v3507 = vrot.slane %v3455, 4
        %v3508 = vsel %vm1089, %v3506, %v3507
        %v3509 = vrot.slane %v3456, 4
        %v3510 = vrot.slane %v3457, 4
        %v3511 = vsel %vm1089, %v3509, %v3510
        %v3512 = vrot.slane %v3458, 4
        %v3513 = vrot.slane %v3459, 4
        %v3514 = vsel %vm1089, %v3512, %v3513
        %v3515 = vrot.slane %v3460, 4
        %v3516 = vrot.slane %v3461, 4
        %v3517 = vsel %vm1089, %v3515, %v3516
        %v3518 = vrot.slane %v3462, 4
        %v3519 = vrot.slane %v3463, 4
        %v3520 = vsel %vm1089, %v3518, %v3519
        %v3521 = vrot.slane %v3464, 4
        %v3522 = vrot.slane %v3465, 4
        %v3523 = vsel %vm1089, %v3521, %v3522
        %v3524 = vrot.slane %v3466, 4
        %v3525 = vrot.slane %v3467, 4
        %v3526 = vsel %vm1089, %v3524, %v3525
        %v3527 = vrot.slane %v3468, 4
        %v3528 = vrot.slane %v3469, 4
        %v3529 = vsel %vm1089, %v3527, %v3528
        %v3554 = vadd.f32 %v3419, %v3496
        %v3555 = vadd.f32 %v3420, %v3495
        %v3556 = vadd.f32 %v3421, %v3499
        %v3557 = vadd.f32 %v3422, %v3498
        %v3558 = vadd.f32 %v3423, %v3502
        %v3559 = vadd.f32 %v3424, %v3501
        %v3560 = vadd.f32 %v3425, %v3505
        %v3561 = vadd.f32 %v3426, %v3504
        %v3562 = vadd.f32 %v3427, %v3508
        %v3563 = vadd.f32 %v3428, %v3507
        %v3564 = vadd.f32 %v3429, %v3511
        %v3565 = vadd.f32 %v3430, %v3510
        %v3566 = vadd.f32 %v3431, %v3514
        %v3567 = vadd.f32 %v3432, %v3513
        %v3568 = vadd.f32 %v3433, %v3517
        %v3569 = vadd.f32 %v3434, %v3516
        %v3570 = vadd.f32 %v3435, %v3520
        %v3571 = vadd.f32 %v3436, %v3519
        %v3572 = vadd.f32 %v3437, %v3523
        %v3573 = vadd.f32 %v3438, %v3522
        %v3574 = vadd.f32 %v3439, %v3526
        %v3575 = vadd.f32 %v3440, %v3525
        %v3576 = vadd.f32 %v3441, %v3529
        %v3577 = vadd.f32 %v3442, %v3528
        %s3578 = sld [smem:[#allocation2]]
        %vm3579 = vcmp.gt.f32.partialorder %v3554, 0.0
        %vm3580 = vcmp.gt.f32.partialorder %v3555, 0.0
        %vm3581 = vcmp.gt.f32.partialorder %v3556, 0.0
        %vm3582 = vcmp.gt.f32.partialorder %v3557, 0.0
        %vm3583 = vcmp.gt.f32.partialorder %v3558, 0.0
        %vm3584 = vcmp.gt.f32.partialorder %v3559, 0.0
        %vm3585 = vcmp.gt.f32.partialorder %v3560, 0.0
        %vm3586 = vcmp.gt.f32.partialorder %v3561, 0.0
        %vm3587 = vcmp.gt.f32.partialorder %v3562, 0.0
        %vm3588 = vcmp.gt.f32.partialorder %v3563, 0.0
        %vm3589 = vcmp.gt.f32.partialorder %v3564, 0.0
        %vm3590 = vcmp.gt.f32.partialorder %v3565, 0.0
        %vm3591 = vcmp.gt.f32.partialorder %v3566, 0.0
        %vm3592 = vcmp.gt.f32.partialorder %v3567, 0.0
        %vm3593 = vcmp.gt.f32.partialorder %v3568, 0.0
        %vm3594 = vcmp.gt.f32.partialorder %v3569, 0.0
        %vm3595 = vcmp.gt.f32.partialorder %v3570, 0.0
        %vm3596 = vcmp.gt.f32.partialorder %v3571, 0.0
        %vm3597 = vcmp.gt.f32.partialorder %v3572, 0.0
        %vm3598 = vcmp.gt.f32.partialorder %v3573, 0.0
        %vm3599 = vcmp.gt.f32.partialorder %v3574, 0.0
        %vm3600 = vcmp.gt.f32.partialorder %v3575, 0.0
        %vm3601 = vcmp.gt.f32.partialorder %v3576, 0.0
        %vm3602 = vcmp.gt.f32.partialorder %v3577, 0.0
        %v3603 = vstv %s3578
        %v3604 = vmul.f32 %v3603, %v3554
        %v3605 = vmul.f32 %v3603, %v3555
        %v3606 = vmul.f32 %v3603, %v3556
        %v3607 = vmul.f32 %v3603, %v3557
        %v3608 = vmul.f32 %v3603, %v3558
        %v3609 = vmul.f32 %v3603, %v3559
        %v3610 = vmul.f32 %v3603, %v3560
        %v3611 = vmul.f32 %v3603, %v3561
        %v3612 = vmul.f32 %v3603, %v3562
        %v3613 = vmul.f32 %v3603, %v3563
        %v3614 = vmul.f32 %v3603, %v3564
        %v3615 = vmul.f32 %v3603, %v3565
        %v3616 = vmul.f32 %v3603, %v3566
        %v3617 = vmul.f32 %v3603, %v3567
        %v3618 = vmul.f32 %v3603, %v3568
        %v3619 = vmul.f32 %v3603, %v3569
        %v3620 = vmul.f32 %v3603, %v3570
        %v3621 = vmul.f32 %v3603, %v3571
        %v3622 = vmul.f32 %v3603, %v3572
        %v3623 = vmul.f32 %v3603, %v3573
        %v3624 = vmul.f32 %v3603, %v3574
        %v3625 = vmul.f32 %v3603, %v3575
        %v3626 = vmul.f32 %v3603, %v3576
        %v3627 = vmul.f32 %v3603, %v3577
        %v3628 = vsel %vm3579, %v3554, %v3604
        %v3629 = vsel %vm3580, %v3555, %v3605
        %v3630 = vsel %vm3581, %v3556, %v3606
        %v3631 = vsel %vm3582, %v3557, %v3607
        %v3632 = vsel %vm3583, %v3558, %v3608
        %v3633 = vsel %vm3584, %v3559, %v3609
        %v3634 = vsel %vm3585, %v3560, %v3610
        %v3635 = vsel %vm3586, %v3561, %v3611
        %v3636 = vsel %vm3587, %v3562, %v3612
        %v3637 = vsel %vm3588, %v3563, %v3613
        %v3638 = vsel %vm3589, %v3564, %v3614
        %v3639 = vsel %vm3590, %v3565, %v3615
        %v3640 = vsel %vm3591, %v3566, %v3616
        %v3641 = vsel %vm3592, %v3567, %v3617
        %v3642 = vsel %vm3593, %v3568, %v3618
        %v3643 = vsel %vm3594, %v3569, %v3619
        %v3644 = vsel %vm3595, %v3570, %v3620
        %v3645 = vsel %vm3596, %v3571, %v3621
        %v3646 = vsel %vm3597, %v3572, %v3622
        %v3647 = vsel %vm3598, %v3573, %v3623
        %v3648 = vsel %vm3599, %v3574, %v3624
        %v3649 = vsel %vm3600, %v3575, %v3625
        %v3650 = vsel %vm3601, %v3576, %v3626
        %v3651 = vsel %vm3602, %v3577, %v3627
        %v3664 = vrot.slane %v3628, 1
        %v3665 = vrot.slane %v3629, 1
        %v3666 = vsel %vm681, %v3664, %v3665
        %v3667 = vrot.slane %v3632, 1
        %v3668 = vrot.slane %v3633, 1
        %v3669 = vsel %vm681, %v3667, %v3668
        %v3670 = vrot.slane %v3636, 1
        %v3671 = vrot.slane %v3637, 1
        %v3672 = vsel %vm681, %v3670, %v3671
        %v3673 = vrot.slane %v3640, 1
        %v3674 = vrot.slane %v3641, 1
        %v3675 = vsel %vm681, %v3673, %v3674
        %v3676 = vrot.slane %v3644, 1
        %v3677 = vrot.slane %v3645, 1
        %v3678 = vsel %vm681, %v3676, %v3677
        %v3679 = vrot.slane %v3648, 1
        %v3680 = vrot.slane %v3649, 1
        %v3681 = vsel %vm681, %v3679, %v3680
        %v3694 = vmax.f32 %v3628, %v3666
        %v3695 = vmax.f32 %v3629, %v3665
        %v3696 = vmax.f32 %v3632, %v3669
        %v3697 = vmax.f32 %v3633, %v3668
        %v3698 = vmax.f32 %v3636, %v3672
        %v3699 = vmax.f32 %v3637, %v3671
        %v3700 = vmax.f32 %v3640, %v3675
        %v3701 = vmax.f32 %v3641, %v3674
        %v3702 = vmax.f32 %v3644, %v3678
        %v3703 = vmax.f32 %v3645, %v3677
        %v3704 = vmax.f32 %v3648, %v3681
        %v3705 = vmax.f32 %v3649, %v3680
        %v3718 = vrot.slane %v3630, 1
        %v3719 = vrot.slane %v3631, 1
        %v3720 = vsel %vm681, %v3718, %v3719
        %v3721 = vrot.slane %v3634, 1
        %v3722 = vrot.slane %v3635, 1
        %v3723 = vsel %vm681, %v3721, %v3722
        %v3724 = vrot.slane %v3638, 1
        %v3725 = vrot.slane %v3639, 1
        %v3726 = vsel %vm681, %v3724, %v3725
        %v3727 = vrot.slane %v3642, 1
        %v3728 = vrot.slane %v3643, 1
        %v3729 = vsel %vm681, %v3727, %v3728
        %v3730 = vrot.slane %v3646, 1
        %v3731 = vrot.slane %v3647, 1
        %v3732 = vsel %vm681, %v3730, %v3731
        %v3733 = vrot.slane %v3650, 1
        %v3734 = vrot.slane %v3651, 1
        %v3735 = vsel %vm681, %v3733, %v3734
        %v3748 = vmax.f32 %v3630, %v3720
        %v3749 = vmax.f32 %v3631, %v3719
        %v3750 = vmax.f32 %v3634, %v3723
        %v3751 = vmax.f32 %v3635, %v3722
        %v3752 = vmax.f32 %v3638, %v3726
        %v3753 = vmax.f32 %v3639, %v3725
        %v3754 = vmax.f32 %v3642, %v3729
        %v3755 = vmax.f32 %v3643, %v3728
        %v3756 = vmax.f32 %v3646, %v3732
        %v3757 = vmax.f32 %v3647, %v3731
        %v3758 = vmax.f32 %v3650, %v3735
        %v3759 = vmax.f32 %v3651, %v3734
        %v3760 = vmax.f32 %v3694, %v3748
        %v3761 = vmax.f32 %v3695, %v3749
        %v3762 = vmax.f32 %v3696, %v3750
        %v3763 = vmax.f32 %v3697, %v3751
        %v3764 = vmax.f32 %v3698, %v3752
        %v3765 = vmax.f32 %v3699, %v3753
        %v3766 = vmax.f32 %v3700, %v3754
        %v3767 = vmax.f32 %v3701, %v3755
        %v3768 = vmax.f32 %v3702, %v3756
        %v3769 = vmax.f32 %v3703, %v3757
        %v3770 = vmax.f32 %v3704, %v3758
        %v3771 = vmax.f32 %v3705, %v3759
        %v3772 = vld [vmem:[%s3] sm:$0x3f]
        %vm3773 = vcmask 89088
        %v3775 = vsel %vm3773, %v3772, 0
        %vm3777 = vcmask 1042432
        %v3779 = vsel %vm3777, %v3761, 0
        %3781 = vmatpush.msra.mxu0 0.0
        %3782 = vmatpush.msra.mxu0 0.0
        %3783 = vmatpush.msra.mxu0 0.0
        %3784 = vmatpush.msra.mxu0 0.0
        %3785 = vmatpush.msra.mxu0 0.0
        %3786 = vmatpush.msra.mxu0 0.0
        %3787 = vmatpush.msra.mxu0 0.0
        %3788 = vmatpush.msra.mxu0 0.0
        %3789 = vmatpush.msra.mxu0 0.0
        %3790 = vmatpush.msra.mxu0 0.0
        %3791 = vmatpush.msra.mxu0 0.0
        %3792 = vmatpush.msra.mxu0 0.0
        %3793 = vmatpush.msra.mxu0 0.0
        %3794 = vmatpush.msra.mxu0 0.0
        %3795 = vmatpush.msra.mxu0 %v3779
        %3796 = vmatpush.msra.mxu0 %v3760
        %3797 = vmatmul.f32.gmra.mxu0 %v3775
        %v3798 = vpop.f32.mrf.mxu0
        %v3799 = vadd.f32 0.0, %v3798
        %3800 = vdwg.mxu0
        %v3802 = vsel %vm3777, %v3763, 0
        %3804 = vmatpush.msra.mxu0 0.0
        %3805 = vmatpush.msra.mxu0 0.0
        %3806 = vmatpush.msra.mxu0 0.0
        %3807 = vmatpush.msra.mxu0 0.0
        %3808 = vmatpush.msra.mxu0 0.0
        %3809 = vmatpush.msra.mxu0 0.0
        %3810 = vmatpush.msra.mxu0 0.0
        %3811 = vmatpush.msra.mxu0 0.0
        %3812 = vmatpush.msra.mxu0 0.0
        %3813 = vmatpush.msra.mxu0 0.0
        %3814 = vmatpush.msra.mxu0 0.0
        %3815 = vmatpush.msra.mxu0 0.0
        %3816 = vmatpush.msra.mxu0 0.0
        %3817 = vmatpush.msra.mxu0 0.0
        %3818 = vmatpush.msra.mxu0 %v3802
        %3819 = vmatpush.msra.mxu0 %v3762
        %3820 = vmatmul.f32.gmra.mxu0 %v3775
        %v3821 = vpop.f32.mrf.mxu0
        %v3822 = vadd.f32 0.0, %v3821
        %3823 = vdwg.mxu0
        %v3825 = vsel %vm3777, %v3765, 0
        %3827 = vmatpush.msra.mxu0 0.0
        %3828 = vmatpush.msra.mxu0 0.0
        %3829 = vmatpush.msra.mxu0 0.0
        %3830 = vmatpush.msra.mxu0 0.0
        %3831 = vmatpush.msra.mxu0 0.0
        %3832 = vmatpush.msra.mxu0 0.0
        %3833 = vmatpush.msra.mxu0 0.0
        %3834 = vmatpush.msra.mxu0 0.0
        %3835 = vmatpush.msra.mxu0 0.0
        %3836 = vmatpush.msra.mxu0 0.0
        %3837 = vmatpush.msra.mxu0 0.0
        %3838 = vmatpush.msra.mxu0 0.0
        %3839 = vmatpush.msra.mxu0 0.0
        %3840 = vmatpush.msra.mxu0 0.0
        %3841 = vmatpush.msra.mxu0 %v3825
        %3842 = vmatpush.msra.mxu0 %v3764
        %3843 = vmatmul.f32.gmra.mxu0 %v3775
        %v3844 = vpop.f32.mrf.mxu0
        %v3845 = vadd.f32 0.0, %v3844
        %3846 = vdwg.mxu0
        %v3848 = vsel %vm3777, %v3767, 0
        %3850 = vmatpush.msra.mxu0 0.0
        %3851 = vmatpush.msra.mxu0 0.0
        %3852 = vmatpush.msra.mxu0 0.0
        %3853 = vmatpush.msra.mxu0 0.0
        %3854 = vmatpush.msra.mxu0 0.0
        %3855 = vmatpush.msra.mxu0 0.0
        %3856 = vmatpush.msra.mxu0 0.0
        %3857 = vmatpush.msra.mxu0 0.0
        %3858 = vmatpush.msra.mxu0 0.0
        %3859 = vmatpush.msra.mxu0 0.0
        %3860 = vmatpush.msra.mxu0 0.0
        %3861 = vmatpush.msra.mxu0 0.0
        %3862 = vmatpush.msra.mxu0 0.0
        %3863 = vmatpush.msra.mxu0 0.0
        %3864 = vmatpush.msra.mxu0 %v3848
        %3865 = vmatpush.msra.mxu0 %v3766
        %3866 = vmatmul.f32.gmra.mxu0 %v3775
        %v3867 = vpop.f32.mrf.mxu0
        %v3868 = vadd.f32 0.0, %v3867
        %3869 = vdwg.mxu0
        %v3871 = vsel %vm3777, %v3769, 0
        %3873 = vmatpush.msra.mxu0 0.0
        %3874 = vmatpush.msra.mxu0 0.0
        %3875 = vmatpush.msra.mxu0 0.0
        %3876 = vmatpush.msra.mxu0 0.0
        %3877 = vmatpush.msra.mxu0 0.0
        %3878 = vmatpush.msra.mxu0 0.0
        %3879 = vmatpush.msra.mxu0 0.0
        %3880 = vmatpush.msra.mxu0 0.0
        %3881 = vmatpush.msra.mxu0 0.0
        %3882 = vmatpush.msra.mxu0 0.0
        %3883 = vmatpush.msra.mxu0 0.0
        %3884 = vmatpush.msra.mxu0 0.0
        %3885 = vmatpush.msra.mxu0 0.0
        %3886 = vmatpush.msra.mxu0 0.0
        %3887 = vmatpush.msra.mxu0 %v3871
        %3888 = vmatpush.msra.mxu0 %v3768
        %3889 = vmatmul.f32.gmra.mxu0 %v3775
        %v3890 = vpop.f32.mrf.mxu0
        %v3891 = vadd.f32 0.0, %v3890
        %3892 = vdwg.mxu0
        %v3894 = vsel %vm3777, %v3771, 0
        %3896 = vmatpush.msra.mxu0 0.0
        %3897 = vmatpush.msra.mxu0 0.0
        %3898 = vmatpush.msra.mxu0 0.0
        %3899 = vmatpush.msra.mxu0 0.0
        %3900 = vmatpush.msra.mxu0 0.0
        %3901 = vmatpush.msra.mxu0 0.0
        %3902 = vmatpush.msra.mxu0 0.0
        %3903 = vmatpush.msra.mxu0 0.0
        %3904 = vmatpush.msra.mxu0 0.0
        %3905 = vmatpush.msra.mxu0 0.0
        %3906 = vmatpush.msra.mxu0 0.0
        %3907 = vmatpush.msra.mxu0 0.0
        %3908 = vmatpush.msra.mxu0 0.0
        %3909 = vmatpush.msra.mxu0 0.0
        %3910 = vmatpush.msra.mxu0 %v3894
        %3911 = vmatpush.msra.mxu0 %v3770
        %3912 = vmatmul.f32.gmra.mxu0 %v3775
        %v3913 = vpop.f32.mrf.mxu0
        %v3914 = vadd.f32 0.0, %v3913
        %3915 = vdwg.mxu0
        %v3916 = vld [vmem:[%s4] sm:$0xff]
        %v3917 = vld [vmem:[%s4 + $0x8] sm:$0xff]
        %v3918 = vld [vmem:[%s4 + $0x10] sm:$0xff]
        %v3919 = vld [vmem:[%s4 + $0x18] sm:$0xff]
        %v3920 = vld [vmem:[%s4 + $0x20] sm:$0xff]
        %v3921 = vld [vmem:[%s4 + $0x28] sm:$0xff]
        %v3922 = vld [vmem:[%s4 + $0x30] sm:$0xff]
        %v3923 = vld [vmem:[%s4 + $0x38] sm:$0xff]
        %v3924 = vld [vmem:[%s4 + $0x40] sm:$0xff]
        %v3925 = vld [vmem:[%s4 + $0x48] sm:$0xff]
        %v3926 = vld [vmem:[%s4 + $0x50] sm:$0xff]
        %v3927 = vld [vmem:[%s4 + $0x58] sm:$0xff]
        %v3928 = vld [vmem:[%s4 + $0x60] sm:$0xff]
        %v3929 = vld [vmem:[%s4 + $0x68] sm:$0xff]
        %v3930 = vld [vmem:[%s4 + $0x70] sm:$0xff]
        %v3931 = vld [vmem:[%s4 + $0x78] sm:$0xff]
        %v3932 = vld [vmem:[%s4 + $0x80] sm:$0xff]
        %v3933 = vld [vmem:[%s4 + $0x88] sm:$0xff]
        %v3934 = vld [vmem:[%s4 + $0x90] sm:$0xff]
        %v3935 = vld [vmem:[%s4 + $0x98] sm:$0xff]
        %v3936 = vld [vmem:[%s4 + $0xa0] sm:$0xff]
        %v3937 = vld [vmem:[%s4 + $0xa8] sm:$0xff]
        %v3938 = vld [vmem:[%s4 + $0xb0] sm:$0xff]
        %v3939 = vld [vmem:[%s4 + $0xb8] sm:$0xff]
        %v3940 = vld [vmem:[%s4 + $0xc0] sm:$0xff]
        %v3942 = vrot.slane %v3799, 1
        %vm3943 = vcmask 64512
        %v3944 = vsel %vm3943, %v3942, 0
        %3946 = vmatpush.msra.mxu0 0.0
        %3947 = vmatpush.msra.mxu0 0.0
        %3948 = vmatpush.msra.mxu0 0.0
        %3949 = vmatpush.msra.mxu0 0.0
        %3950 = vmatpush.msra.mxu0 0.0
        %3951 = vmatpush.msra.mxu0 0.0
        %3952 = vmatpush.msra.mxu0 0.0
        %3953 = vmatpush.msra.mxu0 0.0
        %3954 = vmatpush.msra.mxu0 0.0
        %3955 = vmatpush.msra.mxu0 0.0
        %3956 = vmatpush.msra.mxu0 0.0
        %3957 = vmatpush.msra.mxu0 0.0
        %3958 = vmatpush.msra.mxu0 0.0
        %3959 = vmatpush.msra.mxu0 0.0
        %3960 = vmatpush.msra.mxu0 0.0
        %3961 = vmatpush.msra.mxu0 %v3917
        %3962 = vmatmul.f32.gmra.mxu0 %v3944
        %v3963 = vpop.f32.mrf.mxu0
        %v3964 = vadd.f32 0.0, %v3963
        %3965 = vdwg.mxu0
        %v3967 = vrot.slane %v3822, 1
        %v3968 = vsel %vm3943, %v3967, 0
        %3970 = vmatpush.msra.mxu0 0.0
        %3971 = vmatpush.msra.mxu0 0.0
        %3972 = vmatpush.msra.mxu0 0.0
        %3973 = vmatpush.msra.mxu0 0.0
        %3974 = vmatpush.msra.mxu0 0.0
        %3975 = vmatpush.msra.mxu0 0.0
        %3976 = vmatpush.msra.mxu0 0.0
        %3977 = vmatpush.msra.mxu0 0.0
        %3978 = vmatpush.msra.mxu0 0.0
        %3979 = vmatpush.msra.mxu0 0.0
        %3980 = vmatpush.msra.mxu0 0.0
        %3981 = vmatpush.msra.mxu0 0.0
        %3982 = vmatpush.msra.mxu0 0.0
        %3983 = vmatpush.msra.mxu0 0.0
        %3984 = vmatpush.msra.mxu0 0.0
        %3985 = vmatpush.msra.mxu0 %v3917
        %3986 = vmatmul.f32.gmra.mxu0 %v3968
        %v3987 = vpop.f32.mrf.mxu0
        %v3988 = vadd.f32 0.0, %v3987
        %3989 = vdwg.mxu0
        %v3990 = vsel %vm3943, %v3799, 0
        %3992 = vmatpush.msra.mxu0 0.0
        %3993 = vmatpush.msra.mxu0 0.0
        %3994 = vmatpush.msra.mxu0 0.0
        %3995 = vmatpush.msra.mxu0 0.0
        %3996 = vmatpush.msra.mxu0 0.0
        %3997 = vmatpush.msra.mxu0 0.0
        %3998 = vmatpush.msra.mxu0 0.0
        %3999 = vmatpush.msra.mxu0 0.0
        %4000 = vmatpush.msra.mxu0 0.0
        %4001 = vmatpush.msra.mxu0 0.0
        %4002 = vmatpush.msra.mxu0 0.0
        %4003 = vmatpush.msra.mxu0 0.0
        %4004 = vmatpush.msra.mxu0 0.0
        %4005 = vmatpush.msra.mxu0 0.0
        %4006 = vmatpush.msra.mxu0 0.0
        %4007 = vmatpush.msra.mxu0 %v3916
        %4008 = vmatmul.f32.gmra.mxu0 %v3990
        %v4009 = vpop.f32.mrf.mxu0
        %v4010 = vadd.f32 %v3964, %v4009
        %4011 = vdwg.mxu0
        %v4012 = vsel %vm3943, %v3822, 0
        %4014 = vmatpush.msra.mxu0 0.0
        %4015 = vmatpush.msra.mxu0 0.0
        %4016 = vmatpush.msra.mxu0 0.0
        %4017 = vmatpush.msra.mxu0 0.0
        %4018 = vmatpush.msra.mxu0 0.0
        %4019 = vmatpush.msra.mxu0 0.0
        %4020 = vmatpush.msra.mxu0 0.0
        %4021 = vmatpush.msra.mxu0 0.0
        %4022 = vmatpush.msra.mxu0 0.0
        %4023 = vmatpush.msra.mxu0 0.0
        %4024 = vmatpush.msra.mxu0 0.0
        %4025 = vmatpush.msra.mxu0 0.0
        %4026 = vmatpush.msra.mxu0 0.0
        %4027 = vmatpush.msra.mxu0 0.0
        %4028 = vmatpush.msra.mxu0 0.0
        %4029 = vmatpush.msra.mxu0 %v3916
        %4030 = vmatmul.f32.gmra.mxu0 %v4012
        %v4031 = vpop.f32.mrf.mxu0
        %v4032 = vadd.f32 %v3988, %v4031
        %4033 = vdwg.mxu0
        %v4034 = vrot.slane %v3799, 2
        %v4035 = vsel %vm3943, %v4034, 0
        %4037 = vmatpush.msra.mxu0 0.0
        %4038 = vmatpush.msra.mxu0 0.0
        %4039 = vmatpush.msra.mxu0 0.0
        %4040 = vmatpush.msra.mxu0 0.0
        %4041 = vmatpush.msra.mxu0 0.0
        %4042 = vmatpush.msra.mxu0 0.0
        %4043 = vmatpush.msra.mxu0 0.0
        %4044 = vmatpush.msra.mxu0 0.0
        %4045 = vmatpush.msra.mxu0 0.0
        %4046 = vmatpush.msra.mxu0 0.0
        %4047 = vmatpush.msra.mxu0 0.0
        %4048 = vmatpush.msra.mxu0 0.0
        %4049 = vmatpush.msra.mxu0 0.0
        %4050 = vmatpush.msra.mxu0 0.0
        %4051 = vmatpush.msra.mxu0 0.0
        %4052 = vmatpush.msra.mxu0 %v3918
        %4053 = vmatmul.f32.gmra.mxu0 %v4035
        %v4054 = vpop.f32.mrf.mxu0
        %v4055 = vadd.f32 0.0, %v4054
        %4056 = vdwg.mxu0
        %v4057 = vrot.slane %v3822, 2
        %v4058 = vsel %vm3943, %v4057, 0
        %4060 = vmatpush.msra.mxu0 0.0
        %4061 = vmatpush.msra.mxu0 0.0
        %4062 = vmatpush.msra.mxu0 0.0
        %4063 = vmatpush.msra.mxu0 0.0
        %4064 = vmatpush.msra.mxu0 0.0
        %4065 = vmatpush.msra.mxu0 0.0
        %4066 = vmatpush.msra.mxu0 0.0
        %4067 = vmatpush.msra.mxu0 0.0
        %4068 = vmatpush.msra.mxu0 0.0
        %4069 = vmatpush.msra.mxu0 0.0
        %4070 = vmatpush.msra.mxu0 0.0
        %4071 = vmatpush.msra.mxu0 0.0
        %4072 = vmatpush.msra.mxu0 0.0
        %4073 = vmatpush.msra.mxu0 0.0
        %4074 = vmatpush.msra.mxu0 0.0
        %4075 = vmatpush.msra.mxu0 %v3918
        %4076 = vmatmul.f32.gmra.mxu0 %v4058
        %v4077 = vpop.f32.mrf.mxu0
        %v4078 = vadd.f32 0.0, %v4077
        %4079 = vdwg.mxu0
        %v4080 = vadd.f32 %v4010, %v4055
        %v4081 = vadd.f32 %v4032, %v4078
        %v4082 = vrot.slane %v3799, 3
        %v4083 = vsel %vm3943, %v4082, 0
        %4085 = vmatpush.msra.mxu0 0.0
        %4086 = vmatpush.msra.mxu0 0.0
        %4087 = vmatpush.msra.mxu0 0.0
        %4088 = vmatpush.msra.mxu0 0.0
        %4089 = vmatpush.msra.mxu0 0.0
        %4090 = vmatpush.msra.mxu0 0.0
        %4091 = vmatpush.msra.mxu0 0.0
        %4092 = vmatpush.msra.mxu0 0.0
        %4093 = vmatpush.msra.mxu0 0.0
        %4094 = vmatpush.msra.mxu0 0.0
        %4095 = vmatpush.msra.mxu0 0.0
        %4096 = vmatpush.msra.mxu0 0.0
        %4097 = vmatpush.msra.mxu0 0.0
        %4098 = vmatpush.msra.mxu0 0.0
        %4099 = vmatpush.msra.mxu0 0.0
        %4100 = vmatpush.msra.mxu0 %v3919
        %4101 = vmatmul.f32.gmra.mxu0 %v4083
        %v4102 = vpop.f32.mrf.mxu0
        %v4103 = vadd.f32 0.0, %v4102
        %4104 = vdwg.mxu0
        %v4105 = vrot.slane %v3822, 3
        %v4106 = vsel %vm3943, %v4105, 0
        %4108 = vmatpush.msra.mxu0 0.0
        %4109 = vmatpush.msra.mxu0 0.0
        %4110 = vmatpush.msra.mxu0 0.0
        %4111 = vmatpush.msra.mxu0 0.0
        %4112 = vmatpush.msra.mxu0 0.0
        %4113 = vmatpush.msra.mxu0 0.0
        %4114 = vmatpush.msra.mxu0 0.0
        %4115 = vmatpush.msra.mxu0 0.0
        %4116 = vmatpush.msra.mxu0 0.0
        %4117 = vmatpush.msra.mxu0 0.0
        %4118 = vmatpush.msra.mxu0 0.0
        %4119 = vmatpush.msra.mxu0 0.0
        %4120 = vmatpush.msra.mxu0 0.0
        %4121 = vmatpush.msra.mxu0 0.0
        %4122 = vmatpush.msra.mxu0 0.0
        %4123 = vmatpush.msra.mxu0 %v3919
        %4124 = vmatmul.f32.gmra.mxu0 %v4106
        %v4125 = vpop.f32.mrf.mxu0
        %v4126 = vadd.f32 0.0, %v4125
        %4127 = vdwg.mxu0
        %v4128 = vadd.f32 %v4080, %v4103
        %v4129 = vadd.f32 %v4081, %v4126
        %v4130 = vrot.slane %v3799, 4
        %v4131 = vsel %vm3943, %v4130, 0
        %4133 = vmatpush.msra.mxu0 0.0
        %4134 = vmatpush.msra.mxu0 0.0
        %4135 = vmatpush.msra.mxu0 0.0
        %4136 = vmatpush.msra.mxu0 0.0
        %4137 = vmatpush.msra.mxu0 0.0
        %4138 = vmatpush.msra.mxu0 0.0
        %4139 = vmatpush.msra.mxu0 0.0
        %4140 = vmatpush.msra.mxu0 0.0
        %4141 = vmatpush.msra.mxu0 0.0
        %4142 = vmatpush.msra.mxu0 0.0
        %4143 = vmatpush.msra.mxu0 0.0
        %4144 = vmatpush.msra.mxu0 0.0
        %4145 = vmatpush.msra.mxu0 0.0
        %4146 = vmatpush.msra.mxu0 0.0
        %4147 = vmatpush.msra.mxu0 0.0
        %4148 = vmatpush.msra.mxu0 %v3920
        %4149 = vmatmul.f32.gmra.mxu0 %v4131
        %v4150 = vpop.f32.mrf.mxu0
        %v4151 = vadd.f32 0.0, %v4150
        %4152 = vdwg.mxu0
        %v4153 = vrot.slane %v3822, 4
        %v4154 = vsel %vm3943, %v4153, 0
        %4156 = vmatpush.msra.mxu0 0.0
        %4157 = vmatpush.msra.mxu0 0.0
        %4158 = vmatpush.msra.mxu0 0.0
        %4159 = vmatpush.msra.mxu0 0.0
        %4160 = vmatpush.msra.mxu0 0.0
        %4161 = vmatpush.msra.mxu0 0.0
        %4162 = vmatpush.msra.mxu0 0.0
        %4163 = vmatpush.msra.mxu0 0.0
        %4164 = vmatpush.msra.mxu0 0.0
        %4165 = vmatpush.msra.mxu0 0.0
        %4166 = vmatpush.msra.mxu0 0.0
        %4167 = vmatpush.msra.mxu0 0.0
        %4168 = vmatpush.msra.mxu0 0.0
        %4169 = vmatpush.msra.mxu0 0.0
        %4170 = vmatpush.msra.mxu0 0.0
        %4171 = vmatpush.msra.mxu0 %v3920
        %4172 = vmatmul.f32.gmra.mxu0 %v4154
        %v4173 = vpop.f32.mrf.mxu0
        %v4174 = vadd.f32 0.0, %v4173
        %4175 = vdwg.mxu0
        %v4176 = vadd.f32 %v4128, %v4151
        %v4177 = vadd.f32 %v4129, %v4174
        %4178 = vmatpush.msra.mxu0 0.0
        %4179 = vmatpush.msra.mxu0 0.0
        %4180 = vmatpush.msra.mxu0 0.0
        %4181 = vmatpush.msra.mxu0 0.0
        %4182 = vmatpush.msra.mxu0 0.0
        %4183 = vmatpush.msra.mxu0 0.0
        %4184 = vmatpush.msra.mxu0 0.0
        %4185 = vmatpush.msra.mxu0 0.0
        %4186 = vmatpush.msra.mxu0 0.0
        %4187 = vmatpush.msra.mxu0 0.0
        %4188 = vmatpush.msra.mxu0 0.0
        %4189 = vmatpush.msra.mxu0 0.0
        %4190 = vmatpush.msra.mxu0 0.0
        %4191 = vmatpush.msra.mxu0 0.0
        %4192 = vmatpush.msra.mxu0 0.0
        %4193 = vmatpush.msra.mxu0 %v3921
        %4194 = vmatmul.f32.gmra.mxu0 %v4012
        %v4195 = vpop.f32.mrf.mxu0
        %v4196 = vadd.f32 0.0, %v4195
        %4197 = vdwg.mxu0
        %v4199 = vsel %vm3943, %v3845, 0
        %4201 = vmatpush.msra.mxu0 0.0
        %4202 = vmatpush.msra.mxu0 0.0
        %4203 = vmatpush.msra.mxu0 0.0
        %4204 = vmatpush.msra.mxu0 0.0
        %4205 = vmatpush.msra.mxu0 0.0
        %4206 = vmatpush.msra.mxu0 0.0
        %4207 = vmatpush.msra.mxu0 0.0
        %4208 = vmatpush.msra.mxu0 0.0
        %4209 = vmatpush.msra.mxu0 0.0
        %4210 = vmatpush.msra.mxu0 0.0
        %4211 = vmatpush.msra.mxu0 0.0
        %4212 = vmatpush.msra.mxu0 0.0
        %4213 = vmatpush.msra.mxu0 0.0
        %4214 = vmatpush.msra.mxu0 0.0
        %4215 = vmatpush.msra.mxu0 0.0
        %4216 = vmatpush.msra.mxu0 %v3921
        %4217 = vmatmul.f32.gmra.mxu0 %v4199
        %v4218 = vpop.f32.mrf.mxu0
        %v4219 = vadd.f32 0.0, %v4218
        %4220 = vdwg.mxu0
        %v4221 = vadd.f32 %v4176, %v4196
        %v4222 = vadd.f32 %v4177, %v4219
        %4223 = vmatpush.msra.mxu0 0.0
        %4224 = vmatpush.msra.mxu0 0.0
        %4225 = vmatpush.msra.mxu0 0.0
        %4226 = vmatpush.msra.mxu0 0.0
        %4227 = vmatpush.msra.mxu0 0.0
        %4228 = vmatpush.msra.mxu0 0.0
        %4229 = vmatpush.msra.mxu0 0.0
        %4230 = vmatpush.msra.mxu0 0.0
        %4231 = vmatpush.msra.mxu0 0.0
        %4232 = vmatpush.msra.mxu0 0.0
        %4233 = vmatpush.msra.mxu0 0.0
        %4234 = vmatpush.msra.mxu0 0.0
        %4235 = vmatpush.msra.mxu0 0.0
        %4236 = vmatpush.msra.mxu0 0.0
        %4237 = vmatpush.msra.mxu0 0.0
        %4238 = vmatpush.msra.mxu0 %v3922
        %4239 = vmatmul.f32.gmra.mxu0 %v3968
        %v4240 = vpop.f32.mrf.mxu0
        %v4241 = vadd.f32 0.0, %v4240
        %4242 = vdwg.mxu0
        %v4243 = vrot.slane %v3845, 1
        %v4244 = vsel %vm3943, %v4243, 0
        %4246 = vmatpush.msra.mxu0 0.0
        %4247 = vmatpush.msra.mxu0 0.0
        %4248 = vmatpush.msra.mxu0 0.0
        %4249 = vmatpush.msra.mxu0 0.0
        %4250 = vmatpush.msra.mxu0 0.0
        %4251 = vmatpush.msra.mxu0 0.0
        %4252 = vmatpush.msra.mxu0 0.0
        %4253 = vmatpush.msra.mxu0 0.0
        %4254 = vmatpush.msra.mxu0 0.0
        %4255 = vmatpush.msra.mxu0 0.0
        %4256 = vmatpush.msra.mxu0 0.0
        %4257 = vmatpush.msra.mxu0 0.0
        %4258 = vmatpush.msra.mxu0 0.0
        %4259 = vmatpush.msra.mxu0 0.0
        %4260 = vmatpush.msra.mxu0 0.0
        %4261 = vmatpush.msra.mxu0 %v3922
        %4262 = vmatmul.f32.gmra.mxu0 %v4244
        %v4263 = vpop.f32.mrf.mxu0
        %v4264 = vadd.f32 0.0, %v4263
        %4265 = vdwg.mxu0
        %v4266 = vadd.f32 %v4221, %v4241
        %v4267 = vadd.f32 %v4222, %v4264
        %4268 = vmatpush.msra.mxu0 0.0
        %4269 = vmatpush.msra.mxu0 0.0
        %4270 = vmatpush.msra.mxu0 0.0
        %4271 = vmatpush.msra.mxu0 0.0
        %4272 = vmatpush.msra.mxu0 0.0
        %4273 = vmatpush.msra.mxu0 0.0
        %4274 = vmatpush.msra.mxu0 0.0
        %4275 = vmatpush.msra.mxu0 0.0
        %4276 = vmatpush.msra.mxu0 0.0
        %4277 = vmatpush.msra.mxu0 0.0
        %4278 = vmatpush.msra.mxu0 0.0
        %4279 = vmatpush.msra.mxu0 0.0
        %4280 = vmatpush.msra.mxu0 0.0
        %4281 = vmatpush.msra.mxu0 0.0
        %4282 = vmatpush.msra.mxu0 0.0
        %4283 = vmatpush.msra.mxu0 %v3923
        %4284 = vmatmul.f32.gmra.mxu0 %v4058
        %v4285 = vpop.f32.mrf.mxu0
        %v4286 = vadd.f32 0.0, %v4285
        %4287 = vdwg.mxu0
        %v4288 = vrot.slane %v3845, 2
        %v4289 = vsel %vm3943, %v4288, 0
        %4291 = vmatpush.msra.mxu0 0.0
        %4292 = vmatpush.msra.mxu0 0.0
        %4293 = vmatpush.msra.mxu0 0.0
        %4294 = vmatpush.msra.mxu0 0.0
        %4295 = vmatpush.msra.mxu0 0.0
        %4296 = vmatpush.msra.mxu0 0.0
        %4297 = vmatpush.msra.mxu0 0.0
        %4298 = vmatpush.msra.mxu0 0.0
        %4299 = vmatpush.msra.mxu0 0.0
        %4300 = vmatpush.msra.mxu0 0.0
        %4301 = vmatpush.msra.mxu0 0.0
        %4302 = vmatpush.msra.mxu0 0.0
        %4303 = vmatpush.msra.mxu0 0.0
        %4304 = vmatpush.msra.mxu0 0.0
        %4305 = vmatpush.msra.mxu0 0.0
        %4306 = vmatpush.msra.mxu0 %v3923
        %4307 = vmatmul.f32.gmra.mxu0 %v4289
        %v4308 = vpop.f32.mrf.mxu0
        %v4309 = vadd.f32 0.0, %v4308
        %4310 = vdwg.mxu0
        %v4311 = vadd.f32 %v4266, %v4286
        %v4312 = vadd.f32 %v4267, %v4309
        %4313 = vmatpush.msra.mxu0 0.0
        %4314 = vmatpush.msra.mxu0 0.0
        %4315 = vmatpush.msra.mxu0 0.0
        %4316 = vmatpush.msra.mxu0 0.0
        %4317 = vmatpush.msra.mxu0 0.0
        %4318 = vmatpush.msra.mxu0 0.0
        %4319 = vmatpush.msra.mxu0 0.0
        %4320 = vmatpush.msra.mxu0 0.0
        %4321 = vmatpush.msra.mxu0 0.0
        %4322 = vmatpush.msra.mxu0 0.0
        %4323 = vmatpush.msra.mxu0 0.0
        %4324 = vmatpush.msra.mxu0 0.0
        %4325 = vmatpush.msra.mxu0 0.0
        %4326 = vmatpush.msra.mxu0 0.0
        %4327 = vmatpush.msra.mxu0 0.0
        %4328 = vmatpush.msra.mxu0 %v3924
        %4329 = vmatmul.f32.gmra.mxu0 %v4106
        %v4330 = vpop.f32.mrf.mxu0
        %v4331 = vadd.f32 0.0, %v4330
        %4332 = vdwg.mxu0
        %v4333 = vrot.slane %v3845, 3
        %v4334 = vsel %vm3943, %v4333, 0
        %4336 = vmatpush.msra.mxu0 0.0
        %4337 = vmatpush.msra.mxu0 0.0
        %4338 = vmatpush.msra.mxu0 0.0
        %4339 = vmatpush.msra.mxu0 0.0
        %4340 = vmatpush.msra.mxu0 0.0
        %4341 = vmatpush.msra.mxu0 0.0
        %4342 = vmatpush.msra.mxu0 0.0
        %4343 = vmatpush.msra.mxu0 0.0
        %4344 = vmatpush.msra.mxu0 0.0
        %4345 = vmatpush.msra.mxu0 0.0
        %4346 = vmatpush.msra.mxu0 0.0
        %4347 = vmatpush.msra.mxu0 0.0
        %4348 = vmatpush.msra.mxu0 0.0
        %4349 = vmatpush.msra.mxu0 0.0
        %4350 = vmatpush.msra.mxu0 0.0
        %4351 = vmatpush.msra.mxu0 %v3924
        %4352 = vmatmul.f32.gmra.mxu0 %v4334
        %v4353 = vpop.f32.mrf.mxu0
        %v4354 = vadd.f32 0.0, %v4353
        %4355 = vdwg.mxu0
        %v4356 = vadd.f32 %v4311, %v4331
        %v4357 = vadd.f32 %v4312, %v4354
        %4358 = vmatpush.msra.mxu0 0.0
        %4359 = vmatpush.msra.mxu0 0.0
        %4360 = vmatpush.msra.mxu0 0.0
        %4361 = vmatpush.msra.mxu0 0.0
        %4362 = vmatpush.msra.mxu0 0.0
        %4363 = vmatpush.msra.mxu0 0.0
        %4364 = vmatpush.msra.mxu0 0.0
        %4365 = vmatpush.msra.mxu0 0.0
        %4366 = vmatpush.msra.mxu0 0.0
        %4367 = vmatpush.msra.mxu0 0.0
        %4368 = vmatpush.msra.mxu0 0.0
        %4369 = vmatpush.msra.mxu0 0.0
        %4370 = vmatpush.msra.mxu0 0.0
        %4371 = vmatpush.msra.mxu0 0.0
        %4372 = vmatpush.msra.mxu0 0.0
        %4373 = vmatpush.msra.mxu0 %v3925
        %4374 = vmatmul.f32.gmra.mxu0 %v4154
        %v4375 = vpop.f32.mrf.mxu0
        %v4376 = vadd.f32 0.0, %v4375
        %4377 = vdwg.mxu0
        %v4378 = vrot.slane %v3845, 4
        %v4379 = vsel %vm3943, %v4378, 0
        %4381 = vmatpush.msra.mxu0 0.0
        %4382 = vmatpush.msra.mxu0 0.0
        %4383 = vmatpush.msra.mxu0 0.0
        %4384 = vmatpush.msra.mxu0 0.0
        %4385 = vmatpush.msra.mxu0 0.0
        %4386 = vmatpush.msra.mxu0 0.0
        %4387 = vmatpush.msra.mxu0 0.0
        %4388 = vmatpush.msra.mxu0 0.0
        %4389 = vmatpush.msra.mxu0 0.0
        %4390 = vmatpush.msra.mxu0 0.0
        %4391 = vmatpush.msra.mxu0 0.0
        %4392 = vmatpush.msra.mxu0 0.0
        %4393 = vmatpush.msra.mxu0 0.0
        %4394 = vmatpush.msra.mxu0 0.0
        %4395 = vmatpush.msra.mxu0 0.0
        %4396 = vmatpush.msra.mxu0 %v3925
        %4397 = vmatmul.f32.gmra.mxu0 %v4379
        %v4398 = vpop.f32.mrf.mxu0
        %v4399 = vadd.f32 0.0, %v4398
        %4400 = vdwg.mxu0
        %v4401 = vadd.f32 %v4356, %v4376
        %v4402 = vadd.f32 %v4357, %v4399
        %4403 = vmatpush.msra.mxu0 0.0
        %4404 = vmatpush.msra.mxu0 0.0
        %4405 = vmatpush.msra.mxu0 0.0
        %4406 = vmatpush.msra.mxu0 0.0
        %4407 = vmatpush.msra.mxu0 0.0
        %4408 = vmatpush.msra.mxu0 0.0
        %4409 = vmatpush.msra.mxu0 0.0
        %4410 = vmatpush.msra.mxu0 0.0
        %4411 = vmatpush.msra.mxu0 0.0
        %4412 = vmatpush.msra.mxu0 0.0
        %4413 = vmatpush.msra.mxu0 0.0
        %4414 = vmatpush.msra.mxu0 0.0
        %4415 = vmatpush.msra.mxu0 0.0
        %4416 = vmatpush.msra.mxu0 0.0
        %4417 = vmatpush.msra.mxu0 0.0
        %4418 = vmatpush.msra.mxu0 %v3926
        %4419 = vmatmul.f32.gmra.mxu0 %v4199
        %v4420 = vpop.f32.mrf.mxu0
        %v4421 = vadd.f32 0.0, %v4420
        %4422 = vdwg.mxu0
        %v4424 = vsel %vm3943, %v3868, 0
        %4426 = vmatpush.msra.mxu0 0.0
        %4427 = vmatpush.msra.mxu0 0.0
        %4428 = vmatpush.msra.mxu0 0.0
        %4429 = vmatpush.msra.mxu0 0.0
        %4430 = vmatpush.msra.mxu0 0.0
        %4431 = vmatpush.msra.mxu0 0.0
        %4432 = vmatpush.msra.mxu0 0.0
        %4433 = vmatpush.msra.mxu0 0.0
        %4434 = vmatpush.msra.mxu0 0.0
        %4435 = vmatpush.msra.mxu0 0.0
        %4436 = vmatpush.msra.mxu0 0.0
        %4437 = vmatpush.msra.mxu0 0.0
        %4438 = vmatpush.msra.mxu0 0.0
        %4439 = vmatpush.msra.mxu0 0.0
        %4440 = vmatpush.msra.mxu0 0.0
        %4441 = vmatpush.msra.mxu0 %v3926
        %4442 = vmatmul.f32.gmra.mxu0 %v4424
        %v4443 = vpop.f32.mrf.mxu0
        %v4444 = vadd.f32 0.0, %v4443
        %4445 = vdwg.mxu0
        %v4446 = vadd.f32 %v4401, %v4421
        %v4447 = vadd.f32 %v4402, %v4444
        %4448 = vmatpush.msra.mxu0 0.0
        %4449 = vmatpush.msra.mxu0 0.0
        %4450 = vmatpush.msra.mxu0 0.0
        %4451 = vmatpush.msra.mxu0 0.0
        %4452 = vmatpush.msra.mxu0 0.0
        %4453 = vmatpush.msra.mxu0 0.0
        %4454 = vmatpush.msra.mxu0 0.0
        %4455 = vmatpush.msra.mxu0 0.0
        %4456 = vmatpush.msra.mxu0 0.0
        %4457 = vmatpush.msra.mxu0 0.0
        %4458 = vmatpush.msra.mxu0 0.0
        %4459 = vmatpush.msra.mxu0 0.0
        %4460 = vmatpush.msra.mxu0 0.0
        %4461 = vmatpush.msra.mxu0 0.0
        %4462 = vmatpush.msra.mxu0 0.0
        %4463 = vmatpush.msra.mxu0 %v3927
        %4464 = vmatmul.f32.gmra.mxu0 %v4244
        %v4465 = vpop.f32.mrf.mxu0
        %v4466 = vadd.f32 0.0, %v4465
        %4467 = vdwg.mxu0
        %v4468 = vrot.slane %v3868, 1
        %v4469 = vsel %vm3943, %v4468, 0
        %4471 = vmatpush.msra.mxu0 0.0
        %4472 = vmatpush.msra.mxu0 0.0
        %4473 = vmatpush.msra.mxu0 0.0
        %4474 = vmatpush.msra.mxu0 0.0
        %4475 = vmatpush.msra.mxu0 0.0
        %4476 = vmatpush.msra.mxu0 0.0
        %4477 = vmatpush.msra.mxu0 0.0
        %4478 = vmatpush.msra.mxu0 0.0
        %4479 = vmatpush.msra.mxu0 0.0
        %4480 = vmatpush.msra.mxu0 0.0
        %4481 = vmatpush.msra.mxu0 0.0
        %4482 = vmatpush.msra.mxu0 0.0
        %4483 = vmatpush.msra.mxu0 0.0
        %4484 = vmatpush.msra.mxu0 0.0
        %4485 = vmatpush.msra.mxu0 0.0
        %4486 = vmatpush.msra.mxu0 %v3927
        %4487 = vmatmul.f32.gmra.mxu0 %v4469
        %v4488 = vpop.f32.mrf.mxu0
        %v4489 = vadd.f32 0.0, %v4488
        %4490 = vdwg.mxu0
        %v4491 = vadd.f32 %v4446, %v4466
        %v4492 = vadd.f32 %v4447, %v4489
        %4493 = vmatpush.msra.mxu0 0.0
        %4494 = vmatpush.msra.mxu0 0.0
        %4495 = vmatpush.msra.mxu0 0.0
        %4496 = vmatpush.msra.mxu0 0.0
        %4497 = vmatpush.msra.mxu0 0.0
        %4498 = vmatpush.msra.mxu0 0.0
        %4499 = vmatpush.msra.mxu0 0.0
        %4500 = vmatpush.msra.mxu0 0.0
        %4501 = vmatpush.msra.mxu0 0.0
        %4502 = vmatpush.msra.mxu0 0.0
        %4503 = vmatpush.msra.mxu0 0.0
        %4504 = vmatpush.msra.mxu0 0.0
        %4505 = vmatpush.msra.mxu0 0.0
        %4506 = vmatpush.msra.mxu0 0.0
        %4507 = vmatpush.msra.mxu0 0.0
        %4508 = vmatpush.msra.mxu0 %v3928
        %4509 = vmatmul.f32.gmra.mxu0 %v4289
        %v4510 = vpop.f32.mrf.mxu0
        %v4511 = vadd.f32 0.0, %v4510
        %4512 = vdwg.mxu0
        %v4513 = vrot.slane %v3868, 2
        %v4514 = vsel %vm3943, %v4513, 0
        %4516 = vmatpush.msra.mxu0 0.0
        %4517 = vmatpush.msra.mxu0 0.0
        %4518 = vmatpush.msra.mxu0 0.0
        %4519 = vmatpush.msra.mxu0 0.0
        %4520 = vmatpush.msra.mxu0 0.0
        %4521 = vmatpush.msra.mxu0 0.0
        %4522 = vmatpush.msra.mxu0 0.0
        %4523 = vmatpush.msra.mxu0 0.0
        %4524 = vmatpush.msra.mxu0 0.0
        %4525 = vmatpush.msra.mxu0 0.0
        %4526 = vmatpush.msra.mxu0 0.0
        %4527 = vmatpush.msra.mxu0 0.0
        %4528 = vmatpush.msra.mxu0 0.0
        %4529 = vmatpush.msra.mxu0 0.0
        %4530 = vmatpush.msra.mxu0 0.0
        %4531 = vmatpush.msra.mxu0 %v3928
        %4532 = vmatmul.f32.gmra.mxu0 %v4514
        %v4533 = vpop.f32.mrf.mxu0
        %v4534 = vadd.f32 0.0, %v4533
        %4535 = vdwg.mxu0
        %v4536 = vadd.f32 %v4491, %v4511
        %v4537 = vadd.f32 %v4492, %v4534
        %4538 = vmatpush.msra.mxu0 0.0
        %4539 = vmatpush.msra.mxu0 0.0
        %4540 = vmatpush.msra.mxu0 0.0
        %4541 = vmatpush.msra.mxu0 0.0
        %4542 = vmatpush.msra.mxu0 0.0
        %4543 = vmatpush.msra.mxu0 0.0
        %4544 = vmatpush.msra.mxu0 0.0
        %4545 = vmatpush.msra.mxu0 0.0
        %4546 = vmatpush.msra.mxu0 0.0
        %4547 = vmatpush.msra.mxu0 0.0
        %4548 = vmatpush.msra.mxu0 0.0
        %4549 = vmatpush.msra.mxu0 0.0
        %4550 = vmatpush.msra.mxu0 0.0
        %4551 = vmatpush.msra.mxu0 0.0
        %4552 = vmatpush.msra.mxu0 0.0
        %4553 = vmatpush.msra.mxu0 %v3929
        %4554 = vmatmul.f32.gmra.mxu0 %v4334
        %v4555 = vpop.f32.mrf.mxu0
        %v4556 = vadd.f32 0.0, %v4555
        %4557 = vdwg.mxu0
        %v4558 = vrot.slane %v3868, 3
        %v4559 = vsel %vm3943, %v4558, 0
        %4561 = vmatpush.msra.mxu0 0.0
        %4562 = vmatpush.msra.mxu0 0.0
        %4563 = vmatpush.msra.mxu0 0.0
        %4564 = vmatpush.msra.mxu0 0.0
        %4565 = vmatpush.msra.mxu0 0.0
        %4566 = vmatpush.msra.mxu0 0.0
        %4567 = vmatpush.msra.mxu0 0.0
        %4568 = vmatpush.msra.mxu0 0.0
        %4569 = vmatpush.msra.mxu0 0.0
        %4570 = vmatpush.msra.mxu0 0.0
        %4571 = vmatpush.msra.mxu0 0.0
        %4572 = vmatpush.msra.mxu0 0.0
        %4573 = vmatpush.msra.mxu0 0.0
        %4574 = vmatpush.msra.mxu0 0.0
        %4575 = vmatpush.msra.mxu0 0.0
        %4576 = vmatpush.msra.mxu0 %v3929
        %4577 = vmatmul.f32.gmra.mxu0 %v4559
        %v4578 = vpop.f32.mrf.mxu0
        %v4579 = vadd.f32 0.0, %v4578
        %4580 = vdwg.mxu0
        %v4581 = vadd.f32 %v4536, %v4556
        %v4582 = vadd.f32 %v4537, %v4579
        %4583 = vmatpush.msra.mxu0 0.0
        %4584 = vmatpush.msra.mxu0 0.0
        %4585 = vmatpush.msra.mxu0 0.0
        %4586 = vmatpush.msra.mxu0 0.0
        %4587 = vmatpush.msra.mxu0 0.0
        %4588 = vmatpush.msra.mxu0 0.0
        %4589 = vmatpush.msra.mxu0 0.0
        %4590 = vmatpush.msra.mxu0 0.0
        %4591 = vmatpush.msra.mxu0 0.0
        %4592 = vmatpush.msra.mxu0 0.0
        %4593 = vmatpush.msra.mxu0 0.0
        %4594 = vmatpush.msra.mxu0 0.0
        %4595 = vmatpush.msra.mxu0 0.0
        %4596 = vmatpush.msra.mxu0 0.0
        %4597 = vmatpush.msra.mxu0 0.0
        %4598 = vmatpush.msra.mxu0 %v3930
        %4599 = vmatmul.f32.gmra.mxu0 %v4379
        %v4600 = vpop.f32.mrf.mxu0
        %v4601 = vadd.f32 0.0, %v4600
        %4602 = vdwg.mxu0
        %v4603 = vrot.slane %v3868, 4
        %v4604 = vsel %vm3943, %v4603, 0
        %4606 = vmatpush.msra.mxu0 0.0
        %4607 = vmatpush.msra.mxu0 0.0
        %4608 = vmatpush.msra.mxu0 0.0
        %4609 = vmatpush.msra.mxu0 0.0
        %4610 = vmatpush.msra.mxu0 0.0
        %4611 = vmatpush.msra.mxu0 0.0
        %4612 = vmatpush.msra.mxu0 0.0
        %4613 = vmatpush.msra.mxu0 0.0
        %4614 = vmatpush.msra.mxu0 0.0
        %4615 = vmatpush.msra.mxu0 0.0
        %4616 = vmatpush.msra.mxu0 0.0
        %4617 = vmatpush.msra.mxu0 0.0
        %4618 = vmatpush.msra.mxu0 0.0
        %4619 = vmatpush.msra.mxu0 0.0
        %4620 = vmatpush.msra.mxu0 0.0
        %4621 = vmatpush.msra.mxu0 %v3930
        %4622 = vmatmul.f32.gmra.mxu0 %v4604
        %v4623 = vpop.f32.mrf.mxu0
        %v4624 = vadd.f32 0.0, %v4623
        %4625 = vdwg.mxu0
        %v4626 = vadd.f32 %v4581, %v4601
        %v4627 = vadd.f32 %v4582, %v4624
        %4628 = vmatpush.msra.mxu0 0.0
        %4629 = vmatpush.msra.mxu0 0.0
        %4630 = vmatpush.msra.mxu0 0.0
        %4631 = vmatpush.msra.mxu0 0.0
        %4632 = vmatpush.msra.mxu0 0.0
        %4633 = vmatpush.msra.mxu0 0.0
        %4634 = vmatpush.msra.mxu0 0.0
        %4635 = vmatpush.msra.mxu0 0.0
        %4636 = vmatpush.msra.mxu0 0.0
        %4637 = vmatpush.msra.mxu0 0.0
        %4638 = vmatpush.msra.mxu0 0.0
        %4639 = vmatpush.msra.mxu0 0.0
        %4640 = vmatpush.msra.mxu0 0.0
        %4641 = vmatpush.msra.mxu0 0.0
        %4642 = vmatpush.msra.mxu0 0.0
        %4643 = vmatpush.msra.mxu0 %v3931
        %4644 = vmatmul.f32.gmra.mxu0 %v4424
        %v4645 = vpop.f32.mrf.mxu0
        %v4646 = vadd.f32 0.0, %v4645
        %4647 = vdwg.mxu0
        %v4649 = vsel %vm3943, %v3891, 0
        %4651 = vmatpush.msra.mxu0 0.0
        %4652 = vmatpush.msra.mxu0 0.0
        %4653 = vmatpush.msra.mxu0 0.0
        %4654 = vmatpush.msra.mxu0 0.0
        %4655 = vmatpush.msra.mxu0 0.0
        %4656 = vmatpush.msra.mxu0 0.0
        %4657 = vmatpush.msra.mxu0 0.0
        %4658 = vmatpush.msra.mxu0 0.0
        %4659 = vmatpush.msra.mxu0 0.0
        %4660 = vmatpush.msra.mxu0 0.0
        %4661 = vmatpush.msra.mxu0 0.0
        %4662 = vmatpush.msra.mxu0 0.0
        %4663 = vmatpush.msra.mxu0 0.0
        %4664 = vmatpush.msra.mxu0 0.0
        %4665 = vmatpush.msra.mxu0 0.0
        %4666 = vmatpush.msra.mxu0 %v3931
        %4667 = vmatmul.f32.gmra.mxu0 %v4649
        %v4668 = vpop.f32.mrf.mxu0
        %v4669 = vadd.f32 0.0, %v4668
        %4670 = vdwg.mxu0
        %v4671 = vadd.f32 %v4626, %v4646
        %v4672 = vadd.f32 %v4627, %v4669
        %4673 = vmatpush.msra.mxu0 0.0
        %4674 = vmatpush.msra.mxu0 0.0
        %4675 = vmatpush.msra.mxu0 0.0
        %4676 = vmatpush.msra.mxu0 0.0
        %4677 = vmatpush.msra.mxu0 0.0
        %4678 = vmatpush.msra.mxu0 0.0
        %4679 = vmatpush.msra.mxu0 0.0
        %4680 = vmatpush.msra.mxu0 0.0
        %4681 = vmatpush.msra.mxu0 0.0
        %4682 = vmatpush.msra.mxu0 0.0
        %4683 = vmatpush.msra.mxu0 0.0
        %4684 = vmatpush.msra.mxu0 0.0
        %4685 = vmatpush.msra.mxu0 0.0
        %4686 = vmatpush.msra.mxu0 0.0
        %4687 = vmatpush.msra.mxu0 0.0
        %4688 = vmatpush.msra.mxu0 %v3932
        %4689 = vmatmul.f32.gmra.mxu0 %v4469
        %v4690 = vpop.f32.mrf.mxu0
        %v4691 = vadd.f32 0.0, %v4690
        %4692 = vdwg.mxu0
        %v4693 = vrot.slane %v3891, 1
        %v4694 = vsel %vm3943, %v4693, 0
        %4696 = vmatpush.msra.mxu0 0.0
        %4697 = vmatpush.msra.mxu0 0.0
        %4698 = vmatpush.msra.mxu0 0.0
        %4699 = vmatpush.msra.mxu0 0.0
        %4700 = vmatpush.msra.mxu0 0.0
        %4701 = vmatpush.msra.mxu0 0.0
        %4702 = vmatpush.msra.mxu0 0.0
        %4703 = vmatpush.msra.mxu0 0.0
        %4704 = vmatpush.msra.mxu0 0.0
        %4705 = vmatpush.msra.mxu0 0.0
        %4706 = vmatpush.msra.mxu0 0.0
        %4707 = vmatpush.msra.mxu0 0.0
        %4708 = vmatpush.msra.mxu0 0.0
        %4709 = vmatpush.msra.mxu0 0.0
        %4710 = vmatpush.msra.mxu0 0.0
        %4711 = vmatpush.msra.mxu0 %v3932
        %4712 = vmatmul.f32.gmra.mxu0 %v4694
        %v4713 = vpop.f32.mrf.mxu0
        %v4714 = vadd.f32 0.0, %v4713
        %4715 = vdwg.mxu0
        %v4716 = vadd.f32 %v4671, %v4691
        %v4717 = vadd.f32 %v4672, %v4714
        %4718 = vmatpush.msra.mxu0 0.0
        %4719 = vmatpush.msra.mxu0 0.0
        %4720 = vmatpush.msra.mxu0 0.0
        %4721 = vmatpush.msra.mxu0 0.0
        %4722 = vmatpush.msra.mxu0 0.0
        %4723 = vmatpush.msra.mxu0 0.0
        %4724 = vmatpush.msra.mxu0 0.0
        %4725 = vmatpush.msra.mxu0 0.0
        %4726 = vmatpush.msra.mxu0 0.0
        %4727 = vmatpush.msra.mxu0 0.0
        %4728 = vmatpush.msra.mxu0 0.0
        %4729 = vmatpush.msra.mxu0 0.0
        %4730 = vmatpush.msra.mxu0 0.0
        %4731 = vmatpush.msra.mxu0 0.0
        %4732 = vmatpush.msra.mxu0 0.0
        %4733 = vmatpush.msra.mxu0 %v3933
        %4734 = vmatmul.f32.gmra.mxu0 %v4514
        %v4735 = vpop.f32.mrf.mxu0
        %v4736 = vadd.f32 0.0, %v4735
        %4737 = vdwg.mxu0
        %v4738 = vrot.slane %v3891, 2
        %v4739 = vsel %vm3943, %v4738, 0
        %4741 = vmatpush.msra.mxu0 0.0
        %4742 = vmatpush.msra.mxu0 0.0
        %4743 = vmatpush.msra.mxu0 0.0
        %4744 = vmatpush.msra.mxu0 0.0
        %4745 = vmatpush.msra.mxu0 0.0
        %4746 = vmatpush.msra.mxu0 0.0
        %4747 = vmatpush.msra.mxu0 0.0
        %4748 = vmatpush.msra.mxu0 0.0
        %4749 = vmatpush.msra.mxu0 0.0
        %4750 = vmatpush.msra.mxu0 0.0
        %4751 = vmatpush.msra.mxu0 0.0
        %4752 = vmatpush.msra.mxu0 0.0
        %4753 = vmatpush.msra.mxu0 0.0
        %4754 = vmatpush.msra.mxu0 0.0
        %4755 = vmatpush.msra.mxu0 0.0
        %4756 = vmatpush.msra.mxu0 %v3933
        %4757 = vmatmul.f32.gmra.mxu0 %v4739
        %v4758 = vpop.f32.mrf.mxu0
        %v4759 = vadd.f32 0.0, %v4758
        %4760 = vdwg.mxu0
        %v4761 = vadd.f32 %v4716, %v4736
        %v4762 = vadd.f32 %v4717, %v4759
        %4763 = vmatpush.msra.mxu0 0.0
        %4764 = vmatpush.msra.mxu0 0.0
        %4765 = vmatpush.msra.mxu0 0.0
        %4766 = vmatpush.msra.mxu0 0.0
        %4767 = vmatpush.msra.mxu0 0.0
        %4768 = vmatpush.msra.mxu0 0.0
        %4769 = vmatpush.msra.mxu0 0.0
        %4770 = vmatpush.msra.mxu0 0.0
        %4771 = vmatpush.msra.mxu0 0.0
        %4772 = vmatpush.msra.mxu0 0.0
        %4773 = vmatpush.msra.mxu0 0.0
        %4774 = vmatpush.msra.mxu0 0.0
        %4775 = vmatpush.msra.mxu0 0.0
        %4776 = vmatpush.msra.mxu0 0.0
        %4777 = vmatpush.msra.mxu0 0.0
        %4778 = vmatpush.msra.mxu0 %v3934
        %4779 = vmatmul.f32.gmra.mxu0 %v4559
        %v4780 = vpop.f32.mrf.mxu0
        %v4781 = vadd.f32 0.0, %v4780
        %4782 = vdwg.mxu0
        %v4783 = vrot.slane %v3891, 3
        %v4784 = vsel %vm3943, %v4783, 0
        %4786 = vmatpush.msra.mxu0 0.0
        %4787 = vmatpush.msra.mxu0 0.0
        %4788 = vmatpush.msra.mxu0 0.0
        %4789 = vmatpush.msra.mxu0 0.0
        %4790 = vmatpush.msra.mxu0 0.0
        %4791 = vmatpush.msra.mxu0 0.0
        %4792 = vmatpush.msra.mxu0 0.0
        %4793 = vmatpush.msra.mxu0 0.0
        %4794 = vmatpush.msra.mxu0 0.0
        %4795 = vmatpush.msra.mxu0 0.0
        %4796 = vmatpush.msra.mxu0 0.0
        %4797 = vmatpush.msra.mxu0 0.0
        %4798 = vmatpush.msra.mxu0 0.0
        %4799 = vmatpush.msra.mxu0 0.0
        %4800 = vmatpush.msra.mxu0 0.0
        %4801 = vmatpush.msra.mxu0 %v3934
        %4802 = vmatmul.f32.gmra.mxu0 %v4784
        %v4803 = vpop.f32.mrf.mxu0
        %v4804 = vadd.f32 0.0, %v4803
        %4805 = vdwg.mxu0
        %v4806 = vadd.f32 %v4761, %v4781
        %v4807 = vadd.f32 %v4762, %v4804
        %4808 = vmatpush.msra.mxu0 0.0
        %4809 = vmatpush.msra.mxu0 0.0
        %4810 = vmatpush.msra.mxu0 0.0
        %4811 = vmatpush.msra.mxu0 0.0
        %4812 = vmatpush.msra.mxu0 0.0
        %4813 = vmatpush.msra.mxu0 0.0
        %4814 = vmatpush.msra.mxu0 0.0
        %4815 = vmatpush.msra.mxu0 0.0
        %4816 = vmatpush.msra.mxu0 0.0
        %4817 = vmatpush.msra.mxu0 0.0
        %4818 = vmatpush.msra.mxu0 0.0
        %4819 = vmatpush.msra.mxu0 0.0
        %4820 = vmatpush.msra.mxu0 0.0
        %4821 = vmatpush.msra.mxu0 0.0
        %4822 = vmatpush.msra.mxu0 0.0
        %4823 = vmatpush.msra.mxu0 %v3935
        %4824 = vmatmul.f32.gmra.mxu0 %v4604
        %v4825 = vpop.f32.mrf.mxu0
        %v4826 = vadd.f32 0.0, %v4825
        %4827 = vdwg.mxu0
        %v4828 = vrot.slane %v3891, 4
        %v4829 = vsel %vm3943, %v4828, 0
        %4831 = vmatpush.msra.mxu0 0.0
        %4832 = vmatpush.msra.mxu0 0.0
        %4833 = vmatpush.msra.mxu0 0.0
        %4834 = vmatpush.msra.mxu0 0.0
        %4835 = vmatpush.msra.mxu0 0.0
        %4836 = vmatpush.msra.mxu0 0.0
        %4837 = vmatpush.msra.mxu0 0.0
        %4838 = vmatpush.msra.mxu0 0.0
        %4839 = vmatpush.msra.mxu0 0.0
        %4840 = vmatpush.msra.mxu0 0.0
        %4841 = vmatpush.msra.mxu0 0.0
        %4842 = vmatpush.msra.mxu0 0.0
        %4843 = vmatpush.msra.mxu0 0.0
        %4844 = vmatpush.msra.mxu0 0.0
        %4845 = vmatpush.msra.mxu0 0.0
        %4846 = vmatpush.msra.mxu0 %v3935
        %4847 = vmatmul.f32.gmra.mxu0 %v4829
        %v4848 = vpop.f32.mrf.mxu0
        %v4849 = vadd.f32 0.0, %v4848
        %4850 = vdwg.mxu0
        %v4851 = vadd.f32 %v4806, %v4826
        %v4852 = vadd.f32 %v4807, %v4849
        %4853 = vmatpush.msra.mxu0 0.0
        %4854 = vmatpush.msra.mxu0 0.0
        %4855 = vmatpush.msra.mxu0 0.0
        %4856 = vmatpush.msra.mxu0 0.0
        %4857 = vmatpush.msra.mxu0 0.0
        %4858 = vmatpush.msra.mxu0 0.0
        %4859 = vmatpush.msra.mxu0 0.0
        %4860 = vmatpush.msra.mxu0 0.0
        %4861 = vmatpush.msra.mxu0 0.0
        %4862 = vmatpush.msra.mxu0 0.0
        %4863 = vmatpush.msra.mxu0 0.0
        %4864 = vmatpush.msra.mxu0 0.0
        %4865 = vmatpush.msra.mxu0 0.0
        %4866 = vmatpush.msra.mxu0 0.0
        %4867 = vmatpush.msra.mxu0 0.0
        %4868 = vmatpush.msra.mxu0 %v3936
        %4869 = vmatmul.f32.gmra.mxu0 %v4649
        %v4870 = vpop.f32.mrf.mxu0
        %v4871 = vadd.f32 0.0, %v4870
        %4872 = vdwg.mxu0
        %v4874 = vsel %vm3943, %v3914, 0
        %4876 = vmatpush.msra.mxu0 0.0
        %4877 = vmatpush.msra.mxu0 0.0
        %4878 = vmatpush.msra.mxu0 0.0
        %4879 = vmatpush.msra.mxu0 0.0
        %4880 = vmatpush.msra.mxu0 0.0
        %4881 = vmatpush.msra.mxu0 0.0
        %4882 = vmatpush.msra.mxu0 0.0
        %4883 = vmatpush.msra.mxu0 0.0
        %4884 = vmatpush.msra.mxu0 0.0
        %4885 = vmatpush.msra.mxu0 0.0
        %4886 = vmatpush.msra.mxu0 0.0
        %4887 = vmatpush.msra.mxu0 0.0
        %4888 = vmatpush.msra.mxu0 0.0
        %4889 = vmatpush.msra.mxu0 0.0
        %4890 = vmatpush.msra.mxu0 0.0
        %4891 = vmatpush.msra.mxu0 %v3936
        %4892 = vmatmul.f32.gmra.mxu0 %v4874
        %v4893 = vpop.f32.mrf.mxu0
        %v4894 = vadd.f32 0.0, %v4893
        %4895 = vdwg.mxu0
        %v4896 = vadd.f32 %v4851, %v4871
        %v4897 = vadd.f32 %v4852, %v4894
        %4898 = vmatpush.msra.mxu0 0.0
        %4899 = vmatpush.msra.mxu0 0.0
        %4900 = vmatpush.msra.mxu0 0.0
        %4901 = vmatpush.msra.mxu0 0.0
        %4902 = vmatpush.msra.mxu0 0.0
        %4903 = vmatpush.msra.mxu0 0.0
        %4904 = vmatpush.msra.mxu0 0.0
        %4905 = vmatpush.msra.mxu0 0.0
        %4906 = vmatpush.msra.mxu0 0.0
        %4907 = vmatpush.msra.mxu0 0.0
        %4908 = vmatpush.msra.mxu0 0.0
        %4909 = vmatpush.msra.mxu0 0.0
        %4910 = vmatpush.msra.mxu0 0.0
        %4911 = vmatpush.msra.mxu0 0.0
        %4912 = vmatpush.msra.mxu0 0.0
        %4913 = vmatpush.msra.mxu0 %v3937
        %4914 = vmatmul.f32.gmra.mxu0 %v4694
        %v4915 = vpop.f32.mrf.mxu0
        %v4916 = vadd.f32 0.0, %v4915
        %4917 = vdwg.mxu0
        %v4918 = vrot.slane %v3914, 1
        %v4919 = vsel %vm3943, %v4918, 0
        %4921 = vmatpush.msra.mxu0 0.0
        %4922 = vmatpush.msra.mxu0 0.0
        %4923 = vmatpush.msra.mxu0 0.0
        %4924 = vmatpush.msra.mxu0 0.0
        %4925 = vmatpush.msra.mxu0 0.0
        %4926 = vmatpush.msra.mxu0 0.0
        %4927 = vmatpush.msra.mxu0 0.0
        %4928 = vmatpush.msra.mxu0 0.0
        %4929 = vmatpush.msra.mxu0 0.0
        %4930 = vmatpush.msra.mxu0 0.0
        %4931 = vmatpush.msra.mxu0 0.0
        %4932 = vmatpush.msra.mxu0 0.0
        %4933 = vmatpush.msra.mxu0 0.0
        %4934 = vmatpush.msra.mxu0 0.0
        %4935 = vmatpush.msra.mxu0 0.0
        %4936 = vmatpush.msra.mxu0 %v3937
        %4937 = vmatmul.f32.gmra.mxu0 %v4919
        %v4938 = vpop.f32.mrf.mxu0
        %v4939 = vadd.f32 0.0, %v4938
        %4940 = vdwg.mxu0
        %v4941 = vadd.f32 %v4896, %v4916
        %v4942 = vadd.f32 %v4897, %v4939
        %4943 = vmatpush.msra.mxu0 0.0
        %4944 = vmatpush.msra.mxu0 0.0
        %4945 = vmatpush.msra.mxu0 0.0
        %4946 = vmatpush.msra.mxu0 0.0
        %4947 = vmatpush.msra.mxu0 0.0
        %4948 = vmatpush.msra.mxu0 0.0
        %4949 = vmatpush.msra.mxu0 0.0
        %4950 = vmatpush.msra.mxu0 0.0
        %4951 = vmatpush.msra.mxu0 0.0
        %4952 = vmatpush.msra.mxu0 0.0
        %4953 = vmatpush.msra.mxu0 0.0
        %4954 = vmatpush.msra.mxu0 0.0
        %4955 = vmatpush.msra.mxu0 0.0
        %4956 = vmatpush.msra.mxu0 0.0
        %4957 = vmatpush.msra.mxu0 0.0
        %4958 = vmatpush.msra.mxu0 %v3938
        %4959 = vmatmul.f32.gmra.mxu0 %v4739
        %v4960 = vpop.f32.mrf.mxu0
        %v4961 = vadd.f32 0.0, %v4960
        %4962 = vdwg.mxu0
        %v4963 = vrot.slane %v3914, 2
        %v4964 = vsel %vm3943, %v4963, 0
        %4966 = vmatpush.msra.mxu0 0.0
        %4967 = vmatpush.msra.mxu0 0.0
        %4968 = vmatpush.msra.mxu0 0.0
        %4969 = vmatpush.msra.mxu0 0.0
        %4970 = vmatpush.msra.mxu0 0.0
        %4971 = vmatpush.msra.mxu0 0.0
        %4972 = vmatpush.msra.mxu0 0.0
        %4973 = vmatpush.msra.mxu0 0.0
        %4974 = vmatpush.msra.mxu0 0.0
        %4975 = vmatpush.msra.mxu0 0.0
        %4976 = vmatpush.msra.mxu0 0.0
        %4977 = vmatpush.msra.mxu0 0.0
        %4978 = vmatpush.msra.mxu0 0.0
        %4979 = vmatpush.msra.mxu0 0.0
        %4980 = vmatpush.msra.mxu0 0.0
        %4981 = vmatpush.msra.mxu0 %v3938
        %4982 = vmatmul.f32.gmra.mxu0 %v4964
        %v4983 = vpop.f32.mrf.mxu0
        %v4984 = vadd.f32 0.0, %v4983
        %4985 = vdwg.mxu0
        %v4986 = vadd.f32 %v4941, %v4961
        %v4987 = vadd.f32 %v4942, %v4984
        %4988 = vmatpush.msra.mxu0 0.0
        %4989 = vmatpush.msra.mxu0 0.0
        %4990 = vmatpush.msra.mxu0 0.0
        %4991 = vmatpush.msra.mxu0 0.0
        %4992 = vmatpush.msra.mxu0 0.0
        %4993 = vmatpush.msra.mxu0 0.0
        %4994 = vmatpush.msra.mxu0 0.0
        %4995 = vmatpush.msra.mxu0 0.0
        %4996 = vmatpush.msra.mxu0 0.0
        %4997 = vmatpush.msra.mxu0 0.0
        %4998 = vmatpush.msra.mxu0 0.0
        %4999 = vmatpush.msra.mxu0 0.0
        %5000 = vmatpush.msra.mxu0 0.0
        %5001 = vmatpush.msra.mxu0 0.0
        %5002 = vmatpush.msra.mxu0 0.0
        %5003 = vmatpush.msra.mxu0 %v3939
        %5004 = vmatmul.f32.gmra.mxu0 %v4784
        %v5005 = vpop.f32.mrf.mxu0
        %v5006 = vadd.f32 0.0, %v5005
        %5007 = vdwg.mxu0
        %v5008 = vrot.slane %v3914, 3
        %v5009 = vsel %vm3943, %v5008, 0
        %5011 = vmatpush.msra.mxu0 0.0
        %5012 = vmatpush.msra.mxu0 0.0
        %5013 = vmatpush.msra.mxu0 0.0
        %5014 = vmatpush.msra.mxu0 0.0
        %5015 = vmatpush.msra.mxu0 0.0
        %5016 = vmatpush.msra.mxu0 0.0
        %5017 = vmatpush.msra.mxu0 0.0
        %5018 = vmatpush.msra.mxu0 0.0
        %5019 = vmatpush.msra.mxu0 0.0
        %5020 = vmatpush.msra.mxu0 0.0
        %5021 = vmatpush.msra.mxu0 0.0
        %5022 = vmatpush.msra.mxu0 0.0
        %5023 = vmatpush.msra.mxu0 0.0
        %5024 = vmatpush.msra.mxu0 0.0
        %5025 = vmatpush.msra.mxu0 0.0
        %5026 = vmatpush.msra.mxu0 %v3939
        %5027 = vmatmul.f32.gmra.mxu0 %v5009
        %v5028 = vpop.f32.mrf.mxu0
        %v5029 = vadd.f32 0.0, %v5028
        %5030 = vdwg.mxu0
        %v5031 = vadd.f32 %v4986, %v5006
        %v5032 = vadd.f32 %v4987, %v5029
        %5033 = vmatpush.msra.mxu0 0.0
        %5034 = vmatpush.msra.mxu0 0.0
        %5035 = vmatpush.msra.mxu0 0.0
        %5036 = vmatpush.msra.mxu0 0.0
        %5037 = vmatpush.msra.mxu0 0.0
        %5038 = vmatpush.msra.mxu0 0.0
        %5039 = vmatpush.msra.mxu0 0.0
        %5040 = vmatpush.msra.mxu0 0.0
        %5041 = vmatpush.msra.mxu0 0.0
        %5042 = vmatpush.msra.mxu0 0.0
        %5043 = vmatpush.msra.mxu0 0.0
        %5044 = vmatpush.msra.mxu0 0.0
        %5045 = vmatpush.msra.mxu0 0.0
        %5046 = vmatpush.msra.mxu0 0.0
        %5047 = vmatpush.msra.mxu0 0.0
        %5048 = vmatpush.msra.mxu0 %v3940
        %5049 = vmatmul.f32.gmra.mxu0 %v4829
        %v5050 = vpop.f32.mrf.mxu0
        %v5051 = vadd.f32 0.0, %v5050
        %5052 = vdwg.mxu0
        %v5053 = vrot.slane %v3914, 4
        %v5054 = vsel %vm3943, %v5053, 0
        %5056 = vmatpush.msra.mxu0 0.0
        %5057 = vmatpush.msra.mxu0 0.0
        %5058 = vmatpush.msra.mxu0 0.0
        %5059 = vmatpush.msra.mxu0 0.0
        %5060 = vmatpush.msra.mxu0 0.0
        %5061 = vmatpush.msra.mxu0 0.0
        %5062 = vmatpush.msra.mxu0 0.0
        %5063 = vmatpush.msra.mxu0 0.0
        %5064 = vmatpush.msra.mxu0 0.0
        %5065 = vmatpush.msra.mxu0 0.0
        %5066 = vmatpush.msra.mxu0 0.0
        %5067 = vmatpush.msra.mxu0 0.0
        %5068 = vmatpush.msra.mxu0 0.0
        %5069 = vmatpush.msra.mxu0 0.0
        %5070 = vmatpush.msra.mxu0 0.0
        %5071 = vmatpush.msra.mxu0 %v3940
        %5072 = vmatmul.f32.gmra.mxu0 %v5054
        %v5073 = vpop.f32.mrf.mxu0
        %v5074 = vadd.f32 0.0, %v5073
        %5075 = vdwg.mxu0
        %v5076 = vadd.f32 %v5031, %v5051
        %v5077 = vadd.f32 %v5032, %v5074
        %v5078 = vld [vmem:[%s5] sm:$0x1]
        %v5080 = vperm.slane %v5078, 0
        %v5082 = vadd.f32 %v5076, %v5080
        %v5083 = vadd.f32 %v5077, %v5080
        %s5084 = sld [smem:[#allocation2 + $0x1]]
        %vm5085 = vcmp.gt.f32.partialorder %v5082, 0.0
        %vm5086 = vcmp.gt.f32.partialorder %v5083, 0.0
        %v5087 = vstv %s5084
        %v5088 = vmul.f32 %v5087, %v5082
        %v5089 = vmul.f32 %v5087, %v5083
        %v5090 = vsel %vm5085, %v5082, %v5088
        %v5091 = vsel %vm5086, %v5083, %v5089
        %v5092 = vmax.f32 %v5090, %v5091
        %v5094 = vrot.slane %v5092, 1
        %v5096 = vmax.f32 %v5092, %v5094
        %v5097 = vld [vmem:[%s6] sm:$0xff]
        %v5098 = vld [vmem:[%s6 + $0x8] sm:$0xff]
        %v5099 = vld [vmem:[%s7] sm:$0x1]
        %vm5100 = vcmask 130048
        %v5102 = vsel %vm5100, %v5096, 0
        %5104 = vmatpush.msra.mxu0 0.0
        %5105 = vmatpush.msra.mxu0 0.0
        %5106 = vmatpush.msra.mxu0 0.0
        %5107 = vmatpush.msra.mxu0 0.0
        %5108 = vmatpush.msra.mxu0 0.0
        %5109 = vmatpush.msra.mxu0 0.0
        %5110 = vmatpush.msra.mxu0 0.0
        %5111 = vmatpush.msra.mxu0 0.0
        %5112 = vmatpush.msra.mxu0 0.0
        %5113 = vmatpush.msra.mxu0 0.0
        %5114 = vmatpush.msra.mxu0 0.0
        %5115 = vmatpush.msra.mxu0 0.0
        %5116 = vmatpush.msra.mxu0 0.0
        %5117 = vmatpush.msra.mxu0 0.0
        %5118 = vmatpush.msra.mxu0 %v5098
        %5119 = vmatpush.msra.mxu0 %v5097
        %5120 = vmatmul.f32.gmra.mxu0 %v5102
        %v5121 = vpop.f32.mrf.mxu0
        %v5122 = vadd.f32 %v5099, %v5121
        %5123 = vdwg.mxu0
        %s5124 = sld [smem:[#allocation2 + $0x2]]
        %vm5125 = vcmp.gt.f32.partialorder %v5122, 0.0
        %v5126 = vstv %s5124
        %v5127 = vmul.f32 %v5126, %v5122
        %v5128 = vsel %vm5125, %v5122, %v5127
        %v5129 = vld [vmem:[%s8] sm:$0xff]
        %v5130 = vld [vmem:[%s8 + $0x8] sm:$0xff]
        %v5131 = vld [vmem:[%s8 + $0x10] sm:$0xff]
        %v5132 = vld [vmem:[%s8 + $0x18] sm:$0xff]
        %v5133 = vld [vmem:[%s9] sm:$0x1]
        %vm5134 = vcmask 261120
        %v5136 = vsel %vm5134, %v5128, 0
        %5138 = vmatpush.msra.mxu0 0.0
        %5139 = vmatpush.msra.mxu0 0.0
        %5140 = vmatpush.msra.mxu0 0.0
        %5141 = vmatpush.msra.mxu0 0.0
        %5142 = vmatpush.msra.mxu0 0.0
        %5143 = vmatpush.msra.mxu0 0.0
        %5144 = vmatpush.msra.mxu0 0.0
        %5145 = vmatpush.msra.mxu0 0.0
        %5146 = vmatpush.msra.mxu0 0.0
        %5147 = vmatpush.msra.mxu0 0.0
        %5148 = vmatpush.msra.mxu0 0.0
        %5149 = vmatpush.msra.mxu0 0.0
        %5150 = vmatpush.msra.mxu0 %v5132
        %5151 = vmatpush.msra.mxu0 %v5131
        %5152 = vmatpush.msra.mxu0 %v5130
        %5153 = vmatpush.msra.mxu0 %v5129
        %5154 = vmatmul.f32.gmra.mxu0 %v5136
        %v5155 = vpop.f32.mrf.mxu0
        %v5156 = vadd.f32 %v5133, %v5155
        %5157 = vdwg.mxu0
        %vm5158 = vcmask 57344
        %5159 = vst.msk [vmem:[%s392] sm:$0x1] %vm5158, %v5156
        %s5160 = sand.u32 %s270, 1
        %s5161 = scalar_lea.sflag [#allocation3], %s5160
        %s5162 = sand.u32 %s270, 1
        %s5163 = scalar_lea.vmem [#allocation5], %s5162
        // Predicated region
        $region69: #{embedding_model_forward.1} parent=63 // pred_check
          %p5164 = pneg %p280
        $region70: #{embedding_model_forward.1} parent=63 // pred_check_branch
          %5166 = sbr.rel (%p5164) target = $region72
        $region71: #{embedding_model_forward.1} parent=63 // pred_region
          %5168 = vsyncadd %s5161, 0
          %s5169 = scalar_lea.hbm %s11, %s26
          %s5171 = sshll.u32 %s5163, 4
          %s5172 = int_to_ptr.vmem [resolvable:$true] %s5171
          %s5173 = sshll.u32 %s5169, 4
          %s5174 = int_to_ptr.hbm [resolvable:$true] %s5173
          %5176 = dma.vmem_to_hbm [thread:$0]  %s5172, 16, %s5174, %s5161
        $region72: #{embedding_model_forward.1} parent=63 // pred_fallthru
          _
      $region64: #{embedding_model_forward.1} parent=5 // pred_fallthru
        _
      %p5177 = scmp.le.s32.totalorder 2, %s21
      // Predicated region
      $region73: #{embedding_model_forward.1} parent=5 // pred_check
        %p5178 = pneg %p5177
      $region74: #{embedding_model_forward.1} parent=5 // pred_check_branch
        %5180 = sbr.rel (%p5178) target = $region76
      $region75: #{embedding_model_forward.1} parent=5 // pred_region
        %s5181 = ssub.s32 %s21, 2
        // Predicated region
        $region77: #{embedding_model_forward.1} parent=75 // pred_check
          %p5182 = pneg %p286
        $region78: #{embedding_model_forward.1} parent=75 // pred_check_branch
          %5184 = sbr.rel (%p5182) target = $region80
        $region79: #{embedding_model_forward.1} parent=75 // pred_region
          %s5185 = sand.u32 %s271, 1
          %s5186 = scalar_lea.sflag [#allocation3], %s5185
          %s5187 = sand.u32 %s271, 1
          %s5188 = scalar_lea.vmem [#allocation5], %s5187
          %5190 = dma.done %s5186, 16
        $region80: #{embedding_model_forward.1} parent=75 // pred_fallthru
          _
      $region76: #{embedding_model_forward.1} parent=5 // pred_fallthru
        _
    $region6: #{embedding_model_forward.1} parent=1 // loop_footer
      %s25 = sadd.s32 1, %s21
    $region7: #{embedding_model_forward.1} parent=1 // loop_footer_branch
      %20 = sbr.rel target = $region3
    $region8: #{embedding_model_forward.1} parent=1 // loop_exit
      _
    %5191 = vsyncpa [#allocation3], 1
    %s5192 = scalar_lea.sflag [#allocation3], 1
    %5193 = vsyncpa %s5192, 1
    %5194 = vsyncpa [#allocation4], 1
    %s5195 = scalar_lea.sflag [#allocation4], 1
    %5196 = vsyncpa %s5195, 1

</llo_original>
